<compile_context>
chip_gen: v5e
topology: v5e:2x2
jax: 0.10.0
libtpu: 0.0.40
codegen_flags: <defaults>
</compile_context>

<pallas_src>
import functools

import jax
import jax.numpy as jnp
from jax.experimental import pallas as pl
from jax.experimental.pallas import tpu as pltpu

_VMEM_LIMIT = 48 * 1024 * 1024        # < 64 MiB (v7x physical), plenty for our tiles
_ACT_DTYPE = jnp.bfloat16             # inter-layer activation dtype


def _cparams(dim_sem):
    return pltpu.CompilerParams(dimension_semantics=dim_sem,
                                vmem_limit_bytes=_VMEM_LIMIT)


# ----------------------------------------------------------------------------
# Kernel 1: tiled bf16 matmul + bias + ReLU (im2col path, deep layers)
# ----------------------------------------------------------------------------
def _matmul_bias_relu_kernel(x_ref, w_ref, b_ref, o_ref, acc_ref):
    @pl.when(pl.program_id(2) == 0)
    def _init():
        acc_ref[...] = jnp.zeros_like(acc_ref)

    acc_ref[...] += jnp.dot(x_ref[...], w_ref[...],
                            preferred_element_type=jnp.float32)

    @pl.when(pl.program_id(2) == pl.num_programs(2) - 1)
    def _store():
        y = acc_ref[...] + b_ref[...]          # f32 bias add
        o_ref[...] = jnp.maximum(y, 0.0).astype(o_ref.dtype)


def _m_tiles(M):
    Mp = ((M + 7) // 8) * 8
    if Mp >= 512:
        tm = 512
    elif Mp >= 256:
        tm = 256
    else:
        return Mp, Mp
    Mp = ((M + tm - 1) // tm) * tm
    return Mp, tm


def _k_tiles(K):
    if K <= 1152:
        return K, K
    tk = 1152
    Kp = ((K + tk - 1) // tk) * tk
    return Kp, tk


def _n_tile(N):
    if N <= 256:
        return N
    for tn in (256, 128):
        if N % tn == 0:
            return tn
    return N


def _conv3x3_matmul(x, w, b):
    # x: (B, H, W, Cin) bf16 ; w: (Cout, Cin, 3, 3) f32 ; b: (Cout,) f32
    B, H, W, Cin = x.shape
    Cout = w.shape[0]
    xp = jnp.pad(x, ((0, 0), (1, 1), (1, 1), (0, 0)), mode="reflect")
    cols = [xp[:, ky:ky + H, kx:kx + W, :].reshape(B * H * W, Cin)
            for ky in range(3) for kx in range(3)]
    xcol = jnp.concatenate(cols, axis=1)                             # (M, 9*Cin) bf16
    wmat = jnp.transpose(w, (2, 3, 1, 0)).reshape(9 * Cin, Cout).astype(_ACT_DTYPE)
    bias = b.reshape(1, Cout).astype(jnp.float32)

    M, K = B * H * W, 9 * Cin
    Mp, tm = _m_tiles(M)
    Kp, tk = _k_tiles(K)
    tn = _n_tile(Cout)
    if Mp != M:
        xcol = jnp.pad(xcol, ((0, Mp - M), (0, 0)))
    if Kp != K:
        xcol = jnp.pad(xcol, ((0, 0), (0, Kp - K)))
        wmat = jnp.pad(wmat, ((0, Kp - K), (0, 0)))

    grid = (Mp // tm, Cout // tn, Kp // tk)
    out = pl.pallas_call(
        _matmul_bias_relu_kernel,
        out_shape=jax.ShapeDtypeStruct((Mp, Cout), _ACT_DTYPE),
        grid=grid,
        in_specs=[
            pl.BlockSpec((tm, tk), lambda i, j, k: (i, k)),
            pl.BlockSpec((tk, tn), lambda i, j, k: (k, j)),   # independent of i
            pl.BlockSpec((1, tn), lambda i, j, k: (0, j)),
        ],
        out_specs=pl.BlockSpec((tm, tn), lambda i, j, k: (i, j)),
        scratch_shapes=[pltpu.VMEM((tm, tn), jnp.float32)],
        compiler_params=_cparams(("parallel", "parallel", "arbitrary")),
        cost_estimate=pl.CostEstimate(
            flops=2 * M * K * Cout, transcendentals=0,
            bytes_accessed=2 * (M * K + K * Cout + M * Cout)),
    )(xcol, wmat, bias)
    return out[:M].reshape(B, H, W, Cout)


# ----------------------------------------------------------------------------
# Kernel 2: in-kernel 3x3 tap accumulation (row-tap path, large-W layers)
# ----------------------------------------------------------------------------
def _conv_rowtap_kernel(x0_ref, x1_ref, x2_ref, w_ref, b_ref, o_ref, *, W, th):
    # x*_ref: (1, th, W+2, Cin) bf16 (row-shifted by ky = 0/1/2)
    # w_ref : (3, 3, Cin, Cout) bf16 ; b_ref: (1, Cout) f32
    # o_ref : (1, th, W, Cout) bf16
    xs = (x0_ref, x1_ref, x2_ref)
    bias = b_ref[...]                                          # (1, Cout) f32
    for r in range(th):
        acc = None
        for ky in range(3):
            for kx in range(3):
                lhs = xs[ky][0, r, pl.ds(kx, W), :]            # (W, Cin) bf16
                rhs = w_ref[ky, kx]                            # (Cin, Cout) bf16
                d = jnp.dot(lhs, rhs, preferred_element_type=jnp.float32)
                acc = d if acc is None else acc + d
        acc = acc + bias
        o_ref[0, r] = jnp.maximum(acc, 0.0).astype(o_ref.dtype)


def _conv3x3_rowtap(x, w, b):
    # x: (B, H, W, Cin) bf16 ; w: (Cout, Cin, 3, 3) f32 ; b: (Cout,) f32
    B, H, W, Cin = x.shape
    Cout = w.shape[0]
    Wp = W + 2
    Cin_p = ((Cin + 15) // 16) * 16
    xp = jnp.pad(x, ((0, 0), (1, 1), (1, 1), (0, 0)), mode="reflect")
    wk = jnp.transpose(w, (2, 3, 1, 0)).astype(_ACT_DTYPE)     # (3, 3, Cin, Cout)
    if Cin_p != Cin:
        xp = jnp.pad(xp, ((0, 0), (0, 0), (0, 0), (0, Cin_p - Cin)))
        wk = jnp.pad(wk, ((0, 0), (0, 0), (0, Cin_p - Cin), (0, 0)))
    x0 = xp[:, 0:H]                 # (B, H, Wp, Cin_p), tap row ky = 0
    x1 = xp[:, 1:H + 1]             # ky = 1
    x2 = xp[:, 2:H + 2]             # ky = 2
    bias = b.reshape(1, Cout).astype(jnp.float32)

    th = next(d for d in (8, 4, 2, 1) if H % d == 0)
    x_spec = pl.BlockSpec((1, th, Wp, Cin_p), lambda bb, i: (bb, i, 0, 0))
    kernel = functools.partial(_conv_rowtap_kernel, W=W, th=th)
    return pl.pallas_call(
        kernel,
        out_shape=jax.ShapeDtypeStruct((B, H, W, Cout), _ACT_DTYPE),
        grid=(B, H // th),
        in_specs=[x_spec, x_spec, x_spec,
                  pl.BlockSpec((3, 3, Cin_p, Cout), lambda bb, i: (0, 0, 0, 0)),
                  pl.BlockSpec((1, Cout), lambda bb, i: (0, 0))],
        out_specs=pl.BlockSpec((1, th, W, Cout), lambda bb, i: (bb, i, 0, 0)),
        compiler_params=_cparams(("parallel", "parallel")),
        cost_estimate=pl.CostEstimate(
            flops=2 * B * H * W * 9 * Cin * Cout, transcendentals=0,
            bytes_accessed=2 * (3 * B * H * Wp * Cin_p + 9 * Cin_p * Cout
                                + B * H * W * Cout)),
    )(x0, x1, x2, wk, bias)


def conv3x3_reflect_relu(x, w, b):
    # Pick the path by regime: row-tap for large-W (memory-bound, avoids the
    # im2col HBM blow-up), tiled im2col matmul for small-W (compute-bound,
    # keeps the MXU rows full).
    _, _, W, _ = x.shape
    Cout = w.shape[0]
    if max(256 - W, 0) * Cout <= 1024 * W:
        return _conv3x3_rowtap(x, w, b)
    return _conv3x3_matmul(x, w, b)


# ----------------------------------------------------------------------------
# Kernel 3: MaxPool2d(2, 2, ceil_mode=True), NHWC, no transposes
# ----------------------------------------------------------------------------
def _maxpool_kernel(x_ref, o_ref, *, C):
    # x_ref: (1, 2, Wo, 2*C)  -- lanes [0:C] = even column, [C:2C] = odd column
    a = x_ref[0, 0, :, pl.ds(0, C)]
    b = x_ref[0, 1, :, pl.ds(0, C)]
    c = x_ref[0, 0, :, pl.ds(C, C)]
    d = x_ref[0, 1, :, pl.ds(C, C)]
    o_ref[0, 0] = jnp.maximum(jnp.maximum(a, b), jnp.maximum(c, d))


def maxpool2x2_ceil(x):
    # x: (B, H, W, C) bf16
    B, H, W, C = x.shape
    Ho, Wo = -(-H // 2), -(-W // 2)
    ph, pw = 2 * Ho - H, 2 * Wo - W
    if ph or pw:
        x = jnp.pad(x, ((0, 0), (0, ph), (0, pw), (0, 0)),
                    constant_values=-jnp.inf)        # ceil_mode: OOB never wins
    xr = x.reshape(B, 2 * Ho, Wo, 2 * C)             # free reshape (contiguous)
    kernel = functools.partial(_maxpool_kernel, C=C)
    return pl.pallas_call(
        kernel,
        out_shape=jax.ShapeDtypeStruct((B, Ho, Wo, C), x.dtype),
        grid=(B, Ho),
        in_specs=[pl.BlockSpec((1, 2, Wo, 2 * C), lambda b, i: (b, i, 0, 0))],
        out_specs=pl.BlockSpec((1, 1, Wo, C), lambda b, i: (b, i, 0, 0)),
        compiler_params=_cparams(("parallel", "parallel")),
    )(xr)


# ----------------------------------------------------------------------------
# Parameters (deterministic synthetic init; shapes from new_VGG.__init__)
# ----------------------------------------------------------------------------
_CONV_CFG = [
    ("pre", 3, 3, 1),
    ("conv1_1", 3, 64, 3), ("conv1_2", 64, 64, 3),
    ("conv2_1", 64, 128, 3), ("conv2_2", 128, 128, 3),
    ("conv3_1", 128, 256, 3), ("conv3_2", 256, 256, 3),
    ("conv3_3", 256, 256, 3), ("conv3_4", 256, 256, 3),
    ("conv4_1", 256, 512, 3), ("conv4_2", 512, 512, 3),
    ("conv4_3", 512, 512, 3), ("conv4_4", 512, 512, 3),
    ("conv5_1", 512, 512, 3), ("conv5_2", 512, 512, 3),
    ("conv5_3", 512, 512, 3), ("conv5_4", 512, 512, 3),
]


def init_params(key):
    params = {}
    for name, cin, cout, k in _CONV_CFG:
        key, kw, kb = jax.random.split(key, 3)
        fan_in = cin * k * k
        std = (2.0 / fan_in) ** 0.5
        params[name] = {
            "w": std * jax.random.normal(kw, (cout, cin, k, k), jnp.float32),
            "b": 0.01 * jax.random.normal(kb, (cout,), jnp.float32),
        }
    return params


def _fold_pre_into_conv1_1(params):
    # pre (1x1, no activation) and conv1_1 are both linear -> compose exactly.
    w11, b11 = params["conv1_1"]["w"], params["conv1_1"]["b"]
    wpre = params["pre"]["w"][:, :, 0, 0]            # (c_pre_out, c_in)
    bpre = params["pre"]["b"]                        # (c_pre_out,)
    w_eff = jnp.einsum("ocyx,ci->oiyx", w11, wpre)
    b_eff = b11 + jnp.einsum("ocyx,c->o", w11, bpre)
    return w_eff, b_eff


# ----------------------------------------------------------------------------
# Forward pass (mirrors new_VGG.forward)
# ----------------------------------------------------------------------------
def new_vgg_forward(x_nchw, params, out_keys):
    x = jnp.transpose(x_nchw, (0, 2, 3, 1)).astype(_ACT_DTYPE)   # NCHW -> NHWC bf16
    w11, b11 = _fold_pre_into_conv1_1(params)

    def cr(name, inp, w=None, b=None):
        w = params[name]["w"] if w is None else w
        b = params[name]["b"] if b is None else b
        return conv3x3_reflect_relu(inp, w, b)

    out = {}
    out["r11"] = cr("conv1_1", x, w11, b11)     # 'pre' folded in
    out["r12"] = cr("conv1_2", out["r11"])
    out["p1"] = maxpool2x2_ceil(out["r12"])
    out["r21"] = cr("conv2_1", out["p1"])
    out["r22"] = cr("conv2_2", out["r21"])
    out["p2"] = maxpool2x2_ceil(out["r22"])
    out["r31"] = cr("conv3_1", out["p2"])
    out["r32"] = cr("conv3_2", out["r31"])
    out["r33"] = cr("conv3_3", out["r32"])
    out["r34"] = cr("conv3_4", out["r33"])
    out["p3"] = maxpool2x2_ceil(out["r34"])
    out["r41"] = cr("conv4_1", out["p3"])
    out["r42"] = cr("conv4_2", out["r41"])
    out["r43"] = cr("conv4_3", out["r42"])
    out["r44"] = cr("conv4_4", out["r43"])
    out["p4"] = maxpool2x2_ceil(out["r44"])
    out["r51"] = cr("conv5_1", out["p4"])
    out["r52"] = cr("conv5_2", out["r51"])
    out["r53"] = cr("conv5_3", out["r52"])
    out["r54"] = cr("conv5_4", out["r53"])
    out["p5"] = maxpool2x2_ceil(out["r54"])

    # requested features in NCHW / f32, matching the PyTorch output convention
    return [jnp.transpose(out[k], (0, 3, 1, 2)).astype(jnp.float32)
            for k in out_keys]


# ----------------------------------------------------------------------------
if __name__ == "__main__":
    key = jax.random.PRNGKey(0)
    kx, kp = jax.random.split(key)
    # spatial must be >= 32 so ReflectionPad2d stays valid through block 5
    x = jax.random.normal(kx, (2, 3, 32, 32), jnp.float32)
    params = init_params(kp)

    out_keys = ["r11", "r21", "r31", "r41", "r51", "p5"]
    outs = new_vgg_forward(x, params, out_keys)
    outs = [jax.block_until_ready(o) for o in outs]

    expected = {
        "r11": (2, 64, 32, 32),
        "r21": (2, 128, 16, 16),
        "r31": (2, 256, 8, 8),
        "r41": (2, 512, 4, 4),
        "r51": (2, 512, 2, 2),
        "p5": (2, 512, 1, 1),
    }
    for k, o in zip(out_keys, outs):
        assert o.shape == expected[k], (k, o.shape)
        assert bool(jnp.all(jnp.isfinite(o))), k
    print("KERNEL_OK")
</pallas_src>

<mosaic_0001>
module attributes {stable_mosaic.version = 11 : i64} {
  func.func @_conv_rowtap_kernel(%arg0: i32, %arg1: i32, %arg2: memref<1x8x34x16xbf16, #tpu.memory_space<vmem>>, %arg3: memref<1x8x34x16xbf16, #tpu.memory_space<vmem>>, %arg4: memref<1x8x34x16xbf16, #tpu.memory_space<vmem>>, %arg5: memref<3x3x16x64xbf16, #tpu.memory_space<vmem>>, %arg6: memref<1x64xf32, #tpu.memory_space<vmem>>, %arg7: memref<1x8x32x64xbf16, #tpu.memory_space<vmem>>) attributes {dimension_semantics = [#tpu.dimension_semantics<parallel>, #tpu.dimension_semantics<parallel>], iteration_bounds = array<i64: 2, 4>, scalar_prefetch = 0 : i64, scratch_operands = 0 : i64, tpu.core_type = #tpu.core_type<tc>, window_params = [{transform_indices = @transform_0, window_bounds = array<i64: 1, 8, 34, 16>}, {transform_indices = @transform_1, window_bounds = array<i64: 1, 8, 34, 16>}, {transform_indices = @transform_2, window_bounds = array<i64: 1, 8, 34, 16>}, {pipeline_mode = #tpu.pipeline_mode<synchronous>, transform_indices = @transform_3, window_bounds = array<i64: 3, 3, 16, 64>}, {pipeline_mode = #tpu.pipeline_mode<synchronous>, transform_indices = @transform_4, window_bounds = array<i64: 1, 64>}, {transform_indices = @transform_5, window_bounds = array<i64: 1, 8, 32, 64>}]} {
    %c0 = arith.constant 0 : index
    %c0_0 = arith.constant 0 : index
    %0 = vector.load %arg6[%c0, %c0_0] : memref<1x64xf32, #tpu.memory_space<vmem>>, vector<1x64xf32>
    %c0_1 = arith.constant 0 : index
    %c0_2 = arith.constant 0 : index
    %c0_3 = arith.constant 0 : index
    %c0_4 = arith.constant 0 : index
    %1 = vector.load %arg2[%c0_1, %c0_2, %c0_3, %c0_4] : memref<1x8x34x16xbf16, #tpu.memory_space<vmem>>, vector<1x1x32x16xbf16>
    %2 = vector.shape_cast %1 : vector<1x1x32x16xbf16> to vector<32x16xbf16>
    %c0_5 = arith.constant 0 : index
    %c0_6 = arith.constant 0 : index
    %c0_7 = arith.constant 0 : index
    %c0_8 = arith.constant 0 : index
    %3 = vector.load %arg5[%c0_5, %c0_6, %c0_7, %c0_8] : memref<3x3x16x64xbf16, #tpu.memory_space<vmem>>, vector<1x1x16x64xbf16>
    %4 = vector.shape_cast %3 : vector<1x1x16x64xbf16> to vector<16x64xbf16>
    %cst = arith.constant dense<0.000000e+00> : vector<32x64xf32>
    %5 = tpu.matmul %2, %4, %cst {dimension_numbers = #tpu.dot_dimension_numbers<[1], [0], [0], [1], [0, 0, 1, 1], [], []>} : vector<32x16xbf16>, vector<16x64xbf16>, vector<32x64xf32> -> vector<32x64xf32>
    %c0_9 = arith.constant 0 : index
    %c0_10 = arith.constant 0 : index
    %c1 = arith.constant 1 : index
    %c0_11 = arith.constant 0 : index
    %6 = vector.load %arg2[%c0_9, %c0_10, %c1, %c0_11] : memref<1x8x34x16xbf16, #tpu.memory_space<vmem>>, vector<1x1x32x16xbf16>
    %7 = vector.shape_cast %6 : vector<1x1x32x16xbf16> to vector<32x16xbf16>
    %c0_12 = arith.constant 0 : index
    %c1_13 = arith.constant 1 : index
    %c0_14 = arith.constant 0 : index
    %c0_15 = arith.constant 0 : index
    %8 = vector.load %arg5[%c0_12, %c1_13, %c0_14, %c0_15] : memref<3x3x16x64xbf16, #tpu.memory_space<vmem>>, vector<1x1x16x64xbf16>
    %9 = vector.shape_cast %8 : vector<1x1x16x64xbf16> to vector<16x64xbf16>
    %cst_16 = arith.constant dense<0.000000e+00> : vector<32x64xf32>
    %10 = tpu.matmul %7, %9, %cst_16 {dimension_numbers = #tpu.dot_dimension_numbers<[1], [0], [0], [1], [0, 0, 1, 1], [], []>} : vector<32x16xbf16>, vector<16x64xbf16>, vector<32x64xf32> -> vector<32x64xf32>
    %11 = arith.addf %5, %10 : vector<32x64xf32>
    %c0_17 = arith.constant 0 : index
    %c0_18 = arith.constant 0 : index
    %c2 = arith.constant 2 : index
    %c0_19 = arith.constant 0 : index
    %12 = vector.load %arg2[%c0_17, %c0_18, %c2, %c0_19] : memref<1x8x34x16xbf16, #tpu.memory_space<vmem>>, vector<1x1x32x16xbf16>
    %13 = vector.shape_cast %12 : vector<1x1x32x16xbf16> to vector<32x16xbf16>
    %c0_20 = arith.constant 0 : index
    %c2_21 = arith.constant 2 : index
    %c0_22 = arith.constant 0 : index
    %c0_23 = arith.constant 0 : index
    %14 = vector.load %arg5[%c0_20, %c2_21, %c0_22, %c0_23] : memref<3x3x16x64xbf16, #tpu.memory_space<vmem>>, vector<1x1x16x64xbf16>
    %15 = vector.shape_cast %14 : vector<1x1x16x64xbf16> to vector<16x64xbf16>
    %cst_24 = arith.constant dense<0.000000e+00> : vector<32x64xf32>
    %16 = tpu.matmul %13, %15, %cst_24 {dimension_numbers = #tpu.dot_dimension_numbers<[1], [0], [0], [1], [0, 0, 1, 1], [], []>} : vector<32x16xbf16>, vector<16x64xbf16>, vector<32x64xf32> -> vector<32x64xf32>
    %17 = arith.addf %11, %16 : vector<32x64xf32>
    %c0_25 = arith.constant 0 : index
    %c0_26 = arith.constant 0 : index
    %c0_27 = arith.constant 0 : index
    %c0_28 = arith.constant 0 : index
    %18 = vector.load %arg3[%c0_25, %c0_26, %c0_27, %c0_28] : memref<1x8x34x16xbf16, #tpu.memory_space<vmem>>, vector<1x1x32x16xbf16>
    %19 = vector.shape_cast %18 : vector<1x1x32x16xbf16> to vector<32x16xbf16>
    %c1_29 = arith.constant 1 : index
    %c0_30 = arith.constant 0 : index
    %c0_31 = arith.constant 0 : index
    %c0_32 = arith.constant 0 : index
    %20 = vector.load %arg5[%c1_29, %c0_30, %c0_31, %c0_32] : memref<3x3x16x64xbf16, #tpu.memory_space<vmem>>, vector<1x1x16x64xbf16>
    %21 = vector.shape_cast %20 : vector<1x1x16x64xbf16> to vector<16x64xbf16>
    %cst_33 = arith.constant dense<0.000000e+00> : vector<32x64xf32>
    %22 = tpu.matmul %19, %21, %cst_33 {dimension_numbers = #tpu.dot_dimension_numbers<[1], [0], [0], [1], [0, 0, 1, 1], [], []>} : vector<32x16xbf16>, vector<16x64xbf16>, vector<32x64xf32> -> vector<32x64xf32>
    %23 = arith.addf %17, %22 : vector<32x64xf32>
    %c0_34 = arith.constant 0 : index
    %c0_35 = arith.constant 0 : index
    %c1_36 = arith.constant 1 : index
    %c0_37 = arith.constant 0 : index
    %24 = vector.load %arg3[%c0_34, %c0_35, %c1_36, %c0_37] : memref<1x8x34x16xbf16, #tpu.memory_space<vmem>>, vector<1x1x32x16xbf16>
    %25 = vector.shape_cast %24 : vector<1x1x32x16xbf16> to vector<32x16xbf16>
    %c1_38 = arith.constant 1 : index
    %c1_39 = arith.constant 1 : index
    %c0_40 = arith.constant 0 : index
    %c0_41 = arith.constant 0 : index
    %26 = vector.load %arg5[%c1_38, %c1_39, %c0_40, %c0_41] : memref<3x3x16x64xbf16, #tpu.memory_space<vmem>>, vector<1x1x16x64xbf16>
    %27 = vector.shape_cast %26 : vector<1x1x16x64xbf16> to vector<16x64xbf16>
    %cst_42 = arith.constant dense<0.000000e+00> : vector<32x64xf32>
    %28 = tpu.matmul %25, %27, %cst_42 {dimension_numbers = #tpu.dot_dimension_numbers<[1], [0], [0], [1], [0, 0, 1, 1], [], []>} : vector<32x16xbf16>, vector<16x64xbf16>, vector<32x64xf32> -> vector<32x64xf32>
    %29 = arith.addf %23, %28 : vector<32x64xf32>
    %c0_43 = arith.constant 0 : index
    %c0_44 = arith.constant 0 : index
    %c2_45 = arith.constant 2 : index
    %c0_46 = arith.constant 0 : index
    %30 = vector.load %arg3[%c0_43, %c0_44, %c2_45, %c0_46] : memref<1x8x34x16xbf16, #tpu.memory_space<vmem>>, vector<1x1x32x16xbf16>
    %31 = vector.shape_cast %30 : vector<1x1x32x16xbf16> to vector<32x16xbf16>
    %c1_47 = arith.constant 1 : index
    %c2_48 = arith.constant 2 : index
    %c0_49 = arith.constant 0 : index
    %c0_50 = arith.constant 0 : index
    %32 = vector.load %arg5[%c1_47, %c2_48, %c0_49, %c0_50] : memref<3x3x16x64xbf16, #tpu.memory_space<vmem>>, vector<1x1x16x64xbf16>
    %33 = vector.shape_cast %32 : vector<1x1x16x64xbf16> to vector<16x64xbf16>
    %cst_51 = arith.constant dense<0.000000e+00> : vector<32x64xf32>
    %34 = tpu.matmul %31, %33, %cst_51 {dimension_numbers = #tpu.dot_dimension_numbers<[1], [0], [0], [1], [0, 0, 1, 1], [], []>} : vector<32x16xbf16>, vector<16x64xbf16>, vector<32x64xf32> -> vector<32x64xf32>
    %35 = arith.addf %29, %34 : vector<32x64xf32>
    %c0_52 = arith.constant 0 : index
    %c0_53 = arith.constant 0 : index
    %c0_54 = arith.constant 0 : index
    %c0_55 = arith.constant 0 : index
    %36 = vector.load %arg4[%c0_52, %c0_53, %c0_54, %c0_55] : memref<1x8x34x16xbf16, #tpu.memory_space<vmem>>, vector<1x1x32x16xbf16>
    %37 = vector.shape_cast %36 : vector<1x1x32x16xbf16> to vector<32x16xbf16>
    %c2_56 = arith.constant 2 : index
    %c0_57 = arith.constant 0 : index
    %c0_58 = arith.constant 0 : index
    %c0_59 = arith.constant 0 : index
    %38 = vector.load %arg5[%c2_56, %c0_57, %c0_58, %c0_59] : memref<3x3x16x64xbf16, #tpu.memory_space<vmem>>, vector<1x1x16x64xbf16>
    %39 = vector.shape_cast %38 : vector<1x1x16x64xbf16> to vector<16x64xbf16>
    %cst_60 = arith.constant dense<0.000000e+00> : vector<32x64xf32>
    %40 = tpu.matmul %37, %39, %cst_60 {dimension_numbers = #tpu.dot_dimension_numbers<[1], [0], [0], [1], [0, 0, 1, 1], [], []>} : vector<32x16xbf16>, vector<16x64xbf16>, vector<32x64xf32> -> vector<32x64xf32>
    %41 = arith.addf %35, %40 : vector<32x64xf32>
    %c0_61 = arith.constant 0 : index
    %c0_62 = arith.constant 0 : index
    %c1_63 = arith.constant 1 : index
    %c0_64 = arith.constant 0 : index
    %42 = vector.load %arg4[%c0_61, %c0_62, %c1_63, %c0_64] : memref<1x8x34x16xbf16, #tpu.memory_space<vmem>>, vector<1x1x32x16xbf16>
    %43 = vector.shape_cast %42 : vector<1x1x32x16xbf16> to vector<32x16xbf16>
    %c2_65 = arith.constant 2 : index
    %c1_66 = arith.constant 1 : index
    %c0_67 = arith.constant 0 : index
    %c0_68 = arith.constant 0 : index
    %44 = vector.load %arg5[%c2_65, %c1_66, %c0_67, %c0_68] : memref<3x3x16x64xbf16, #tpu.memory_space<vmem>>, vector<1x1x16x64xbf16>
    %45 = vector.shape_cast %44 : vector<1x1x16x64xbf16> to vector<16x64xbf16>
    %cst_69 = arith.constant dense<0.000000e+00> : vector<32x64xf32>
    %46 = tpu.matmul %43, %45, %cst_69 {dimension_numbers = #tpu.dot_dimension_numbers<[1], [0], [0], [1], [0, 0, 1, 1], [], []>} : vector<32x16xbf16>, vector<16x64xbf16>, vector<32x64xf32> -> vector<32x64xf32>
    %47 = arith.addf %41, %46 : vector<32x64xf32>
    %c0_70 = arith.constant 0 : index
    %c0_71 = arith.constant 0 : index
    %c2_72 = arith.constant 2 : index
    %c0_73 = arith.constant 0 : index
    %48 = vector.load %arg4[%c0_70, %c0_71, %c2_72, %c0_73] : memref<1x8x34x16xbf16, #tpu.memory_space<vmem>>, vector<1x1x32x16xbf16>
    %49 = vector.shape_cast %48 : vector<1x1x32x16xbf16> to vector<32x16xbf16>
    %c2_74 = arith.constant 2 : index
    %c2_75 = arith.constant 2 : index
    %c0_76 = arith.constant 0 : index
    %c0_77 = arith.constant 0 : index
    %50 = vector.load %arg5[%c2_74, %c2_75, %c0_76, %c0_77] : memref<3x3x16x64xbf16, #tpu.memory_space<vmem>>, vector<1x1x16x64xbf16>
    %51 = vector.shape_cast %50 : vector<1x1x16x64xbf16> to vector<16x64xbf16>
    %cst_78 = arith.constant dense<0.000000e+00> : vector<32x64xf32>
    %52 = tpu.matmul %49, %51, %cst_78 {dimension_numbers = #tpu.dot_dimension_numbers<[1], [0], [0], [1], [0, 0, 1, 1], [], []>} : vector<32x16xbf16>, vector<16x64xbf16>, vector<32x64xf32> -> vector<32x64xf32>
    %53 = arith.addf %47, %52 : vector<32x64xf32>
    %54 = vector.broadcast %0 : vector<1x64xf32> to vector<32x64xf32>
    %55 = arith.addf %53, %54 : vector<32x64xf32>
    %cst_79 = arith.constant 0.000000e+00 : f32
    %56 = vector.broadcast %cst_79 : f32 to vector<32x64xf32>
    %57 = arith.maximumf %55, %56 : vector<32x64xf32>
    %58 = arith.truncf %57 : vector<32x64xf32> to vector<32x64xbf16>
    %c0_80 = arith.constant 0 : index
    %c0_81 = arith.constant 0 : index
    %c0_82 = arith.constant 0 : index
    %c0_83 = arith.constant 0 : index
    %59 = vector.load %arg7[%c0_80, %c0_81, %c0_82, %c0_83] : memref<1x8x32x64xbf16, #tpu.memory_space<vmem>>, vector<1x1x32x64xbf16>
    %60 = vector.shape_cast %59 : vector<1x1x32x64xbf16> to vector<32x64xbf16>
    %61 = vector.shape_cast %58 : vector<32x64xbf16> to vector<1x1x32x64xbf16>
    tpu.vector_store %arg7[%c0_80, %c0_81, %c0_82, %c0_83], %61 {strides = array<i32>} : memref<1x8x32x64xbf16, #tpu.memory_space<vmem>>, vector<1x1x32x64xbf16>,
    %c0_84 = arith.constant 0 : index
    %c1_85 = arith.constant 1 : index
    %c0_86 = arith.constant 0 : index
    %c0_87 = arith.constant 0 : index
    %62 = vector.load %arg2[%c0_84, %c1_85, %c0_86, %c0_87] : memref<1x8x34x16xbf16, #tpu.memory_space<vmem>>, vector<1x1x32x16xbf16>
    %63 = vector.shape_cast %62 : vector<1x1x32x16xbf16> to vector<32x16xbf16>
    %c0_88 = arith.constant 0 : index
    %c0_89 = arith.constant 0 : index
    %c0_90 = arith.constant 0 : index
    %c0_91 = arith.constant 0 : index
    %64 = vector.load %arg5[%c0_88, %c0_89, %c0_90, %c0_91] : memref<3x3x16x64xbf16, #tpu.memory_space<vmem>>, vector<1x1x16x64xbf16>
    %65 = vector.shape_cast %64 : vector<1x1x16x64xbf16> to vector<16x64xbf16>
    %cst_92 = arith.constant dense<0.000000e+00> : vector<32x64xf32>
    %66 = tpu.matmul %63, %65, %cst_92 {dimension_numbers = #tpu.dot_dimension_numbers<[1], [0], [0], [1], [0, 0, 1, 1], [], []>} : vector<32x16xbf16>, vector<16x64xbf16>, vector<32x64xf32> -> vector<32x64xf32>
    %c0_93 = arith.constant 0 : index
    %c1_94 = arith.constant 1 : index
    %c1_95 = arith.constant 1 : index
    %c0_96 = arith.constant 0 : index
    %67 = vector.load %arg2[%c0_93, %c1_94, %c1_95, %c0_96] : memref<1x8x34x16xbf16, #tpu.memory_space<vmem>>, vector<1x1x32x16xbf16>
    %68 = vector.shape_cast %67 : vector<1x1x32x16xbf16> to vector<32x16xbf16>
    %c0_97 = arith.constant 0 : index
    %c1_98 = arith.constant 1 : index
    %c0_99 = arith.constant 0 : index
    %c0_100 = arith.constant 0 : index
    %69 = vector.load %arg5[%c0_97, %c1_98, %c0_99, %c0_100] : memref<3x3x16x64xbf16, #tpu.memory_space<vmem>>, vector<1x1x16x64xbf16>
    %70 = vector.shape_cast %69 : vector<1x1x16x64xbf16> to vector<16x64xbf16>
    %cst_101 = arith.constant dense<0.000000e+00> : vector<32x64xf32>
    %71 = tpu.matmul %68, %70, %cst_101 {dimension_numbers = #tpu.dot_dimension_numbers<[1], [0], [0], [1], [0, 0, 1, 1], [], []>} : vector<32x16xbf16>, vector<16x64xbf16>, vector<32x64xf32> -> vector<32x64xf32>
    %72 = arith.addf %66, %71 : vector<32x64xf32>
    %c0_102 = arith.constant 0 : index
    %c1_103 = arith.constant 1 : index
    %c2_104 = arith.constant 2 : index
    %c0_105 = arith.constant 0 : index
    %73 = vector.load %arg2[%c0_102, %c1_103, %c2_104, %c0_105] : memref<1x8x34x16xbf16, #tpu.memory_space<vmem>>, vector<1x1x32x16xbf16>
    %74 = vector.shape_cast %73 : vector<1x1x32x16xbf16> to vector<32x16xbf16>
    %c0_106 = arith.constant 0 : index
    %c2_107 = arith.constant 2 : index
    %c0_108 = arith.constant 0 : index
    %c0_109 = arith.constant 0 : index
    %75 = vector.load %arg5[%c0_106, %c2_107, %c0_108, %c0_109] : memref<3x3x16x64xbf16, #tpu.memory_space<vmem>>, vector<1x1x16x64xbf16>
    %76 = vector.shape_cast %75 : vector<1x1x16x64xbf16> to vector<16x64xbf16>
    %cst_110 = arith.constant dense<0.000000e+00> : vector<32x64xf32>
    %77 = tpu.matmul %74, %76, %cst_110 {dimension_numbers = #tpu.dot_dimension_numbers<[1], [0], [0], [1], [0, 0, 1, 1], [], []>} : vector<32x16xbf16>, vector<16x64xbf16>, vector<32x64xf32> -> vector<32x64xf32>
    %78 = arith.addf %72, %77 : vector<32x64xf32>
    %c0_111 = arith.constant 0 : index
    %c1_112 = arith.constant 1 : index
    %c0_113 = arith.constant 0 : index
    %c0_114 = arith.constant 0 : index
    %79 = vector.load %arg3[%c0_111, %c1_112, %c0_113, %c0_114] : memref<1x8x34x16xbf16, #tpu.memory_space<vmem>>, vector<1x1x32x16xbf16>
    %80 = vector.shape_cast %79 : vector<1x1x32x16xbf16> to vector<32x16xbf16>
    %c1_115 = arith.constant 1 : index
    %c0_116 = arith.constant 0 : index
    %c0_117 = arith.constant 0 : index
    %c0_118 = arith.constant 0 : index
    %81 = vector.load %arg5[%c1_115, %c0_116, %c0_117, %c0_118] : memref<3x3x16x64xbf16, #tpu.memory_space<vmem>>, vector<1x1x16x64xbf16>
    %82 = vector.shape_cast %81 : vector<1x1x16x64xbf16> to vector<16x64xbf16>
    %cst_119 = arith.constant dense<0.000000e+00> : vector<32x64xf32>
    %83 = tpu.matmul %80, %82, %cst_119 {dimension_numbers = #tpu.dot_dimension_numbers<[1], [0], [0], [1], [0, 0, 1, 1], [], []>} : vector<32x16xbf16>, vector<16x64xbf16>, vector<32x64xf32> -> vector<32x64xf32>
    %84 = arith.addf %78, %83 : vector<32x64xf32>
    %c0_120 = arith.constant 0 : index
    %c1_121 = arith.constant 1 : index
    %c1_122 = arith.constant 1 : index
    %c0_123 = arith.constant 0 : index
    %85 = vector.load %arg3[%c0_120, %c1_121, %c1_122, %c0_123] : memref<1x8x34x16xbf16, #tpu.memory_space<vmem>>, vector<1x1x32x16xbf16>
    %86 = vector.shape_cast %85 : vector<1x1x32x16xbf16> to vector<32x16xbf16>
    %c1_124 = arith.constant 1 : index
    %c1_125 = arith.constant 1 : index
    %c0_126 = arith.constant 0 : index
    %c0_127 = arith.constant 0 : index
    %87 = vector.load %arg5[%c1_124, %c1_125, %c0_126, %c0_127] : memref<3x3x16x64xbf16, #tpu.memory_space<vmem>>, vector<1x1x16x64xbf16>
    %88 = vector.shape_cast %87 : vector<1x1x16x64xbf16> to vector<16x64xbf16>
    %cst_128 = arith.constant dense<0.000000e+00> : vector<32x64xf32>
    %89 = tpu.matmul %86, %88, %cst_128 {dimension_numbers = #tpu.dot_dimension_numbers<[1], [0], [0], [1], [0, 0, 1, 1], [], []>} : vector<32x16xbf16>, vector<16x64xbf16>, vector<32x64xf32> -> vector<32x64xf32>
    %90 = arith.addf %84, %89 : vector<32x64xf32>
    %c0_129 = arith.constant 0 : index
    %c1_130 = arith.constant 1 : index
    %c2_131 = arith.constant 2 : index
    %c0_132 = arith.constant 0 : index
    %91 = vector.load %arg3[%c0_129, %c1_130, %c2_131, %c0_132] : memref<1x8x34x16xbf16, #tpu.memory_space<vmem>>, vector<1x1x32x16xbf16>
    %92 = vector.shape_cast %91 : vector<1x1x32x16xbf16> to vector<32x16xbf16>
    %c1_133 = arith.constant 1 : index
    %c2_134 = arith.constant 2 : index
    %c0_135 = arith.constant 0 : index
    %c0_136 = arith.constant 0 : index
    %93 = vector.load %arg5[%c1_133, %c2_134, %c0_135, %c0_136] : memref<3x3x16x64xbf16, #tpu.memory_space<vmem>>, vector<1x1x16x64xbf16>
    %94 = vector.shape_cast %93 : vector<1x1x16x64xbf16> to vector<16x64xbf16>
    %cst_137 = arith.constant dense<0.000000e+00> : vector<32x64xf32>
    %95 = tpu.matmul %92, %94, %cst_137 {dimension_numbers = #tpu.dot_dimension_numbers<[1], [0], [0], [1], [0, 0, 1, 1], [], []>} : vector<32x16xbf16>, vector<16x64xbf16>, vector<32x64xf32> -> vector<32x64xf32>
    %96 = arith.addf %90, %95 : vector<32x64xf32>
    %c0_138 = arith.constant 0 : index
    %c1_139 = arith.constant 1 : index
    %c0_140 = arith.constant 0 : index
    %c0_141 = arith.constant 0 : index
    %97 = vector.load %arg4[%c0_138, %c1_139, %c0_140, %c0_141] : memref<1x8x34x16xbf16, #tpu.memory_space<vmem>>, vector<1x1x32x16xbf16>
    %98 = vector.shape_cast %97 : vector<1x1x32x16xbf16> to vector<32x16xbf16>
    %c2_142 = arith.constant 2 : index
    %c0_143 = arith.constant 0 : index
    %c0_144 = arith.constant 0 : index
    %c0_145 = arith.constant 0 : index
    %99 = vector.load %arg5[%c2_142, %c0_143, %c0_144, %c0_145] : memref<3x3x16x64xbf16, #tpu.memory_space<vmem>>, vector<1x1x16x64xbf16>
    %100 = vector.shape_cast %99 : vector<1x1x16x64xbf16> to vector<16x64xbf16>
    %cst_146 = arith.constant dense<0.000000e+00> : vector<32x64xf32>
    %101 = tpu.matmul %98, %100, %cst_146 {dimension_numbers = #tpu.dot_dimension_numbers<[1], [0], [0], [1], [0, 0, 1, 1], [], []>} : vector<32x16xbf16>, vector<16x64xbf16>, vector<32x64xf32> -> vector<32x64xf32>
    %102 = arith.addf %96, %101 : vector<32x64xf32>
    %c0_147 = arith.constant 0 : index
    %c1_148 = arith.constant 1 : index
    %c1_149 = arith.constant 1 : index
    %c0_150 = arith.constant 0 : index
    %103 = vector.load %arg4[%c0_147, %c1_148, %c1_149, %c0_150] : memref<1x8x34x16xbf16, #tpu.memory_space<vmem>>, vector<1x1x32x16xbf16>
    %104 = vector.shape_cast %103 : vector<1x1x32x16xbf16> to vector<32x16xbf16>
    %c2_151 = arith.constant 2 : index
    %c1_152 = arith.constant 1 : index
    %c0_153 = arith.constant 0 : index
    %c0_154 = arith.constant 0 : index
    %105 = vector.load %arg5[%c2_151, %c1_152, %c0_153, %c0_154] : memref<3x3x16x64xbf16, #tpu.memory_space<vmem>>, vector<1x1x16x64xbf16>
    %106 = vector.shape_cast %105 : vector<1x1x16x64xbf16> to vector<16x64xbf16>
    %cst_155 = arith.constant dense<0.000000e+00> : vector<32x64xf32>
    %107 = tpu.matmul %104, %106, %cst_155 {dimension_numbers = #tpu.dot_dimension_numbers<[1], [0], [0], [1], [0, 0, 1, 1], [], []>} : vector<32x16xbf16>, vector<16x64xbf16>, vector<32x64xf32> -> vector<32x64xf32>
    %108 = arith.addf %102, %107 : vector<32x64xf32>
    %c0_156 = arith.constant 0 : index
    %c1_157 = arith.constant 1 : index
    %c2_158 = arith.constant 2 : index
    %c0_159 = arith.constant 0 : index
    %109 = vector.load %arg4[%c0_156, %c1_157, %c2_158, %c0_159] : memref<1x8x34x16xbf16, #tpu.memory_space<vmem>>, vector<1x1x32x16xbf16>
    %110 = vector.shape_cast %109 : vector<1x1x32x16xbf16> to vector<32x16xbf16>
    %c2_160 = arith.constant 2 : index
    %c2_161 = arith.constant 2 : index
    %c0_162 = arith.constant 0 : index
    %c0_163 = arith.constant 0 : index
    %111 = vector.load %arg5[%c2_160, %c2_161, %c0_162, %c0_163] : memref<3x3x16x64xbf16, #tpu.memory_space<vmem>>, vector<1x1x16x64xbf16>
    %112 = vector.shape_cast %111 : vector<1x1x16x64xbf16> to vector<16x64xbf16>
    %cst_164 = arith.constant dense<0.000000e+00> : vector<32x64xf32>
    %113 = tpu.matmul %110, %112, %cst_164 {dimension_numbers = #tpu.dot_dimension_numbers<[1], [0], [0], [1], [0, 0, 1, 1], [], []>} : vector<32x16xbf16>, vector<16x64xbf16>, vector<32x64xf32> -> vector<32x64xf32>
    %114 = arith.addf %108, %113 : vector<32x64xf32>
    %115 = vector.broadcast %0 : vector<1x64xf32> to vector<32x64xf32>
    %116 = arith.addf %114, %115 : vector<32x64xf32>
    %cst_165 = arith.constant 0.000000e+00 : f32
    %117 = vector.broadcast %cst_165 : f32 to vector<32x64xf32>
    %118 = arith.maximumf %116, %117 : vector<32x64xf32>
    %119 = arith.truncf %118 : vector<32x64xf32> to vector<32x64xbf16>
    %c0_166 = arith.constant 0 : index
    %c1_167 = arith.constant 1 : index
    %c0_168 = arith.constant 0 : index
    %c0_169 = arith.constant 0 : index
    %120 = vector.load %arg7[%c0_166, %c1_167, %c0_168, %c0_169] : memref<1x8x32x64xbf16, #tpu.memory_space<vmem>>, vector<1x1x32x64xbf16>
    %121 = vector.shape_cast %120 : vector<1x1x32x64xbf16> to vector<32x64xbf16>
    %122 = vector.shape_cast %119 : vector<32x64xbf16> to vector<1x1x32x64xbf16>
    tpu.vector_store %arg7[%c0_166, %c1_167, %c0_168, %c0_169], %122 {strides = array<i32>} : memref<1x8x32x64xbf16, #tpu.memory_space<vmem>>, vector<1x1x32x64xbf16>,
    %c0_170 = arith.constant 0 : index
    %c2_171 = arith.constant 2 : index
    %c0_172 = arith.constant 0 : index
    %c0_173 = arith.constant 0 : index
    %123 = vector.load %arg2[%c0_170, %c2_171, %c0_172, %c0_173] : memref<1x8x34x16xbf16, #tpu.memory_space<vmem>>, vector<1x1x32x16xbf16>
    %124 = vector.shape_cast %123 : vector<1x1x32x16xbf16> to vector<32x16xbf16>
    %c0_174 = arith.constant 0 : index
    %c0_175 = arith.constant 0 : index
    %c0_176 = arith.constant 0 : index
    %c0_177 = arith.constant 0 : index
    %125 = vector.load %arg5[%c0_174, %c0_175, %c0_176, %c0_177] : memref<3x3x16x64xbf16, #tpu.memory_space<vmem>>, vector<1x1x16x64xbf16>
    %126 = vector.shape_cast %125 : vector<1x1x16x64xbf16> to vector<16x64xbf16>
    %cst_178 = arith.constant dense<0.000000e+00> : vector<32x64xf32>
    %127 = tpu.matmul %124, %126, %cst_178 {dimension_numbers = #tpu.dot_dimension_numbers<[1], [0], [0], [1], [0, 0, 1, 1], [], []>} : vector<32x16xbf16>, vector<16x64xbf16>, vector<32x64xf32> -> vector<32x64xf32>
    %c0_179 = arith.constant 0 : index
    %c2_180 = arith.constant 2 : index
    %c1_181 = arith.constant 1 : index
    %c0_182 = arith.constant 0 : index
    %128 = vector.load %arg2[%c0_179, %c2_180, %c1_181, %c0_182] : memref<1x8x34x16xbf16, #tpu.memory_space<vmem>>, vector<1x1x32x16xbf16>
    %129 = vector.shape_cast %128 : vector<1x1x32x16xbf16> to vector<32x16xbf16>
    %c0_183 = arith.constant 0 : index
    %c1_184 = arith.constant 1 : index
    %c0_185 = arith.constant 0 : index
    %c0_186 = arith.constant 0 : index
    %130 = vector.load %arg5[%c0_183, %c1_184, %c0_185, %c0_186] : memref<3x3x16x64xbf16, #tpu.memory_space<vmem>>, vector<1x1x16x64xbf16>
    %131 = vector.shape_cast %130 : vector<1x1x16x64xbf16> to vector<16x64xbf16>
    %cst_187 = arith.constant dense<0.000000e+00> : vector<32x64xf32>
    %132 = tpu.matmul %129, %131, %cst_187 {dimension_numbers = #tpu.dot_dimension_numbers<[1], [0], [0], [1], [0, 0, 1, 1], [], []>} : vector<32x16xbf16>, vector<16x64xbf16>, vector<32x64xf32> -> vector<32x64xf32>
    %133 = arith.addf %127, %132 : vector<32x64xf32>
    %c0_188 = arith.constant 0 : index
    %c2_189 = arith.constant 2 : index
    %c2_190 = arith.constant 2 : index
    %c0_191 = arith.constant 0 : index
    %134 = vector.load %arg2[%c0_188, %c2_189, %c2_190, %c0_191] : memref<1x8x34x16xbf16, #tpu.memory_space<vmem>>, vector<1x1x32x16xbf16>
    %135 = vector.shape_cast %134 : vector<1x1x32x16xbf16> to vector<32x16xbf16>
    %c0_192 = arith.constant 0 : index
    %c2_193 = arith.constant 2 : index
    %c0_194 = arith.constant 0 : index
    %c0_195 = arith.constant 0 : index
    %136 = vector.load %arg5[%c0_192, %c2_193, %c0_194, %c0_195] : memref<3x3x16x64xbf16, #tpu.memory_space<vmem>>, vector<1x1x16x64xbf16>
    %137 = vector.shape_cast %136 : vector<1x1x16x64xbf16> to vector<16x64xbf16>
    %cst_196 = arith.constant dense<0.000000e+00> : vector<32x64xf32>
    %138 = tpu.matmul %135, %137, %cst_196 {dimension_numbers = #tpu.dot_dimension_numbers<[1], [0], [0], [1], [0, 0, 1, 1], [], []>} : vector<32x16xbf16>, vector<16x64xbf16>, vector<32x64xf32> -> vector<32x64xf32>
    %139 = arith.addf %133, %138 : vector<32x64xf32>
    %c0_197 = arith.constant 0 : index
    %c2_198 = arith.constant 2 : index
    %c0_199 = arith.constant 0 : index
    %c0_200 = arith.constant 0 : index
    %140 = vector.load %arg3[%c0_197, %c2_198, %c0_199, %c0_200] : memref<1x8x34x16xbf16, #tpu.memory_space<vmem>>, vector<1x1x32x16xbf16>
    %141 = vector.shape_cast %140 : vector<1x1x32x16xbf16> to vector<32x16xbf16>
    %c1_201 = arith.constant 1 : index
    %c0_202 = arith.constant 0 : index
    %c0_203 = arith.constant 0 : index
    %c0_204 = arith.constant 0 : index
    %142 = vector.load %arg5[%c1_201, %c0_202, %c0_203, %c0_204] : memref<3x3x16x64xbf16, #tpu.memory_space<vmem>>, vector<1x1x16x64xbf16>
    %143 = vector.shape_cast %142 : vector<1x1x16x64xbf16> to vector<16x64xbf16>
    %cst_205 = arith.constant dense<0.000000e+00> : vector<32x64xf32>
    %144 = tpu.matmul %141, %143, %cst_205 {dimension_numbers = #tpu.dot_dimension_numbers<[1], [0], [0], [1], [0, 0, 1, 1], [], []>} : vector<32x16xbf16>, vector<16x64xbf16>, vector<32x64xf32> -> vector<32x64xf32>
    %145 = arith.addf %139, %144 : vector<32x64xf32>
    %c0_206 = arith.constant 0 : index
    %c2_207 = arith.constant 2 : index
    %c1_208 = arith.constant 1 : index
    %c0_209 = arith.constant 0 : index
    %146 = vector.load %arg3[%c0_206, %c2_207, %c1_208, %c0_209] : memref<1x8x34x16xbf16, #tpu.memory_space<vmem>>, vector<1x1x32x16xbf16>
    %147 = vector.shape_cast %146 : vector<1x1x32x16xbf16> to vector<32x16xbf16>
    %c1_210 = arith.constant 1 : index
    %c1_211 = arith.constant 1 : index
    %c0_212 = arith.constant 0 : index
    %c0_213 = arith.constant 0 : index
    %148 = vector.load %arg5[%c1_210, %c1_211, %c0_212, %c0_213] : memref<3x3x16x64xbf16, #tpu.memory_space<vmem>>, vector<1x1x16x64xbf16>
    %149 = vector.shape_cast %148 : vector<1x1x16x64xbf16> to vector<16x64xbf16>
    %cst_214 = arith.constant dense<0.000000e+00> : vector<32x64xf32>
    %150 = tpu.matmul %147, %149, %cst_214 {dimension_numbers = #tpu.dot_dimension_numbers<[1], [0], [0], [1], [0, 0, 1, 1], [], []>} : vector<32x16xbf16>, vector<16x64xbf16>, vector<32x64xf32> -> vector<32x64xf32>
    %151 = arith.addf %145, %150 : vector<32x64xf32>
    %c0_215 = arith.constant 0 : index
    %c2_216 = arith.constant 2 : index
    %c2_217 = arith.constant 2 : index
    %c0_218 = arith.constant 0 : index
    %152 = vector.load %arg3[%c0_215, %c2_216, %c2_217, %c0_218] : memref<1x8x34x16xbf16, #tpu.memory_space<vmem>>, vector<1x1x32x16xbf16>
    %153 = vector.shape_cast %152 : vector<1x1x32x16xbf16> to vector<32x16xbf16>
    %c1_219 = arith.constant 1 : index
    %c2_220 = arith.constant 2 : index
    %c0_221 = arith.constant 0 : index
    %c0_222 = arith.constant 0 : index
    %154 = vector.load %arg5[%c1_219, %c2_220, %c0_221, %c0_222] : memref<3x3x16x64xbf16, #tpu.memory_space<vmem>>, vector<1x1x16x64xbf16>
    %155 = vector.shape_cast %154 : vector<1x1x16x64xbf16> to vector<16x64xbf16>
    %cst_223 = arith.constant dense<0.000000e+00> : vector<32x64xf32>
    %156 = tpu.matmul %153, %155, %cst_223 {dimension_numbers = #tpu.dot_dimension_numbers<[1], [0], [0], [1], [0, 0, 1, 1], [], []>} : vector<32x16xbf16>, vector<16x64xbf16>, vector<32x64xf32> -> vector<32x64xf32>
    %157 = arith.addf %151, %156 : vector<32x64xf32>
    %c0_224 = arith.constant 0 : index
    %c2_225 = arith.constant 2 : index
    %c0_226 = arith.constant 0 : index
    %c0_227 = arith.constant 0 : index
    %158 = vector.load %arg4[%c0_224, %c2_225, %c0_226, %c0_227] : memref<1x8x34x16xbf16, #tpu.memory_space<vmem>>, vector<1x1x32x16xbf16>
    %159 = vector.shape_cast %158 : vector<1x1x32x16xbf16> to vector<32x16xbf16>
    %c2_228 = arith.constant 2 : index
    %c0_229 = arith.constant 0 : index
    %c0_230 = arith.constant 0 : index
    %c0_231 = arith.constant 0 : index
    %160 = vector.load %arg5[%c2_228, %c0_229, %c0_230, %c0_231] : memref<3x3x16x64xbf16, #tpu.memory_space<vmem>>, vector<1x1x16x64xbf16>
    %161 = vector.shape_cast %160 : vector<1x1x16x64xbf16> to vector<16x64xbf16>
    %cst_232 = arith.constant dense<0.000000e+00> : vector<32x64xf32>
    %162 = tpu.matmul %159, %161, %cst_232 {dimension_numbers = #tpu.dot_dimension_numbers<[1], [0], [0], [1], [0, 0, 1, 1], [], []>} : vector<32x16xbf16>, vector<16x64xbf16>, vector<32x64xf32> -> vector<32x64xf32>
    %163 = arith.addf %157, %162 : vector<32x64xf32>
    %c0_233 = arith.constant 0 : index
    %c2_234 = arith.constant 2 : index
    %c1_235 = arith.constant 1 : index
    %c0_236 = arith.constant 0 : index
    %164 = vector.load %arg4[%c0_233, %c2_234, %c1_235, %c0_236] : memref<1x8x34x16xbf16, #tpu.memory_space<vmem>>, vector<1x1x32x16xbf16>
    %165 = vector.shape_cast %164 : vector<1x1x32x16xbf16> to vector<32x16xbf16>
    %c2_237 = arith.constant 2 : index
    %c1_238 = arith.constant 1 : index
    %c0_239 = arith.constant 0 : index
    %c0_240 = arith.constant 0 : index
    %166 = vector.load %arg5[%c2_237, %c1_238, %c0_239, %c0_240] : memref<3x3x16x64xbf16, #tpu.memory_space<vmem>>, vector<1x1x16x64xbf16>
    %167 = vector.shape_cast %166 : vector<1x1x16x64xbf16> to vector<16x64xbf16>
    %cst_241 = arith.constant dense<0.000000e+00> : vector<32x64xf32>
    %168 = tpu.matmul %165, %167, %cst_241 {dimension_numbers = #tpu.dot_dimension_numbers<[1], [0], [0], [1], [0, 0, 1, 1], [], []>} : vector<32x16xbf16>, vector<16x64xbf16>, vector<32x64xf32> -> vector<32x64xf32>
    %169 = arith.addf %163, %168 : vector<32x64xf32>
    %c0_242 = arith.constant 0 : index
    %c2_243 = arith.constant 2 : index
    %c2_244 = arith.constant 2 : index
    %c0_245 = arith.constant 0 : index
    %170 = vector.load %arg4[%c0_242, %c2_243, %c2_244, %c0_245] : memref<1x8x34x16xbf16, #tpu.memory_space<vmem>>, vector<1x1x32x16xbf16>
    %171 = vector.shape_cast %170 : vector<1x1x32x16xbf16> to vector<32x16xbf16>
    %c2_246 = arith.constant 2 : index
    %c2_247 = arith.constant 2 : index
    %c0_248 = arith.constant 0 : index
    %c0_249 = arith.constant 0 : index
    %172 = vector.load %arg5[%c2_246, %c2_247, %c0_248, %c0_249] : memref<3x3x16x64xbf16, #tpu.memory_space<vmem>>, vector<1x1x16x64xbf16>
    %173 = vector.shape_cast %172 : vector<1x1x16x64xbf16> to vector<16x64xbf16>
    %cst_250 = arith.constant dense<0.000000e+00> : vector<32x64xf32>
    %174 = tpu.matmul %171, %173, %cst_250 {dimension_numbers = #tpu.dot_dimension_numbers<[1], [0], [0], [1], [0, 0, 1, 1], [], []>} : vector<32x16xbf16>, vector<16x64xbf16>, vector<32x64xf32> -> vector<32x64xf32>
    %175 = arith.addf %169, %174 : vector<32x64xf32>
    %176 = vector.broadcast %0 : vector<1x64xf32> to vector<32x64xf32>
    %177 = arith.addf %175, %176 : vector<32x64xf32>
    %cst_251 = arith.constant 0.000000e+00 : f32
    %178 = vector.broadcast %cst_251 : f32 to vector<32x64xf32>
    %179 = arith.maximumf %177, %178 : vector<32x64xf32>
    %180 = arith.truncf %179 : vector<32x64xf32> to vector<32x64xbf16>
    %c0_252 = arith.constant 0 : index
    %c2_253 = arith.constant 2 : index
    %c0_254 = arith.constant 0 : index
    %c0_255 = arith.constant 0 : index
    %181 = vector.load %arg7[%c0_252, %c2_253, %c0_254, %c0_255] : memref<1x8x32x64xbf16, #tpu.memory_space<vmem>>, vector<1x1x32x64xbf16>
    %182 = vector.shape_cast %181 : vector<1x1x32x64xbf16> to vector<32x64xbf16>
    %183 = vector.shape_cast %180 : vector<32x64xbf16> to vector<1x1x32x64xbf16>
    tpu.vector_store %arg7[%c0_252, %c2_253, %c0_254, %c0_255], %183 {strides = array<i32>} : memref<1x8x32x64xbf16, #tpu.memory_space<vmem>>, vector<1x1x32x64xbf16>,
    %c0_256 = arith.constant 0 : index
    %c3 = arith.constant 3 : index
    %c0_257 = arith.constant 0 : index
    %c0_258 = arith.constant 0 : index
    %184 = vector.load %arg2[%c0_256, %c3, %c0_257, %c0_258] : memref<1x8x34x16xbf16, #tpu.memory_space<vmem>>, vector<1x1x32x16xbf16>
    %185 = vector.shape_cast %184 : vector<1x1x32x16xbf16> to vector<32x16xbf16>
    %c0_259 = arith.constant 0 : index
    %c0_260 = arith.constant 0 : index
    %c0_261 = arith.constant 0 : index
    %c0_262 = arith.constant 0 : index
    %186 = vector.load %arg5[%c0_259, %c0_260, %c0_261, %c0_262] : memref<3x3x16x64xbf16, #tpu.memory_space<vmem>>, vector<1x1x16x64xbf16>
    %187 = vector.shape_cast %186 : vector<1x1x16x64xbf16> to vector<16x64xbf16>
    %cst_263 = arith.constant dense<0.000000e+00> : vector<32x64xf32>
    %188 = tpu.matmul %185, %187, %cst_263 {dimension_numbers = #tpu.dot_dimension_numbers<[1], [0], [0], [1], [0, 0, 1, 1], [], []>} : vector<32x16xbf16>, vector<16x64xbf16>, vector<32x64xf32> -> vector<32x64xf32>
    %c0_264 = arith.constant 0 : index
    %c3_265 = arith.constant 3 : index
    %c1_266 = arith.constant 1 : index
    %c0_267 = arith.constant 0 : index
    %189 = vector.load %arg2[%c0_264, %c3_265, %c1_266, %c0_267] : memref<1x8x34x16xbf16, #tpu.memory_space<vmem>>, vector<1x1x32x16xbf16>
    %190 = vector.shape_cast %189 : vector<1x1x32x16xbf16> to vector<32x16xbf16>
    %c0_268 = arith.constant 0 : index
    %c1_269 = arith.constant 1 : index
    %c0_270 = arith.constant 0 : index
    %c0_271 = arith.constant 0 : index
    %191 = vector.load %arg5[%c0_268, %c1_269, %c0_270, %c0_271] : memref<3x3x16x64xbf16, #tpu.memory_space<vmem>>, vector<1x1x16x64xbf16>
    %192 = vector.shape_cast %191 : vector<1x1x16x64xbf16> to vector<16x64xbf16>
    %cst_272 = arith.constant dense<0.000000e+00> : vector<32x64xf32>
    %193 = tpu.matmul %190, %192, %cst_272 {dimension_numbers = #tpu.dot_dimension_numbers<[1], [0], [0], [1], [0, 0, 1, 1], [], []>} : vector<32x16xbf16>, vector<16x64xbf16>, vector<32x64xf32> -> vector<32x64xf32>
    %194 = arith.addf %188, %193 : vector<32x64xf32>
    %c0_273 = arith.constant 0 : index
    %c3_274 = arith.constant 3 : index
    %c2_275 = arith.constant 2 : index
    %c0_276 = arith.constant 0 : index
    %195 = vector.load %arg2[%c0_273, %c3_274, %c2_275, %c0_276] : memref<1x8x34x16xbf16, #tpu.memory_space<vmem>>, vector<1x1x32x16xbf16>
    %196 = vector.shape_cast %195 : vector<1x1x32x16xbf16> to vector<32x16xbf16>
    %c0_277 = arith.constant 0 : index
    %c2_278 = arith.constant 2 : index
    %c0_279 = arith.constant 0 : index
    %c0_280 = arith.constant 0 : index
    %197 = vector.load %arg5[%c0_277, %c2_278, %c0_279, %c0_280] : memref<3x3x16x64xbf16, #tpu.memory_space<vmem>>, vector<1x1x16x64xbf16>
    %198 = vector.shape_cast %197 : vector<1x1x16x64xbf16> to vector<16x64xbf16>
    %cst_281 = arith.constant dense<0.000000e+00> : vector<32x64xf32>
    %199 = tpu.matmul %196, %198, %cst_281 {dimension_numbers = #tpu.dot_dimension_numbers<[1], [0], [0], [1], [0, 0, 1, 1], [], []>} : vector<32x16xbf16>, vector<16x64xbf16>, vector<32x64xf32> -> vector<32x64xf32>
    %200 = arith.addf %194, %199 : vector<32x64xf32>
    %c0_282 = arith.constant 0 : index
    %c3_283 = arith.constant 3 : index
    %c0_284 = arith.constant 0 : index
    %c0_285 = arith.constant 0 : index
    %201 = vector.load %arg3[%c0_282, %c3_283, %c0_284, %c0_285] : memref<1x8x34x16xbf16, #tpu.memory_space<vmem>>, vector<1x1x32x16xbf16>
    %202 = vector.shape_cast %201 : vector<1x1x32x16xbf16> to vector<32x16xbf16>
    %c1_286 = arith.constant 1 : index
    %c0_287 = arith.constant 0 : index
    %c0_288 = arith.constant 0 : index
    %c0_289 = arith.constant 0 : index
    %203 = vector.load %arg5[%c1_286, %c0_287, %c0_288, %c0_289] : memref<3x3x16x64xbf16, #tpu.memory_space<vmem>>, vector<1x1x16x64xbf16>
    %204 = vector.shape_cast %203 : vector<1x1x16x64xbf16> to vector<16x64xbf16>
    %cst_290 = arith.constant dense<0.000000e+00> : vector<32x64xf32>
    %205 = tpu.matmul %202, %204, %cst_290 {dimension_numbers = #tpu.dot_dimension_numbers<[1], [0], [0], [1], [0, 0, 1, 1], [], []>} : vector<32x16xbf16>, vector<16x64xbf16>, vector<32x64xf32> -> vector<32x64xf32>
    %206 = arith.addf %200, %205 : vector<32x64xf32>
    %c0_291 = arith.constant 0 : index
    %c3_292 = arith.constant 3 : index
    %c1_293 = arith.constant 1 : index
    %c0_294 = arith.constant 0 : index
    %207 = vector.load %arg3[%c0_291, %c3_292, %c1_293, %c0_294] : memref<1x8x34x16xbf16, #tpu.memory_space<vmem>>, vector<1x1x32x16xbf16>
    %208 = vector.shape_cast %207 : vector<1x1x32x16xbf16> to vector<32x16xbf16>
    %c1_295 = arith.constant 1 : index
    %c1_296 = arith.constant 1 : index
    %c0_297 = arith.constant 0 : index
    %c0_298 = arith.constant 0 : index
    %209 = vector.load %arg5[%c1_295, %c1_296, %c0_297, %c0_298] : memref<3x3x16x64xbf16, #tpu.memory_space<vmem>>, vector<1x1x16x64xbf16>
    %210 = vector.shape_cast %209 : vector<1x1x16x64xbf16> to vector<16x64xbf16>
    %cst_299 = arith.constant dense<0.000000e+00> : vector<32x64xf32>
    %211 = tpu.matmul %208, %210, %cst_299 {dimension_numbers = #tpu.dot_dimension_numbers<[1], [0], [0], [1], [0, 0, 1, 1], [], []>} : vector<32x16xbf16>, vector<16x64xbf16>, vector<32x64xf32> -> vector<32x64xf32>
    %212 = arith.addf %206, %211 : vector<32x64xf32>
    %c0_300 = arith.constant 0 : index
    %c3_301 = arith.constant 3 : index
    %c2_302 = arith.constant 2 : index
    %c0_303 = arith.constant 0 : index
    %213 = vector.load %arg3[%c0_300, %c3_301, %c2_302, %c0_303] : memref<1x8x34x16xbf16, #tpu.memory_space<vmem>>, vector<1x1x32x16xbf16>
    %214 = vector.shape_cast %213 : vector<1x1x32x16xbf16> to vector<32x16xbf16>
    %c1_304 = arith.constant 1 : index
    %c2_305 = arith.constant 2 : index
    %c0_306 = arith.constant 0 : index
    %c0_307 = arith.constant 0 : index
    %215 = vector.load %arg5[%c1_304, %c2_305, %c0_306, %c0_307] : memref<3x3x16x64xbf16, #tpu.memory_space<vmem>>, vector<1x1x16x64xbf16>
    %216 = vector.shape_cast %215 : vector<1x1x16x64xbf16> to vector<16x64xbf16>
    %cst_308 = arith.constant dense<0.000000e+00> : vector<32x64xf32>
    %217 = tpu.matmul %214, %216, %cst_308 {dimension_numbers = #tpu.dot_dimension_numbers<[1], [0], [0], [1], [0, 0, 1, 1], [], []>} : vector<32x16xbf16>, vector<16x64xbf16>, vector<32x64xf32> -> vector<32x64xf32>
    %218 = arith.addf %212, %217 : vector<32x64xf32>
    %c0_309 = arith.constant 0 : index
    %c3_310 = arith.constant 3 : index
    %c0_311 = arith.constant 0 : index
    %c0_312 = arith.constant 0 : index
    %219 = vector.load %arg4[%c0_309, %c3_310, %c0_311, %c0_312] : memref<1x8x34x16xbf16, #tpu.memory_space<vmem>>, vector<1x1x32x16xbf16>
    %220 = vector.shape_cast %219 : vector<1x1x32x16xbf16> to vector<32x16xbf16>
    %c2_313 = arith.constant 2 : index
    %c0_314 = arith.constant 0 : index
    %c0_315 = arith.constant 0 : index
    %c0_316 = arith.constant 0 : index
    %221 = vector.load %arg5[%c2_313, %c0_314, %c0_315, %c0_316] : memref<3x3x16x64xbf16, #tpu.memory_space<vmem>>, vector<1x1x16x64xbf16>
    %222 = vector.shape_cast %221 : vector<1x1x16x64xbf16> to vector<16x64xbf16>
    %cst_317 = arith.constant dense<0.000000e+00> : vector<32x64xf32>
    %223 = tpu.matmul %220, %222, %cst_317 {dimension_numbers = #tpu.dot_dimension_numbers<[1], [0], [0], [1], [0, 0, 1, 1], [], []>} : vector<32x16xbf16>, vector<16x64xbf16>, vector<32x64xf32> -> vector<32x64xf32>
    %224 = arith.addf %218, %223 : vector<32x64xf32>
    %c0_318 = arith.constant 0 : index
    %c3_319 = arith.constant 3 : index
    %c1_320 = arith.constant 1 : index
    %c0_321 = arith.constant 0 : index
    %225 = vector.load %arg4[%c0_318, %c3_319, %c1_320, %c0_321] : memref<1x8x34x16xbf16, #tpu.memory_space<vmem>>, vector<1x1x32x16xbf16>
    %226 = vector.shape_cast %225 : vector<1x1x32x16xbf16> to vector<32x16xbf16>
    %c2_322 = arith.constant 2 : index
    %c1_323 = arith.constant 1 : index
    %c0_324 = arith.constant 0 : index
    %c0_325 = arith.constant 0 : index
    %227 = vector.load %arg5[%c2_322, %c1_323, %c0_324, %c0_325] : memref<3x3x16x64xbf16, #tpu.memory_space<vmem>>, vector<1x1x16x64xbf16>
    %228 = vector.shape_cast %227 : vector<1x1x16x64xbf16> to vector<16x64xbf16>
    %cst_326 = arith.constant dense<0.000000e+00> : vector<32x64xf32>
    %229 = tpu.matmul %226, %228, %cst_326 {dimension_numbers = #tpu.dot_dimension_numbers<[1], [0], [0], [1], [0, 0, 1, 1], [], []>} : vector<32x16xbf16>, vector<16x64xbf16>, vector<32x64xf32> -> vector<32x64xf32>
    %230 = arith.addf %224, %229 : vector<32x64xf32>
    %c0_327 = arith.constant 0 : index
    %c3_328 = arith.constant 3 : index
    %c2_329 = arith.constant 2 : index
    %c0_330 = arith.constant 0 : index
    %231 = vector.load %arg4[%c0_327, %c3_328, %c2_329, %c0_330] : memref<1x8x34x16xbf16, #tpu.memory_space<vmem>>, vector<1x1x32x16xbf16>
    %232 = vector.shape_cast %231 : vector<1x1x32x16xbf16> to vector<32x16xbf16>
    %c2_331 = arith.constant 2 : index
    %c2_332 = arith.constant 2 : index
    %c0_333 = arith.constant 0 : index
    %c0_334 = arith.constant 0 : index
    %233 = vector.load %arg5[%c2_331, %c2_332, %c0_333, %c0_334] : memref<3x3x16x64xbf16, #tpu.memory_space<vmem>>, vector<1x1x16x64xbf16>
    %234 = vector.shape_cast %233 : vector<1x1x16x64xbf16> to vector<16x64xbf16>
    %cst_335 = arith.constant dense<0.000000e+00> : vector<32x64xf32>
    %235 = tpu.matmul %232, %234, %cst_335 {dimension_numbers = #tpu.dot_dimension_numbers<[1], [0], [0], [1], [0, 0, 1, 1], [], []>} : vector<32x16xbf16>, vector<16x64xbf16>, vector<32x64xf32> -> vector<32x64xf32>
    %236 = arith.addf %230, %235 : vector<32x64xf32>
    %237 = vector.broadcast %0 : vector<1x64xf32> to vector<32x64xf32>
    %238 = arith.addf %236, %237 : vector<32x64xf32>
    %cst_336 = arith.constant 0.000000e+00 : f32
    %239 = vector.broadcast %cst_336 : f32 to vector<32x64xf32>
    %240 = arith.maximumf %238, %239 : vector<32x64xf32>
    %241 = arith.truncf %240 : vector<32x64xf32> to vector<32x64xbf16>
    %c0_337 = arith.constant 0 : index
    %c3_338 = arith.constant 3 : index
    %c0_339 = arith.constant 0 : index
    %c0_340 = arith.constant 0 : index
    %242 = vector.load %arg7[%c0_337, %c3_338, %c0_339, %c0_340] : memref<1x8x32x64xbf16, #tpu.memory_space<vmem>>, vector<1x1x32x64xbf16>
    %243 = vector.shape_cast %242 : vector<1x1x32x64xbf16> to vector<32x64xbf16>
    %244 = vector.shape_cast %241 : vector<32x64xbf16> to vector<1x1x32x64xbf16>
    tpu.vector_store %arg7[%c0_337, %c3_338, %c0_339, %c0_340], %244 {strides = array<i32>} : memref<1x8x32x64xbf16, #tpu.memory_space<vmem>>, vector<1x1x32x64xbf16>,
    %c0_341 = arith.constant 0 : index
    %c4 = arith.constant 4 : index
    %c0_342 = arith.constant 0 : index
    %c0_343 = arith.constant 0 : index
    %245 = vector.load %arg2[%c0_341, %c4, %c0_342, %c0_343] : memref<1x8x34x16xbf16, #tpu.memory_space<vmem>>, vector<1x1x32x16xbf16>
    %246 = vector.shape_cast %245 : vector<1x1x32x16xbf16> to vector<32x16xbf16>
    %c0_344 = arith.constant 0 : index
    %c0_345 = arith.constant 0 : index
    %c0_346 = arith.constant 0 : index
    %c0_347 = arith.constant 0 : index
    %247 = vector.load %arg5[%c0_344, %c0_345, %c0_346, %c0_347] : memref<3x3x16x64xbf16, #tpu.memory_space<vmem>>, vector<1x1x16x64xbf16>
    %248 = vector.shape_cast %247 : vector<1x1x16x64xbf16> to vector<16x64xbf16>
    %cst_348 = arith.constant dense<0.000000e+00> : vector<32x64xf32>
    %249 = tpu.matmul %246, %248, %cst_348 {dimension_numbers = #tpu.dot_dimension_numbers<[1], [0], [0], [1], [0, 0, 1, 1], [], []>} : vector<32x16xbf16>, vector<16x64xbf16>, vector<32x64xf32> -> vector<32x64xf32>
    %c0_349 = arith.constant 0 : index
    %c4_350 = arith.constant 4 : index
    %c1_351 = arith.constant 1 : index
    %c0_352 = arith.constant 0 : index
    %250 = vector.load %arg2[%c0_349, %c4_350, %c1_351, %c0_352] : memref<1x8x34x16xbf16, #tpu.memory_space<vmem>>, vector<1x1x32x16xbf16>
    %251 = vector.shape_cast %250 : vector<1x1x32x16xbf16> to vector<32x16xbf16>
    %c0_353 = arith.constant 0 : index
    %c1_354 = arith.constant 1 : index
    %c0_355 = arith.constant 0 : index
    %c0_356 = arith.constant 0 : index
    %252 = vector.load %arg5[%c0_353, %c1_354, %c0_355, %c0_356] : memref<3x3x16x64xbf16, #tpu.memory_space<vmem>>, vector<1x1x16x64xbf16>
    %253 = vector.shape_cast %252 : vector<1x1x16x64xbf16> to vector<16x64xbf16>
    %cst_357 = arith.constant dense<0.000000e+00> : vector<32x64xf32>
    %254 = tpu.matmul %251, %253, %cst_357 {dimension_numbers = #tpu.dot_dimension_numbers<[1], [0], [0], [1], [0, 0, 1, 1], [], []>} : vector<32x16xbf16>, vector<16x64xbf16>, vector<32x64xf32> -> vector<32x64xf32>
    %255 = arith.addf %249, %254 : vector<32x64xf32>
    %c0_358 = arith.constant 0 : index
    %c4_359 = arith.constant 4 : index
    %c2_360 = arith.constant 2 : index
    %c0_361 = arith.constant 0 : index
    %256 = vector.load %arg2[%c0_358, %c4_359, %c2_360, %c0_361] : memref<1x8x34x16xbf16, #tpu.memory_space<vmem>>, vector<1x1x32x16xbf16>
    %257 = vector.shape_cast %256 : vector<1x1x32x16xbf16> to vector<32x16xbf16>
    %c0_362 = arith.constant 0 : index
    %c2_363 = arith.constant 2 : index
    %c0_364 = arith.constant 0 : index
    %c0_365 = arith.constant 0 : index
    %258 = vector.load %arg5[%c0_362, %c2_363, %c0_364, %c0_365] : memref<3x3x16x64xbf16, #tpu.memory_space<vmem>>, vector<1x1x16x64xbf16>
    %259 = vector.shape_cast %258 : vector<1x1x16x64xbf16> to vector<16x64xbf16>
    %cst_366 = arith.constant dense<0.000000e+00> : vector<32x64xf32>
    %260 = tpu.matmul %257, %259, %cst_366 {dimension_numbers = #tpu.dot_dimension_numbers<[1], [0], [0], [1], [0, 0, 1, 1], [], []>} : vector<32x16xbf16>, vector<16x64xbf16>, vector<32x64xf32> -> vector<32x64xf32>
    %261 = arith.addf %255, %260 : vector<32x64xf32>
    %c0_367 = arith.constant 0 : index
    %c4_368 = arith.constant 4 : index
    %c0_369 = arith.constant 0 : index
    %c0_370 = arith.constant 0 : index
    %262 = vector.load %arg3[%c0_367, %c4_368, %c0_369, %c0_370] : memref<1x8x34x16xbf16, #tpu.memory_space<vmem>>, vector<1x1x32x16xbf16>
    %263 = vector.shape_cast %262 : vector<1x1x32x16xbf16> to vector<32x16xbf16>
    %c1_371 = arith.constant 1 : index
    %c0_372 = arith.constant 0 : index
    %c0_373 = arith.constant 0 : index
    %c0_374 = arith.constant 0 : index
    %264 = vector.load %arg5[%c1_371, %c0_372, %c0_373, %c0_374] : memref<3x3x16x64xbf16, #tpu.memory_space<vmem>>, vector<1x1x16x64xbf16>
    %265 = vector.shape_cast %264 : vector<1x1x16x64xbf16> to vector<16x64xbf16>
    %cst_375 = arith.constant dense<0.000000e+00> : vector<32x64xf32>
    %266 = tpu.matmul %263, %265, %cst_375 {dimension_numbers = #tpu.dot_dimension_numbers<[1], [0], [0], [1], [0, 0, 1, 1], [], []>} : vector<32x16xbf16>, vector<16x64xbf16>, vector<32x64xf32> -> vector<32x64xf32>
    %267 = arith.addf %261, %266 : vector<32x64xf32>
    %c0_376 = arith.constant 0 : index
    %c4_377 = arith.constant 4 : index
    %c1_378 = arith.constant 1 : index
    %c0_379 = arith.constant 0 : index
    %268 = vector.load %arg3[%c0_376, %c4_377, %c1_378, %c0_379] : memref<1x8x34x16xbf16, #tpu.memory_space<vmem>>, vector<1x1x32x16xbf16>
    %269 = vector.shape_cast %268 : vector<1x1x32x16xbf16> to vector<32x16xbf16>
    %c1_380 = arith.constant 1 : index
    %c1_381 = arith.constant 1 : index
    %c0_382 = arith.constant 0 : index
    %c0_383 = arith.constant 0 : index
    %270 = vector.load %arg5[%c1_380, %c1_381, %c0_382, %c0_383] : memref<3x3x16x64xbf16, #tpu.memory_space<vmem>>, vector<1x1x16x64xbf16>
    %271 = vector.shape_cast %270 : vector<1x1x16x64xbf16> to vector<16x64xbf16>
    %cst_384 = arith.constant dense<0.000000e+00> : vector<32x64xf32>
    %272 = tpu.matmul %269, %271, %cst_384 {dimension_numbers = #tpu.dot_dimension_numbers<[1], [0], [0], [1], [0, 0, 1, 1], [], []>} : vector<32x16xbf16>, vector<16x64xbf16>, vector<32x64xf32> -> vector<32x64xf32>
    %273 = arith.addf %267, %272 : vector<32x64xf32>
    %c0_385 = arith.constant 0 : index
    %c4_386 = arith.constant 4 : index
    %c2_387 = arith.constant 2 : index
    %c0_388 = arith.constant 0 : index
    %274 = vector.load %arg3[%c0_385, %c4_386, %c2_387, %c0_388] : memref<1x8x34x16xbf16, #tpu.memory_space<vmem>>, vector<1x1x32x16xbf16>
    %275 = vector.shape_cast %274 : vector<1x1x32x16xbf16> to vector<32x16xbf16>
    %c1_389 = arith.constant 1 : index
    %c2_390 = arith.constant 2 : index
    %c0_391 = arith.constant 0 : index
    %c0_392 = arith.constant 0 : index
    %276 = vector.load %arg5[%c1_389, %c2_390, %c0_391, %c0_392] : memref<3x3x16x64xbf16, #tpu.memory_space<vmem>>, vector<1x1x16x64xbf16>
    %277 = vector.shape_cast %276 : vector<1x1x16x64xbf16> to vector<16x64xbf16>
    %cst_393 = arith.constant dense<0.000000e+00> : vector<32x64xf32>
    %278 = tpu.matmul %275, %277, %cst_393 {dimension_numbers = #tpu.dot_dimension_numbers<[1], [0], [0], [1], [0, 0, 1, 1], [], []>} : vector<32x16xbf16>, vector<16x64xbf16>, vector<32x64xf32> -> vector<32x64xf32>
    %279 = arith.addf %273, %278 : vector<32x64xf32>
    %c0_394 = arith.constant 0 : index
    %c4_395 = arith.constant 4 : index
    %c0_396 = arith.constant 0 : index
    %c0_397 = arith.constant 0 : index
    %280 = vector.load %arg4[%c0_394, %c4_395, %c0_396, %c0_397] : memref<1x8x34x16xbf16, #tpu.memory_space<vmem>>, vector<1x1x32x16xbf16>
    %281 = vector.shape_cast %280 : vector<1x1x32x16xbf16> to vector<32x16xbf16>
    %c2_398 = arith.constant 2 : index
    %c0_399 = arith.constant 0 : index
    %c0_400 = arith.constant 0 : index
    %c0_401 = arith.constant 0 : index
    %282 = vector.load %arg5[%c2_398, %c0_399, %c0_400, %c0_401] : memref<3x3x16x64xbf16, #tpu.memory_space<vmem>>, vector<1x1x16x64xbf16>
    %283 = vector.shape_cast %282 : vector<1x1x16x64xbf16> to vector<16x64xbf16>
    %cst_402 = arith.constant dense<0.000000e+00> : vector<32x64xf32>
    %284 = tpu.matmul %281, %283, %cst_402 {dimension_numbers = #tpu.dot_dimension_numbers<[1], [0], [0], [1], [0, 0, 1, 1], [], []>} : vector<32x16xbf16>, vector<16x64xbf16>, vector<32x64xf32> -> vector<32x64xf32>
    %285 = arith.addf %279, %284 : vector<32x64xf32>
    %c0_403 = arith.constant 0 : index
    %c4_404 = arith.constant 4 : index
    %c1_405 = arith.constant 1 : index
    %c0_406 = arith.constant 0 : index
    %286 = vector.load %arg4[%c0_403, %c4_404, %c1_405, %c0_406] : memref<1x8x34x16xbf16, #tpu.memory_space<vmem>>, vector<1x1x32x16xbf16>
    %287 = vector.shape_cast %286 : vector<1x1x32x16xbf16> to vector<32x16xbf16>
    %c2_407 = arith.constant 2 : index
    %c1_408 = arith.constant 1 : index
    %c0_409 = arith.constant 0 : index
    %c0_410 = arith.constant 0 : index
    %288 = vector.load %arg5[%c2_407, %c1_408, %c0_409, %c0_410] : memref<3x3x16x64xbf16, #tpu.memory_space<vmem>>, vector<1x1x16x64xbf16>
    %289 = vector.shape_cast %288 : vector<1x1x16x64xbf16> to vector<16x64xbf16>
    %cst_411 = arith.constant dense<0.000000e+00> : vector<32x64xf32>
    %290 = tpu.matmul %287, %289, %cst_411 {dimension_numbers = #tpu.dot_dimension_numbers<[1], [0], [0], [1], [0, 0, 1, 1], [], []>} : vector<32x16xbf16>, vector<16x64xbf16>, vector<32x64xf32> -> vector<32x64xf32>
    %291 = arith.addf %285, %290 : vector<32x64xf32>
    %c0_412 = arith.constant 0 : index
    %c4_413 = arith.constant 4 : index
    %c2_414 = arith.constant 2 : index
    %c0_415 = arith.constant 0 : index
    %292 = vector.load %arg4[%c0_412, %c4_413, %c2_414, %c0_415] : memref<1x8x34x16xbf16, #tpu.memory_space<vmem>>, vector<1x1x32x16xbf16>
    %293 = vector.shape_cast %292 : vector<1x1x32x16xbf16> to vector<32x16xbf16>
    %c2_416 = arith.constant 2 : index
    %c2_417 = arith.constant 2 : index
    %c0_418 = arith.constant 0 : index
    %c0_419 = arith.constant 0 : index
    %294 = vector.load %arg5[%c2_416, %c2_417, %c0_418, %c0_419] : memref<3x3x16x64xbf16, #tpu.memory_space<vmem>>, vector<1x1x16x64xbf16>
    %295 = vector.shape_cast %294 : vector<1x1x16x64xbf16> to vector<16x64xbf16>
    %cst_420 = arith.constant dense<0.000000e+00> : vector<32x64xf32>
    %296 = tpu.matmul %293, %295, %cst_420 {dimension_numbers = #tpu.dot_dimension_numbers<[1], [0], [0], [1], [0, 0, 1, 1], [], []>} : vector<32x16xbf16>, vector<16x64xbf16>, vector<32x64xf32> -> vector<32x64xf32>
    %297 = arith.addf %291, %296 : vector<32x64xf32>
    %298 = vector.broadcast %0 : vector<1x64xf32> to vector<32x64xf32>
    %299 = arith.addf %297, %298 : vector<32x64xf32>
    %cst_421 = arith.constant 0.000000e+00 : f32
    %300 = vector.broadcast %cst_421 : f32 to vector<32x64xf32>
    %301 = arith.maximumf %299, %300 : vector<32x64xf32>
    %302 = arith.truncf %301 : vector<32x64xf32> to vector<32x64xbf16>
    %c0_422 = arith.constant 0 : index
    %c4_423 = arith.constant 4 : index
    %c0_424 = arith.constant 0 : index
    %c0_425 = arith.constant 0 : index
    %303 = vector.load %arg7[%c0_422, %c4_423, %c0_424, %c0_425] : memref<1x8x32x64xbf16, #tpu.memory_space<vmem>>, vector<1x1x32x64xbf16>
    %304 = vector.shape_cast %303 : vector<1x1x32x64xbf16> to vector<32x64xbf16>
    %305 = vector.shape_cast %302 : vector<32x64xbf16> to vector<1x1x32x64xbf16>
    tpu.vector_store %arg7[%c0_422, %c4_423, %c0_424, %c0_425], %305 {strides = array<i32>} : memref<1x8x32x64xbf16, #tpu.memory_space<vmem>>, vector<1x1x32x64xbf16>,
    %c0_426 = arith.constant 0 : index
    %c5 = arith.constant 5 : index
    %c0_427 = arith.constant 0 : index
    %c0_428 = arith.constant 0 : index
    %306 = vector.load %arg2[%c0_426, %c5, %c0_427, %c0_428] : memref<1x8x34x16xbf16, #tpu.memory_space<vmem>>, vector<1x1x32x16xbf16>
    %307 = vector.shape_cast %306 : vector<1x1x32x16xbf16> to vector<32x16xbf16>
    %c0_429 = arith.constant 0 : index
    %c0_430 = arith.constant 0 : index
    %c0_431 = arith.constant 0 : index
    %c0_432 = arith.constant 0 : index
    %308 = vector.load %arg5[%c0_429, %c0_430, %c0_431, %c0_432] : memref<3x3x16x64xbf16, #tpu.memory_space<vmem>>, vector<1x1x16x64xbf16>
    %309 = vector.shape_cast %308 : vector<1x1x16x64xbf16> to vector<16x64xbf16>
    %cst_433 = arith.constant dense<0.000000e+00> : vector<32x64xf32>
    %310 = tpu.matmul %307, %309, %cst_433 {dimension_numbers = #tpu.dot_dimension_numbers<[1], [0], [0], [1], [0, 0, 1, 1], [], []>} : vector<32x16xbf16>, vector<16x64xbf16>, vector<32x64xf32> -> vector<32x64xf32>
    %c0_434 = arith.constant 0 : index
    %c5_435 = arith.constant 5 : index
    %c1_436 = arith.constant 1 : index
    %c0_437 = arith.constant 0 : index
    %311 = vector.load %arg2[%c0_434, %c5_435, %c1_436, %c0_437] : memref<1x8x34x16xbf16, #tpu.memory_space<vmem>>, vector<1x1x32x16xbf16>
    %312 = vector.shape_cast %311 : vector<1x1x32x16xbf16> to vector<32x16xbf16>
    %c0_438 = arith.constant 0 : index
    %c1_439 = arith.constant 1 : index
    %c0_440 = arith.constant 0 : index
    %c0_441 = arith.constant 0 : index
    %313 = vector.load %arg5[%c0_438, %c1_439, %c0_440, %c0_441] : memref<3x3x16x64xbf16, #tpu.memory_space<vmem>>, vector<1x1x16x64xbf16>
    %314 = vector.shape_cast %313 : vector<1x1x16x64xbf16> to vector<16x64xbf16>
    %cst_442 = arith.constant dense<0.000000e+00> : vector<32x64xf32>
    %315 = tpu.matmul %312, %314, %cst_442 {dimension_numbers = #tpu.dot_dimension_numbers<[1], [0], [0], [1], [0, 0, 1, 1], [], []>} : vector<32x16xbf16>, vector<16x64xbf16>, vector<32x64xf32> -> vector<32x64xf32>
    %316 = arith.addf %310, %315 : vector<32x64xf32>
    %c0_443 = arith.constant 0 : index
    %c5_444 = arith.constant 5 : index
    %c2_445 = arith.constant 2 : index
    %c0_446 = arith.constant 0 : index
    %317 = vector.load %arg2[%c0_443, %c5_444, %c2_445, %c0_446] : memref<1x8x34x16xbf16, #tpu.memory_space<vmem>>, vector<1x1x32x16xbf16>
    %318 = vector.shape_cast %317 : vector<1x1x32x16xbf16> to vector<32x16xbf16>
    %c0_447 = arith.constant 0 : index
    %c2_448 = arith.constant 2 : index
    %c0_449 = arith.constant 0 : index
    %c0_450 = arith.constant 0 : index
    %319 = vector.load %arg5[%c0_447, %c2_448, %c0_449, %c0_450] : memref<3x3x16x64xbf16, #tpu.memory_space<vmem>>, vector<1x1x16x64xbf16>
    %320 = vector.shape_cast %319 : vector<1x1x16x64xbf16> to vector<16x64xbf16>
    %cst_451 = arith.constant dense<0.000000e+00> : vector<32x64xf32>
    %321 = tpu.matmul %318, %320, %cst_451 {dimension_numbers = #tpu.dot_dimension_numbers<[1], [0], [0], [1], [0, 0, 1, 1], [], []>} : vector<32x16xbf16>, vector<16x64xbf16>, vector<32x64xf32> -> vector<32x64xf32>
    %322 = arith.addf %316, %321 : vector<32x64xf32>
    %c0_452 = arith.constant 0 : index
    %c5_453 = arith.constant 5 : index
    %c0_454 = arith.constant 0 : index
    %c0_455 = arith.constant 0 : index
    %323 = vector.load %arg3[%c0_452, %c5_453, %c0_454, %c0_455] : memref<1x8x34x16xbf16, #tpu.memory_space<vmem>>, vector<1x1x32x16xbf16>
    %324 = vector.shape_cast %323 : vector<1x1x32x16xbf16> to vector<32x16xbf16>
    %c1_456 = arith.constant 1 : index
    %c0_457 = arith.constant 0 : index
    %c0_458 = arith.constant 0 : index
    %c0_459 = arith.constant 0 : index
    %325 = vector.load %arg5[%c1_456, %c0_457, %c0_458, %c0_459] : memref<3x3x16x64xbf16, #tpu.memory_space<vmem>>, vector<1x1x16x64xbf16>
    %326 = vector.shape_cast %325 : vector<1x1x16x64xbf16> to vector<16x64xbf16>
    %cst_460 = arith.constant dense<0.000000e+00> : vector<32x64xf32>
    %327 = tpu.matmul %324, %326, %cst_460 {dimension_numbers = #tpu.dot_dimension_numbers<[1], [0], [0], [1], [0, 0, 1, 1], [], []>} : vector<32x16xbf16>, vector<16x64xbf16>, vector<32x64xf32> -> vector<32x64xf32>
    %328 = arith.addf %322, %327 : vector<32x64xf32>
    %c0_461 = arith.constant 0 : index
    %c5_462 = arith.constant 5 : index
    %c1_463 = arith.constant 1 : index
    %c0_464 = arith.constant 0 : index
    %329 = vector.load %arg3[%c0_461, %c5_462, %c1_463, %c0_464] : memref<1x8x34x16xbf16, #tpu.memory_space<vmem>>, vector<1x1x32x16xbf16>
    %330 = vector.shape_cast %329 : vector<1x1x32x16xbf16> to vector<32x16xbf16>
    %c1_465 = arith.constant 1 : index
    %c1_466 = arith.constant 1 : index
    %c0_467 = arith.constant 0 : index
    %c0_468 = arith.constant 0 : index
    %331 = vector.load %arg5[%c1_465, %c1_466, %c0_467, %c0_468] : memref<3x3x16x64xbf16, #tpu.memory_space<vmem>>, vector<1x1x16x64xbf16>
    %332 = vector.shape_cast %331 : vector<1x1x16x64xbf16> to vector<16x64xbf16>
    %cst_469 = arith.constant dense<0.000000e+00> : vector<32x64xf32>
    %333 = tpu.matmul %330, %332, %cst_469 {dimension_numbers = #tpu.dot_dimension_numbers<[1], [0], [0], [1], [0, 0, 1, 1], [], []>} : vector<32x16xbf16>, vector<16x64xbf16>, vector<32x64xf32> -> vector<32x64xf32>
    %334 = arith.addf %328, %333 : vector<32x64xf32>
    %c0_470 = arith.constant 0 : index
    %c5_471 = arith.constant 5 : index
    %c2_472 = arith.constant 2 : index
    %c0_473 = arith.constant 0 : index
    %335 = vector.load %arg3[%c0_470, %c5_471, %c2_472, %c0_473] : memref<1x8x34x16xbf16, #tpu.memory_space<vmem>>, vector<1x1x32x16xbf16>
    %336 = vector.shape_cast %335 : vector<1x1x32x16xbf16> to vector<32x16xbf16>
    %c1_474 = arith.constant 1 : index
    %c2_475 = arith.constant 2 : index
    %c0_476 = arith.constant 0 : index
    %c0_477 = arith.constant 0 : index
    %337 = vector.load %arg5[%c1_474, %c2_475, %c0_476, %c0_477] : memref<3x3x16x64xbf16, #tpu.memory_space<vmem>>, vector<1x1x16x64xbf16>
    %338 = vector.shape_cast %337 : vector<1x1x16x64xbf16> to vector<16x64xbf16>
    %cst_478 = arith.constant dense<0.000000e+00> : vector<32x64xf32>
    %339 = tpu.matmul %336, %338, %cst_478 {dimension_numbers = #tpu.dot_dimension_numbers<[1], [0], [0], [1], [0, 0, 1, 1], [], []>} : vector<32x16xbf16>, vector<16x64xbf16>, vector<32x64xf32> -> vector<32x64xf32>
    %340 = arith.addf %334, %339 : vector<32x64xf32>
    %c0_479 = arith.constant 0 : index
    %c5_480 = arith.constant 5 : index
    %c0_481 = arith.constant 0 : index
    %c0_482 = arith.constant 0 : index
    %341 = vector.load %arg4[%c0_479, %c5_480, %c0_481, %c0_482] : memref<1x8x34x16xbf16, #tpu.memory_space<vmem>>, vector<1x1x32x16xbf16>
    %342 = vector.shape_cast %341 : vector<1x1x32x16xbf16> to vector<32x16xbf16>
    %c2_483 = arith.constant 2 : index
    %c0_484 = arith.constant 0 : index
    %c0_485 = arith.constant 0 : index
    %c0_486 = arith.constant 0 : index
    %343 = vector.load %arg5[%c2_483, %c0_484, %c0_485, %c0_486] : memref<3x3x16x64xbf16, #tpu.memory_space<vmem>>, vector<1x1x16x64xbf16>
    %344 = vector.shape_cast %343 : vector<1x1x16x64xbf16> to vector<16x64xbf16>
    %cst_487 = arith.constant dense<0.000000e+00> : vector<32x64xf32>
    %345 = tpu.matmul %342, %344, %cst_487 {dimension_numbers = #tpu.dot_dimension_numbers<[1], [0], [0], [1], [0, 0, 1, 1], [], []>} : vector<32x16xbf16>, vector<16x64xbf16>, vector<32x64xf32> -> vector<32x64xf32>
    %346 = arith.addf %340, %345 : vector<32x64xf32>
    %c0_488 = arith.constant 0 : index
    %c5_489 = arith.constant 5 : index
    %c1_490 = arith.constant 1 : index
    %c0_491 = arith.constant 0 : index
    %347 = vector.load %arg4[%c0_488, %c5_489, %c1_490, %c0_491] : memref<1x8x34x16xbf16, #tpu.memory_space<vmem>>, vector<1x1x32x16xbf16>
    %348 = vector.shape_cast %347 : vector<1x1x32x16xbf16> to vector<32x16xbf16>
    %c2_492 = arith.constant 2 : index
    %c1_493 = arith.constant 1 : index
    %c0_494 = arith.constant 0 : index
    %c0_495 = arith.constant 0 : index
    %349 = vector.load %arg5[%c2_492, %c1_493, %c0_494, %c0_495] : memref<3x3x16x64xbf16, #tpu.memory_space<vmem>>, vector<1x1x16x64xbf16>
    %350 = vector.shape_cast %349 : vector<1x1x16x64xbf16> to vector<16x64xbf16>
    %cst_496 = arith.constant dense<0.000000e+00> : vector<32x64xf32>
    %351 = tpu.matmul %348, %350, %cst_496 {dimension_numbers = #tpu.dot_dimension_numbers<[1], [0], [0], [1], [0, 0, 1, 1], [], []>} : vector<32x16xbf16>, vector<16x64xbf16>, vector<32x64xf32> -> vector<32x64xf32>
    %352 = arith.addf %346, %351 : vector<32x64xf32>
    %c0_497 = arith.constant 0 : index
    %c5_498 = arith.constant 5 : index
    %c2_499 = arith.constant 2 : index
    %c0_500 = arith.constant 0 : index
    %353 = vector.load %arg4[%c0_497, %c5_498, %c2_499, %c0_500] : memref<1x8x34x16xbf16, #tpu.memory_space<vmem>>, vector<1x1x32x16xbf16>
    %354 = vector.shape_cast %353 : vector<1x1x32x16xbf16> to vector<32x16xbf16>
    %c2_501 = arith.constant 2 : index
    %c2_502 = arith.constant 2 : index
    %c0_503 = arith.constant 0 : index
    %c0_504 = arith.constant 0 : index
    %355 = vector.load %arg5[%c2_501, %c2_502, %c0_503, %c0_504] : memref<3x3x16x64xbf16, #tpu.memory_space<vmem>>, vector<1x1x16x64xbf16>
    %356 = vector.shape_cast %355 : vector<1x1x16x64xbf16> to vector<16x64xbf16>
    %cst_505 = arith.constant dense<0.000000e+00> : vector<32x64xf32>
    %357 = tpu.matmul %354, %356, %cst_505 {dimension_numbers = #tpu.dot_dimension_numbers<[1], [0], [0], [1], [0, 0, 1, 1], [], []>} : vector<32x16xbf16>, vector<16x64xbf16>, vector<32x64xf32> -> vector<32x64xf32>
    %358 = arith.addf %352, %357 : vector<32x64xf32>
    %359 = vector.broadcast %0 : vector<1x64xf32> to vector<32x64xf32>
    %360 = arith.addf %358, %359 : vector<32x64xf32>
    %cst_506 = arith.constant 0.000000e+00 : f32
    %361 = vector.broadcast %cst_506 : f32 to vector<32x64xf32>
    %362 = arith.maximumf %360, %361 : vector<32x64xf32>
    %363 = arith.truncf %362 : vector<32x64xf32> to vector<32x64xbf16>
    %c0_507 = arith.constant 0 : index
    %c5_508 = arith.constant 5 : index
    %c0_509 = arith.constant 0 : index
    %c0_510 = arith.constant 0 : index
    %364 = vector.load %arg7[%c0_507, %c5_508, %c0_509, %c0_510] : memref<1x8x32x64xbf16, #tpu.memory_space<vmem>>, vector<1x1x32x64xbf16>
    %365 = vector.shape_cast %364 : vector<1x1x32x64xbf16> to vector<32x64xbf16>
    %366 = vector.shape_cast %363 : vector<32x64xbf16> to vector<1x1x32x64xbf16>
    tpu.vector_store %arg7[%c0_507, %c5_508, %c0_509, %c0_510], %366 {strides = array<i32>} : memref<1x8x32x64xbf16, #tpu.memory_space<vmem>>, vector<1x1x32x64xbf16>,
    %c0_511 = arith.constant 0 : index
    %c6 = arith.constant 6 : index
    %c0_512 = arith.constant 0 : index
    %c0_513 = arith.constant 0 : index
    %367 = vector.load %arg2[%c0_511, %c6, %c0_512, %c0_513] : memref<1x8x34x16xbf16, #tpu.memory_space<vmem>>, vector<1x1x32x16xbf16>
    %368 = vector.shape_cast %367 : vector<1x1x32x16xbf16> to vector<32x16xbf16>
    %c0_514 = arith.constant 0 : index
    %c0_515 = arith.constant 0 : index
    %c0_516 = arith.constant 0 : index
    %c0_517 = arith.constant 0 : index
    %369 = vector.load %arg5[%c0_514, %c0_515, %c0_516, %c0_517] : memref<3x3x16x64xbf16, #tpu.memory_space<vmem>>, vector<1x1x16x64xbf16>
    %370 = vector.shape_cast %369 : vector<1x1x16x64xbf16> to vector<16x64xbf16>
    %cst_518 = arith.constant dense<0.000000e+00> : vector<32x64xf32>
    %371 = tpu.matmul %368, %370, %cst_518 {dimension_numbers = #tpu.dot_dimension_numbers<[1], [0], [0], [1], [0, 0, 1, 1], [], []>} : vector<32x16xbf16>, vector<16x64xbf16>, vector<32x64xf32> -> vector<32x64xf32>
    %c0_519 = arith.constant 0 : index
    %c6_520 = arith.constant 6 : index
    %c1_521 = arith.constant 1 : index
    %c0_522 = arith.constant 0 : index
    %372 = vector.load %arg2[%c0_519, %c6_520, %c1_521, %c0_522] : memref<1x8x34x16xbf16, #tpu.memory_space<vmem>>, vector<1x1x32x16xbf16>
    %373 = vector.shape_cast %372 : vector<1x1x32x16xbf16> to vector<32x16xbf16>
    %c0_523 = arith.constant 0 : index
    %c1_524 = arith.constant 1 : index
    %c0_525 = arith.constant 0 : index
    %c0_526 = arith.constant 0 : index
    %374 = vector.load %arg5[%c0_523, %c1_524, %c0_525, %c0_526] : memref<3x3x16x64xbf16, #tpu.memory_space<vmem>>, vector<1x1x16x64xbf16>
    %375 = vector.shape_cast %374 : vector<1x1x16x64xbf16> to vector<16x64xbf16>
    %cst_527 = arith.constant dense<0.000000e+00> : vector<32x64xf32>
    %376 = tpu.matmul %373, %375, %cst_527 {dimension_numbers = #tpu.dot_dimension_numbers<[1], [0], [0], [1], [0, 0, 1, 1], [], []>} : vector<32x16xbf16>, vector<16x64xbf16>, vector<32x64xf32> -> vector<32x64xf32>
    %377 = arith.addf %371, %376 : vector<32x64xf32>
    %c0_528 = arith.constant 0 : index
    %c6_529 = arith.constant 6 : index
    %c2_530 = arith.constant 2 : index
    %c0_531 = arith.constant 0 : index
    %378 = vector.load %arg2[%c0_528, %c6_529, %c2_530, %c0_531] : memref<1x8x34x16xbf16, #tpu.memory_space<vmem>>, vector<1x1x32x16xbf16>
    %379 = vector.shape_cast %378 : vector<1x1x32x16xbf16> to vector<32x16xbf16>
    %c0_532 = arith.constant 0 : index
    %c2_533 = arith.constant 2 : index
    %c0_534 = arith.constant 0 : index
    %c0_535 = arith.constant 0 : index
    %380 = vector.load %arg5[%c0_532, %c2_533, %c0_534, %c0_535] : memref<3x3x16x64xbf16, #tpu.memory_space<vmem>>, vector<1x1x16x64xbf16>
    %381 = vector.shape_cast %380 : vector<1x1x16x64xbf16> to vector<16x64xbf16>
    %cst_536 = arith.constant dense<0.000000e+00> : vector<32x64xf32>
    %382 = tpu.matmul %379, %381, %cst_536 {dimension_numbers = #tpu.dot_dimension_numbers<[1], [0], [0], [1], [0, 0, 1, 1], [], []>} : vector<32x16xbf16>, vector<16x64xbf16>, vector<32x64xf32> -> vector<32x64xf32>
    %383 = arith.addf %377, %382 : vector<32x64xf32>
    %c0_537 = arith.constant 0 : index
    %c6_538 = arith.constant 6 : index
    %c0_539 = arith.constant 0 : index
    %c0_540 = arith.constant 0 : index
    %384 = vector.load %arg3[%c0_537, %c6_538, %c0_539, %c0_540] : memref<1x8x34x16xbf16, #tpu.memory_space<vmem>>, vector<1x1x32x16xbf16>
    %385 = vector.shape_cast %384 : vector<1x1x32x16xbf16> to vector<32x16xbf16>
    %c1_541 = arith.constant 1 : index
    %c0_542 = arith.constant 0 : index
    %c0_543 = arith.constant 0 : index
    %c0_544 = arith.constant 0 : index
    %386 = vector.load %arg5[%c1_541, %c0_542, %c0_543, %c0_544] : memref<3x3x16x64xbf16, #tpu.memory_space<vmem>>, vector<1x1x16x64xbf16>
    %387 = vector.shape_cast %386 : vector<1x1x16x64xbf16> to vector<16x64xbf16>
    %cst_545 = arith.constant dense<0.000000e+00> : vector<32x64xf32>
    %388 = tpu.matmul %385, %387, %cst_545 {dimension_numbers = #tpu.dot_dimension_numbers<[1], [0], [0], [1], [0, 0, 1, 1], [], []>} : vector<32x16xbf16>, vector<16x64xbf16>, vector<32x64xf32> -> vector<32x64xf32>
    %389 = arith.addf %383, %388 : vector<32x64xf32>
    %c0_546 = arith.constant 0 : index
    %c6_547 = arith.constant 6 : index
    %c1_548 = arith.constant 1 : index
    %c0_549 = arith.constant 0 : index
    %390 = vector.load %arg3[%c0_546, %c6_547, %c1_548, %c0_549] : memref<1x8x34x16xbf16, #tpu.memory_space<vmem>>, vector<1x1x32x16xbf16>
    %391 = vector.shape_cast %390 : vector<1x1x32x16xbf16> to vector<32x16xbf16>
    %c1_550 = arith.constant 1 : index
    %c1_551 = arith.constant 1 : index
    %c0_552 = arith.constant 0 : index
    %c0_553 = arith.constant 0 : index
    %392 = vector.load %arg5[%c1_550, %c1_551, %c0_552, %c0_553] : memref<3x3x16x64xbf16, #tpu.memory_space<vmem>>, vector<1x1x16x64xbf16>
    %393 = vector.shape_cast %392 : vector<1x1x16x64xbf16> to vector<16x64xbf16>
    %cst_554 = arith.constant dense<0.000000e+00> : vector<32x64xf32>
    %394 = tpu.matmul %391, %393, %cst_554 {dimension_numbers = #tpu.dot_dimension_numbers<[1], [0], [0], [1], [0, 0, 1, 1], [], []>} : vector<32x16xbf16>, vector<16x64xbf16>, vector<32x64xf32> -> vector<32x64xf32>
    %395 = arith.addf %389, %394 : vector<32x64xf32>
    %c0_555 = arith.constant 0 : index
    %c6_556 = arith.constant 6 : index
    %c2_557 = arith.constant 2 : index
    %c0_558 = arith.constant 0 : index
    %396 = vector.load %arg3[%c0_555, %c6_556, %c2_557, %c0_558] : memref<1x8x34x16xbf16, #tpu.memory_space<vmem>>, vector<1x1x32x16xbf16>
    %397 = vector.shape_cast %396 : vector<1x1x32x16xbf16> to vector<32x16xbf16>
    %c1_559 = arith.constant 1 : index
    %c2_560 = arith.constant 2 : index
    %c0_561 = arith.constant 0 : index
    %c0_562 = arith.constant 0 : index
    %398 = vector.load %arg5[%c1_559, %c2_560, %c0_561, %c0_562] : memref<3x3x16x64xbf16, #tpu.memory_space<vmem>>, vector<1x1x16x64xbf16>
    %399 = vector.shape_cast %398 : vector<1x1x16x64xbf16> to vector<16x64xbf16>
    %cst_563 = arith.constant dense<0.000000e+00> : vector<32x64xf32>
    %400 = tpu.matmul %397, %399, %cst_563 {dimension_numbers = #tpu.dot_dimension_numbers<[1], [0], [0], [1], [0, 0, 1, 1], [], []>} : vector<32x16xbf16>, vector<16x64xbf16>, vector<32x64xf32> -> vector<32x64xf32>
    %401 = arith.addf %395, %400 : vector<32x64xf32>
    %c0_564 = arith.constant 0 : index
    %c6_565 = arith.constant 6 : index
    %c0_566 = arith.constant 0 : index
    %c0_567 = arith.constant 0 : index
    %402 = vector.load %arg4[%c0_564, %c6_565, %c0_566, %c0_567] : memref<1x8x34x16xbf16, #tpu.memory_space<vmem>>, vector<1x1x32x16xbf16>
    %403 = vector.shape_cast %402 : vector<1x1x32x16xbf16> to vector<32x16xbf16>
    %c2_568 = arith.constant 2 : index
    %c0_569 = arith.constant 0 : index
    %c0_570 = arith.constant 0 : index
    %c0_571 = arith.constant 0 : index
    %404 = vector.load %arg5[%c2_568, %c0_569, %c0_570, %c0_571] : memref<3x3x16x64xbf16, #tpu.memory_space<vmem>>, vector<1x1x16x64xbf16>
    %405 = vector.shape_cast %404 : vector<1x1x16x64xbf16> to vector<16x64xbf16>
    %cst_572 = arith.constant dense<0.000000e+00> : vector<32x64xf32>
    %406 = tpu.matmul %403, %405, %cst_572 {dimension_numbers = #tpu.dot_dimension_numbers<[1], [0], [0], [1], [0, 0, 1, 1], [], []>} : vector<32x16xbf16>, vector<16x64xbf16>, vector<32x64xf32> -> vector<32x64xf32>
    %407 = arith.addf %401, %406 : vector<32x64xf32>
    %c0_573 = arith.constant 0 : index
    %c6_574 = arith.constant 6 : index
    %c1_575 = arith.constant 1 : index
    %c0_576 = arith.constant 0 : index
    %408 = vector.load %arg4[%c0_573, %c6_574, %c1_575, %c0_576] : memref<1x8x34x16xbf16, #tpu.memory_space<vmem>>, vector<1x1x32x16xbf16>
    %409 = vector.shape_cast %408 : vector<1x1x32x16xbf16> to vector<32x16xbf16>
    %c2_577 = arith.constant 2 : index
    %c1_578 = arith.constant 1 : index
    %c0_579 = arith.constant 0 : index
    %c0_580 = arith.constant 0 : index
    %410 = vector.load %arg5[%c2_577, %c1_578, %c0_579, %c0_580] : memref<3x3x16x64xbf16, #tpu.memory_space<vmem>>, vector<1x1x16x64xbf16>
    %411 = vector.shape_cast %410 : vector<1x1x16x64xbf16> to vector<16x64xbf16>
    %cst_581 = arith.constant dense<0.000000e+00> : vector<32x64xf32>
    %412 = tpu.matmul %409, %411, %cst_581 {dimension_numbers = #tpu.dot_dimension_numbers<[1], [0], [0], [1], [0, 0, 1, 1], [], []>} : vector<32x16xbf16>, vector<16x64xbf16>, vector<32x64xf32> -> vector<32x64xf32>
    %413 = arith.addf %407, %412 : vector<32x64xf32>
    %c0_582 = arith.constant 0 : index
    %c6_583 = arith.constant 6 : index
    %c2_584 = arith.constant 2 : index
    %c0_585 = arith.constant 0 : index
    %414 = vector.load %arg4[%c0_582, %c6_583, %c2_584, %c0_585] : memref<1x8x34x16xbf16, #tpu.memory_space<vmem>>, vector<1x1x32x16xbf16>
    %415 = vector.shape_cast %414 : vector<1x1x32x16xbf16> to vector<32x16xbf16>
    %c2_586 = arith.constant 2 : index
    %c2_587 = arith.constant 2 : index
    %c0_588 = arith.constant 0 : index
    %c0_589 = arith.constant 0 : index
    %416 = vector.load %arg5[%c2_586, %c2_587, %c0_588, %c0_589] : memref<3x3x16x64xbf16, #tpu.memory_space<vmem>>, vector<1x1x16x64xbf16>
    %417 = vector.shape_cast %416 : vector<1x1x16x64xbf16> to vector<16x64xbf16>
    %cst_590 = arith.constant dense<0.000000e+00> : vector<32x64xf32>
    %418 = tpu.matmul %415, %417, %cst_590 {dimension_numbers = #tpu.dot_dimension_numbers<[1], [0], [0], [1], [0, 0, 1, 1], [], []>} : vector<32x16xbf16>, vector<16x64xbf16>, vector<32x64xf32> -> vector<32x64xf32>
    %419 = arith.addf %413, %418 : vector<32x64xf32>
    %420 = vector.broadcast %0 : vector<1x64xf32> to vector<32x64xf32>
    %421 = arith.addf %419, %420 : vector<32x64xf32>
    %cst_591 = arith.constant 0.000000e+00 : f32
    %422 = vector.broadcast %cst_591 : f32 to vector<32x64xf32>
    %423 = arith.maximumf %421, %422 : vector<32x64xf32>
    %424 = arith.truncf %423 : vector<32x64xf32> to vector<32x64xbf16>
    %c0_592 = arith.constant 0 : index
    %c6_593 = arith.constant 6 : index
    %c0_594 = arith.constant 0 : index
    %c0_595 = arith.constant 0 : index
    %425 = vector.load %arg7[%c0_592, %c6_593, %c0_594, %c0_595] : memref<1x8x32x64xbf16, #tpu.memory_space<vmem>>, vector<1x1x32x64xbf16>
    %426 = vector.shape_cast %425 : vector<1x1x32x64xbf16> to vector<32x64xbf16>
    %427 = vector.shape_cast %424 : vector<32x64xbf16> to vector<1x1x32x64xbf16>
    tpu.vector_store %arg7[%c0_592, %c6_593, %c0_594, %c0_595], %427 {strides = array<i32>} : memref<1x8x32x64xbf16, #tpu.memory_space<vmem>>, vector<1x1x32x64xbf16>,
    %c0_596 = arith.constant 0 : index
    %c7 = arith.constant 7 : index
    %c0_597 = arith.constant 0 : index
    %c0_598 = arith.constant 0 : index
    %428 = vector.load %arg2[%c0_596, %c7, %c0_597, %c0_598] : memref<1x8x34x16xbf16, #tpu.memory_space<vmem>>, vector<1x1x32x16xbf16>
    %429 = vector.shape_cast %428 : vector<1x1x32x16xbf16> to vector<32x16xbf16>
    %c0_599 = arith.constant 0 : index
    %c0_600 = arith.constant 0 : index
    %c0_601 = arith.constant 0 : index
    %c0_602 = arith.constant 0 : index
    %430 = vector.load %arg5[%c0_599, %c0_600, %c0_601, %c0_602] : memref<3x3x16x64xbf16, #tpu.memory_space<vmem>>, vector<1x1x16x64xbf16>
    %431 = vector.shape_cast %430 : vector<1x1x16x64xbf16> to vector<16x64xbf16>
    %cst_603 = arith.constant dense<0.000000e+00> : vector<32x64xf32>
    %432 = tpu.matmul %429, %431, %cst_603 {dimension_numbers = #tpu.dot_dimension_numbers<[1], [0], [0], [1], [0, 0, 1, 1], [], []>} : vector<32x16xbf16>, vector<16x64xbf16>, vector<32x64xf32> -> vector<32x64xf32>
    %c0_604 = arith.constant 0 : index
    %c7_605 = arith.constant 7 : index
    %c1_606 = arith.constant 1 : index
    %c0_607 = arith.constant 0 : index
    %433 = vector.load %arg2[%c0_604, %c7_605, %c1_606, %c0_607] : memref<1x8x34x16xbf16, #tpu.memory_space<vmem>>, vector<1x1x32x16xbf16>
    %434 = vector.shape_cast %433 : vector<1x1x32x16xbf16> to vector<32x16xbf16>
    %c0_608 = arith.constant 0 : index
    %c1_609 = arith.constant 1 : index
    %c0_610 = arith.constant 0 : index
    %c0_611 = arith.constant 0 : index
    %435 = vector.load %arg5[%c0_608, %c1_609, %c0_610, %c0_611] : memref<3x3x16x64xbf16, #tpu.memory_space<vmem>>, vector<1x1x16x64xbf16>
    %436 = vector.shape_cast %435 : vector<1x1x16x64xbf16> to vector<16x64xbf16>
    %cst_612 = arith.constant dense<0.000000e+00> : vector<32x64xf32>
    %437 = tpu.matmul %434, %436, %cst_612 {dimension_numbers = #tpu.dot_dimension_numbers<[1], [0], [0], [1], [0, 0, 1, 1], [], []>} : vector<32x16xbf16>, vector<16x64xbf16>, vector<32x64xf32> -> vector<32x64xf32>
    %438 = arith.addf %432, %437 : vector<32x64xf32>
    %c0_613 = arith.constant 0 : index
    %c7_614 = arith.constant 7 : index
    %c2_615 = arith.constant 2 : index
    %c0_616 = arith.constant 0 : index
    %439 = vector.load %arg2[%c0_613, %c7_614, %c2_615, %c0_616] : memref<1x8x34x16xbf16, #tpu.memory_space<vmem>>, vector<1x1x32x16xbf16>
    %440 = vector.shape_cast %439 : vector<1x1x32x16xbf16> to vector<32x16xbf16>
    %c0_617 = arith.constant 0 : index
    %c2_618 = arith.constant 2 : index
    %c0_619 = arith.constant 0 : index
    %c0_620 = arith.constant 0 : index
    %441 = vector.load %arg5[%c0_617, %c2_618, %c0_619, %c0_620] : memref<3x3x16x64xbf16, #tpu.memory_space<vmem>>, vector<1x1x16x64xbf16>
    %442 = vector.shape_cast %441 : vector<1x1x16x64xbf16> to vector<16x64xbf16>
    %cst_621 = arith.constant dense<0.000000e+00> : vector<32x64xf32>
    %443 = tpu.matmul %440, %442, %cst_621 {dimension_numbers = #tpu.dot_dimension_numbers<[1], [0], [0], [1], [0, 0, 1, 1], [], []>} : vector<32x16xbf16>, vector<16x64xbf16>, vector<32x64xf32> -> vector<32x64xf32>
    %444 = arith.addf %438, %443 : vector<32x64xf32>
    %c0_622 = arith.constant 0 : index
    %c7_623 = arith.constant 7 : index
    %c0_624 = arith.constant 0 : index
    %c0_625 = arith.constant 0 : index
    %445 = vector.load %arg3[%c0_622, %c7_623, %c0_624, %c0_625] : memref<1x8x34x16xbf16, #tpu.memory_space<vmem>>, vector<1x1x32x16xbf16>
    %446 = vector.shape_cast %445 : vector<1x1x32x16xbf16> to vector<32x16xbf16>
    %c1_626 = arith.constant 1 : index
    %c0_627 = arith.constant 0 : index
    %c0_628 = arith.constant 0 : index
    %c0_629 = arith.constant 0 : index
    %447 = vector.load %arg5[%c1_626, %c0_627, %c0_628, %c0_629] : memref<3x3x16x64xbf16, #tpu.memory_space<vmem>>, vector<1x1x16x64xbf16>
    %448 = vector.shape_cast %447 : vector<1x1x16x64xbf16> to vector<16x64xbf16>
    %cst_630 = arith.constant dense<0.000000e+00> : vector<32x64xf32>
    %449 = tpu.matmul %446, %448, %cst_630 {dimension_numbers = #tpu.dot_dimension_numbers<[1], [0], [0], [1], [0, 0, 1, 1], [], []>} : vector<32x16xbf16>, vector<16x64xbf16>, vector<32x64xf32> -> vector<32x64xf32>
    %450 = arith.addf %444, %449 : vector<32x64xf32>
    %c0_631 = arith.constant 0 : index
    %c7_632 = arith.constant 7 : index
    %c1_633 = arith.constant 1 : index
    %c0_634 = arith.constant 0 : index
    %451 = vector.load %arg3[%c0_631, %c7_632, %c1_633, %c0_634] : memref<1x8x34x16xbf16, #tpu.memory_space<vmem>>, vector<1x1x32x16xbf16>
    %452 = vector.shape_cast %451 : vector<1x1x32x16xbf16> to vector<32x16xbf16>
    %c1_635 = arith.constant 1 : index
    %c1_636 = arith.constant 1 : index
    %c0_637 = arith.constant 0 : index
    %c0_638 = arith.constant 0 : index
    %453 = vector.load %arg5[%c1_635, %c1_636, %c0_637, %c0_638] : memref<3x3x16x64xbf16, #tpu.memory_space<vmem>>, vector<1x1x16x64xbf16>
    %454 = vector.shape_cast %453 : vector<1x1x16x64xbf16> to vector<16x64xbf16>
    %cst_639 = arith.constant dense<0.000000e+00> : vector<32x64xf32>
    %455 = tpu.matmul %452, %454, %cst_639 {dimension_numbers = #tpu.dot_dimension_numbers<[1], [0], [0], [1], [0, 0, 1, 1], [], []>} : vector<32x16xbf16>, vector<16x64xbf16>, vector<32x64xf32> -> vector<32x64xf32>
    %456 = arith.addf %450, %455 : vector<32x64xf32>
    %c0_640 = arith.constant 0 : index
    %c7_641 = arith.constant 7 : index
    %c2_642 = arith.constant 2 : index
    %c0_643 = arith.constant 0 : index
    %457 = vector.load %arg3[%c0_640, %c7_641, %c2_642, %c0_643] : memref<1x8x34x16xbf16, #tpu.memory_space<vmem>>, vector<1x1x32x16xbf16>
    %458 = vector.shape_cast %457 : vector<1x1x32x16xbf16> to vector<32x16xbf16>
    %c1_644 = arith.constant 1 : index
    %c2_645 = arith.constant 2 : index
    %c0_646 = arith.constant 0 : index
    %c0_647 = arith.constant 0 : index
    %459 = vector.load %arg5[%c1_644, %c2_645, %c0_646, %c0_647] : memref<3x3x16x64xbf16, #tpu.memory_space<vmem>>, vector<1x1x16x64xbf16>
    %460 = vector.shape_cast %459 : vector<1x1x16x64xbf16> to vector<16x64xbf16>
    %cst_648 = arith.constant dense<0.000000e+00> : vector<32x64xf32>
    %461 = tpu.matmul %458, %460, %cst_648 {dimension_numbers = #tpu.dot_dimension_numbers<[1], [0], [0], [1], [0, 0, 1, 1], [], []>} : vector<32x16xbf16>, vector<16x64xbf16>, vector<32x64xf32> -> vector<32x64xf32>
    %462 = arith.addf %456, %461 : vector<32x64xf32>
    %c0_649 = arith.constant 0 : index
    %c7_650 = arith.constant 7 : index
    %c0_651 = arith.constant 0 : index
    %c0_652 = arith.constant 0 : index
    %463 = vector.load %arg4[%c0_649, %c7_650, %c0_651, %c0_652] : memref<1x8x34x16xbf16, #tpu.memory_space<vmem>>, vector<1x1x32x16xbf16>
    %464 = vector.shape_cast %463 : vector<1x1x32x16xbf16> to vector<32x16xbf16>
    %c2_653 = arith.constant 2 : index
    %c0_654 = arith.constant 0 : index
    %c0_655 = arith.constant 0 : index
    %c0_656 = arith.constant 0 : index
    %465 = vector.load %arg5[%c2_653, %c0_654, %c0_655, %c0_656] : memref<3x3x16x64xbf16, #tpu.memory_space<vmem>>, vector<1x1x16x64xbf16>
    %466 = vector.shape_cast %465 : vector<1x1x16x64xbf16> to vector<16x64xbf16>
    %cst_657 = arith.constant dense<0.000000e+00> : vector<32x64xf32>
    %467 = tpu.matmul %464, %466, %cst_657 {dimension_numbers = #tpu.dot_dimension_numbers<[1], [0], [0], [1], [0, 0, 1, 1], [], []>} : vector<32x16xbf16>, vector<16x64xbf16>, vector<32x64xf32> -> vector<32x64xf32>
    %468 = arith.addf %462, %467 : vector<32x64xf32>
    %c0_658 = arith.constant 0 : index
    %c7_659 = arith.constant 7 : index
    %c1_660 = arith.constant 1 : index
    %c0_661 = arith.constant 0 : index
    %469 = vector.load %arg4[%c0_658, %c7_659, %c1_660, %c0_661] : memref<1x8x34x16xbf16, #tpu.memory_space<vmem>>, vector<1x1x32x16xbf16>
    %470 = vector.shape_cast %469 : vector<1x1x32x16xbf16> to vector<32x16xbf16>
    %c2_662 = arith.constant 2 : index
    %c1_663 = arith.constant 1 : index
    %c0_664 = arith.constant 0 : index
    %c0_665 = arith.constant 0 : index
    %471 = vector.load %arg5[%c2_662, %c1_663, %c0_664, %c0_665] : memref<3x3x16x64xbf16, #tpu.memory_space<vmem>>, vector<1x1x16x64xbf16>
    %472 = vector.shape_cast %471 : vector<1x1x16x64xbf16> to vector<16x64xbf16>
    %cst_666 = arith.constant dense<0.000000e+00> : vector<32x64xf32>
    %473 = tpu.matmul %470, %472, %cst_666 {dimension_numbers = #tpu.dot_dimension_numbers<[1], [0], [0], [1], [0, 0, 1, 1], [], []>} : vector<32x16xbf16>, vector<16x64xbf16>, vector<32x64xf32> -> vector<32x64xf32>
    %474 = arith.addf %468, %473 : vector<32x64xf32>
    %c0_667 = arith.constant 0 : index
    %c7_668 = arith.constant 7 : index
    %c2_669 = arith.constant 2 : index
    %c0_670 = arith.constant 0 : index
    %475 = vector.load %arg4[%c0_667, %c7_668, %c2_669, %c0_670] : memref<1x8x34x16xbf16, #tpu.memory_space<vmem>>, vector<1x1x32x16xbf16>
    %476 = vector.shape_cast %475 : vector<1x1x32x16xbf16> to vector<32x16xbf16>
    %c2_671 = arith.constant 2 : index
    %c2_672 = arith.constant 2 : index
    %c0_673 = arith.constant 0 : index
    %c0_674 = arith.constant 0 : index
    %477 = vector.load %arg5[%c2_671, %c2_672, %c0_673, %c0_674] : memref<3x3x16x64xbf16, #tpu.memory_space<vmem>>, vector<1x1x16x64xbf16>
    %478 = vector.shape_cast %477 : vector<1x1x16x64xbf16> to vector<16x64xbf16>
    %cst_675 = arith.constant dense<0.000000e+00> : vector<32x64xf32>
    %479 = tpu.matmul %476, %478, %cst_675 {dimension_numbers = #tpu.dot_dimension_numbers<[1], [0], [0], [1], [0, 0, 1, 1], [], []>} : vector<32x16xbf16>, vector<16x64xbf16>, vector<32x64xf32> -> vector<32x64xf32>
    %480 = arith.addf %474, %479 : vector<32x64xf32>
    %481 = vector.broadcast %0 : vector<1x64xf32> to vector<32x64xf32>
    %482 = arith.addf %480, %481 : vector<32x64xf32>
    %cst_676 = arith.constant 0.000000e+00 : f32
    %483 = vector.broadcast %cst_676 : f32 to vector<32x64xf32>
    %484 = arith.maximumf %482, %483 : vector<32x64xf32>
    %485 = arith.truncf %484 : vector<32x64xf32> to vector<32x64xbf16>
    %c0_677 = arith.constant 0 : index
    %c7_678 = arith.constant 7 : index
    %c0_679 = arith.constant 0 : index
    %c0_680 = arith.constant 0 : index
    %486 = vector.load %arg7[%c0_677, %c7_678, %c0_679, %c0_680] : memref<1x8x32x64xbf16, #tpu.memory_space<vmem>>, vector<1x1x32x64xbf16>
    %487 = vector.shape_cast %486 : vector<1x1x32x64xbf16> to vector<32x64xbf16>
    %488 = vector.shape_cast %485 : vector<32x64xbf16> to vector<1x1x32x64xbf16>
    tpu.vector_store %arg7[%c0_677, %c7_678, %c0_679, %c0_680], %488 {strides = array<i32>} : memref<1x8x32x64xbf16, #tpu.memory_space<vmem>>, vector<1x1x32x64xbf16>,
    return
  }
  func.func @transform_0(%arg0: i32, %arg1: i32) -> (i32, i32, i32, i32) {
    %c0_i32 = arith.constant 0 : i32
    %c0_i32_0 = arith.constant 0 : i32
    %c0_i32_1 = arith.constant 0 : i32
    return %arg0, %arg1, %c0_i32, %c0_i32_0 : i32, i32, i32, i32
  }
  func.func @transform_1(%arg0: i32, %arg1: i32) -> (i32, i32, i32, i32) {
    %c0_i32 = arith.constant 0 : i32
    %c0_i32_0 = arith.constant 0 : i32
    %c0_i32_1 = arith.constant 0 : i32
    return %arg0, %arg1, %c0_i32, %c0_i32_0 : i32, i32, i32, i32
  }
  func.func @transform_2(%arg0: i32, %arg1: i32) -> (i32, i32, i32, i32) {
    %c0_i32 = arith.constant 0 : i32
    %c0_i32_0 = arith.constant 0 : i32
    %c0_i32_1 = arith.constant 0 : i32
    return %arg0, %arg1, %c0_i32, %c0_i32_0 : i32, i32, i32, i32
  }
  func.func @transform_3(%arg0: i32, %arg1: i32) -> (i32, i32, i32, i32) {
    %c0_i32 = arith.constant 0 : i32
    %c0_i32_0 = arith.constant 0 : i32
    %c0_i32_1 = arith.constant 0 : i32
    %c0_i32_2 = arith.constant 0 : i32
    %c0_i32_3 = arith.constant 0 : i32
    return %c0_i32, %c0_i32_0, %c0_i32_1, %c0_i32_2 : i32, i32, i32, i32
  }
  func.func @transform_4(%arg0: i32, %arg1: i32) -> (i32, i32) {
    %c0_i32 = arith.constant 0 : i32
    %c0_i32_0 = arith.constant 0 : i32
    %c0_i32_1 = arith.constant 0 : i32
    return %c0_i32, %c0_i32_0 : i32, i32
  }
  func.func @transform_5(%arg0: i32, %arg1: i32) -> (i32, i32, i32, i32) {
    %c0_i32 = arith.constant 0 : i32
    %c0_i32_0 = arith.constant 0 : i32
    %c0_i32_1 = arith.constant 0 : i32
    return %arg0, %arg1, %c0_i32, %c0_i32_0 : i32, i32, i32, i32
  }
}

</mosaic_0001>

<llo_original>
// kernel: tpu_custom_call.1
$region0: #{tpu_custom_call.1}
  #allocation0 [shape = 'u32[]', space=smem, size = 0x4, offset = 0x4, fixed_abs, tag = 'smem constant byte address 0x4 - core index']
  #allocation1 [shape = 'u32[72,128]{1,0:T(1,128)}', space=vmem, size = 0x9000, scoped, tag = 'internal scratch']
  %s0 = inlined_call_operand.vmem [shape: bf16[2,32,34,16], index: 0, kind: input, shape index: {}]
  %s1 = inlined_call_operand.vmem [shape: bf16[2,32,34,16], index: 1, kind: input, shape index: {}]
  %s2 = inlined_call_operand.vmem [shape: bf16[2,32,34,16], index: 2, kind: input, shape index: {}]
  %s3 = inlined_call_operand.vmem [shape: bf16[3,3,16,64], index: 3, kind: input, shape index: {}]
  %s4 = inlined_call_operand.vmem [shape: f32[1,64], index: 4, kind: input, shape index: {}]
  %s5 = inlined_call_operand.hbm [shape: bf16[2,32,32,64], index: 5, kind: output, shape index: {}]
  %s6 = sld [smem:[#allocation0]]
  $region53: #{tpu_custom_call.1} parent=0
    _
  %s8 = ssub.s32 1, %s6
  %s9 = scalar_select 0, %s8, %s6
  $region1: #{tpu_custom_call.1} parent=0
    #allocation2 [shape = 'u8[131072]{0}', space=vmem, size = 0x20000, scoped, tag = 'output window, operand 0']
    #allocation3 [shape = 's32[2]{0}', space=sflag, size = 0x8, scoped, tag = 'scoped memory for tpu_custom_call.1']
    %10 = vsyncpa [#allocation3], 0
    %s11 = scalar_lea.sflag [#allocation3], 1
    %12 = vsyncpa %s11, 0
    loop: start=0, step=1, limit=10
    $region2: #{tpu_custom_call.1} parent=1 // loop_pre_header
      _
    $region3: #{tpu_custom_call.1} parent=1 // loop_header
      %s14 = sphi 0, %s18
      %p15 = scmp.ge.s32.totalorder %s14, 10
      %s21 = sphi 0, %s33
      %s22 = sphi 0, %s29
      %s23 = sphi 0, %s21
      %s24 = sphi 0, %s22
      %s25 = sphi 0, %s23
      %s26 = sphi 0, %s24
      %s38 = sphi 0, %s40
      %s41 = sphi 0, %s38
      %s42 = sphi 0, %s41
      %s58 = sphi 0, %s42
      %s66 = sphi 0, %s68
      %s69 = sphi 0, %s66
      %s70 = sphi 0, %s69
      %s86 = sphi 0, %s70
      %s94 = sphi 0, %s96
      %s97 = sphi 0, %s94
      %s98 = sphi 0, %s97
      %s114 = sphi 0, %s98
      %s118 = sphi 0, %s118
      %s120 = sphi 0, %s118
      %s121 = sphi 0, %s120
      %s135 = sphi 0, %s121
      %s139 = sphi 0, %s139
      %s141 = sphi 0, %s139
      %s142 = sphi 0, %s141
      %s156 = sphi 0, %s142
      %s164 = sphi 0, %s166
      %s167 = sphi 0, %s164
      %s168 = sphi 0, %s167
      %s184 = sphi 0, %s168
    $region4: #{tpu_custom_call.1} parent=1 // loop_header_branch
      %17 = sbr.rel (%p15) target = $region8
    $region5: #{tpu_custom_call.1} parent=1 // loop_body
      %s19 = ssub.s32 %s14, 1
      %s20 = ssub.s32 %s14, 2
      %s27 = sadd.s32 1, %s22
      %p28 = scmp.ge.s32.totalorder %s27, 4
      %s29 = scalar_select %p28, 0, %s27
      %s30 = sadd.s32 1, %s21
      %s31 = scalar_select %p28, %s30, %s21
      %p32 = scmp.ge.s32.totalorder %s31, 2
      %s33 = scalar_select %p32, 0, %s31
      %s34 = ssub.s32 %s21, %s33
      %s35 = ssub.s32 %s22, %s29
      %s36 = sor.u32 %s34, %s35
      %p37 = scmp.eq.s32.totalorder %s36, 0
      %s39 = sadd.s32 %s38, 1
      %s40 = scalar_select %p37, %s38, %s39
      %p43 = pneg %p37
      %p44 = scmp.eq.s32.totalorder %s14, 7
      %p45 = por %p43, %p44
      %p46 = scmp.ne.s32.totalorder %s38, %s41
      %p47 = scmp.eq.s32.totalorder %s14, 0
      %p48 = por %p46, %p47
      %p49 = scmp.ne.s32.totalorder %s38, %s41
      %p50 = scmp.eq.s32.totalorder %s19, 7
      %p51 = por %p49, %p50
      %p52 = scmp.ne.s32.totalorder %s41, %s42
      %p53 = scmp.eq.s32.totalorder %s19, 0
      %p54 = por %p52, %p53
      %p55 = scmp.ne.s32.totalorder %s41, %s42
      %p56 = scmp.eq.s32.totalorder %s20, 7
      %p57 = por %p55, %p56
      %p59 = scmp.ne.s32.totalorder %s42, %s58
      %p60 = scmp.eq.s32.totalorder %s20, 0
      %p61 = por %p59, %p60
      %s62 = ssub.s32 %s21, %s33
      %s63 = ssub.s32 %s22, %s29
      %s64 = sor.u32 %s62, %s63
      %p65 = scmp.eq.s32.totalorder %s64, 0
      %s67 = sadd.s32 %s66, 1
      %s68 = scalar_select %p65, %s66, %s67
      %p71 = pneg %p65
      %p72 = scmp.eq.s32.totalorder %s14, 7
      %p73 = por %p71, %p72
      %p74 = scmp.ne.s32.totalorder %s66, %s69
      %p75 = scmp.eq.s32.totalorder %s14, 0
      %p76 = por %p74, %p75
      %p77 = scmp.ne.s32.totalorder %s66, %s69
      %p78 = scmp.eq.s32.totalorder %s19, 7
      %p79 = por %p77, %p78
      %p80 = scmp.ne.s32.totalorder %s69, %s70
      %p81 = scmp.eq.s32.totalorder %s19, 0
      %p82 = por %p80, %p81
      %p83 = scmp.ne.s32.totalorder %s69, %s70
      %p84 = scmp.eq.s32.totalorder %s20, 7
      %p85 = por %p83, %p84
      %p87 = scmp.ne.s32.totalorder %s70, %s86
      %p88 = scmp.eq.s32.totalorder %s20, 0
      %p89 = por %p87, %p88
      %s90 = ssub.s32 %s21, %s33
      %s91 = ssub.s32 %s22, %s29
      %s92 = sor.u32 %s90, %s91
      %p93 = scmp.eq.s32.totalorder %s92, 0
      %s95 = sadd.s32 %s94, 1
      %s96 = scalar_select %p93, %s94, %s95
      %p99 = pneg %p93
      %p100 = scmp.eq.s32.totalorder %s14, 7
      %p101 = por %p99, %p100
      %p102 = scmp.ne.s32.totalorder %s94, %s97
      %p103 = scmp.eq.s32.totalorder %s14, 0
      %p104 = por %p102, %p103
      %p105 = scmp.ne.s32.totalorder %s94, %s97
      %p106 = scmp.eq.s32.totalorder %s19, 7
      %p107 = por %p105, %p106
      %p108 = scmp.ne.s32.totalorder %s97, %s98
      %p109 = scmp.eq.s32.totalorder %s19, 0
      %p110 = por %p108, %p109
      %p111 = scmp.ne.s32.totalorder %s97, %s98
      %p112 = scmp.eq.s32.totalorder %s20, 7
      %p113 = por %p111, %p112
      %p115 = scmp.ne.s32.totalorder %s98, %s114
      %p116 = scmp.eq.s32.totalorder %s20, 0
      %p117 = por %p115, %p116
      %s119 = sadd.s32 %s118, 1
      %p122 = scmp.eq.s32.totalorder %s14, 7
      %p123 = scmp.ne.s32.totalorder %s118, %s120
      %p124 = scmp.eq.s32.totalorder %s14, 0
      %p125 = por %p123, %p124
      %p126 = scmp.ne.s32.totalorder %s118, %s120
      %p127 = scmp.eq.s32.totalorder %s19, 7
      %p128 = por %p126, %p127
      %p129 = scmp.ne.s32.totalorder %s120, %s121
      %p130 = scmp.eq.s32.totalorder %s19, 0
      %p131 = por %p129, %p130
      %p132 = scmp.ne.s32.totalorder %s120, %s121
      %p133 = scmp.eq.s32.totalorder %s20, 7
      %p134 = por %p132, %p133
      %p136 = scmp.ne.s32.totalorder %s121, %s135
      %p137 = scmp.eq.s32.totalorder %s20, 0
      %p138 = por %p136, %p137
      %s140 = sadd.s32 %s139, 1
      %p143 = scmp.eq.s32.totalorder %s14, 7
      %p144 = scmp.ne.s32.totalorder %s139, %s141
      %p145 = scmp.eq.s32.totalorder %s14, 0
      %p146 = por %p144, %p145
      %p147 = scmp.ne.s32.totalorder %s139, %s141
      %p148 = scmp.eq.s32.totalorder %s19, 7
      %p149 = por %p147, %p148
      %p150 = scmp.ne.s32.totalorder %s141, %s142
      %p151 = scmp.eq.s32.totalorder %s19, 0
      %p152 = por %p150, %p151
      %p153 = scmp.ne.s32.totalorder %s141, %s142
      %p154 = scmp.eq.s32.totalorder %s20, 7
      %p155 = por %p153, %p154
      %p157 = scmp.ne.s32.totalorder %s142, %s156
      %p158 = scmp.eq.s32.totalorder %s20, 0
      %p159 = por %p157, %p158
      %s160 = ssub.s32 %s21, %s33
      %s161 = ssub.s32 %s22, %s29
      %s162 = sor.u32 %s160, %s161
      %p163 = scmp.eq.s32.totalorder %s162, 0
      %s165 = sadd.s32 %s164, 1
      %s166 = scalar_select %p163, %s164, %s165
      %p169 = pneg %p163
      %p170 = scmp.eq.s32.totalorder %s14, 7
      %p171 = por %p169, %p170
      %p172 = scmp.ne.s32.totalorder %s164, %s167
      %p173 = scmp.eq.s32.totalorder %s14, 0
      %p174 = por %p172, %p173
      %p175 = scmp.ne.s32.totalorder %s164, %s167
      %p176 = scmp.eq.s32.totalorder %s19, 7
      %p177 = por %p175, %p176
      %p178 = scmp.ne.s32.totalorder %s167, %s168
      %p179 = scmp.eq.s32.totalorder %s19, 0
      %p180 = por %p178, %p179
      %p181 = scmp.ne.s32.totalorder %s167, %s168
      %p182 = scmp.eq.s32.totalorder %s20, 7
      %p183 = por %p181, %p182
      %p185 = scmp.ne.s32.totalorder %s168, %s184
      %p186 = scmp.eq.s32.totalorder %s20, 0
      %p187 = por %p185, %p186
      %p188 = scmp.le.s32.totalorder 1, %s14
      %p189 = scmp.lt.s32.totalorder %s14, 9
      %p190 = pnand %p188, %p189
      %p191 = pneg %p190
      // Predicated region
      $region9: #{tpu_custom_call.1} parent=5 // pred_check
        _
      $region10: #{tpu_custom_call.1} parent=5 // pred_check_branch
        %193 = sbr.rel (%p190) target = $region12
      $region11: #{tpu_custom_call.1} parent=5 // pred_region
        %s194 = ssub.s32 %s14, 1
        // Predicated region
        $region13: #{tpu_custom_call.1} parent=11 // pred_check
          %p195 = pneg %p131
        $region14: #{tpu_custom_call.1} parent=11 // pred_check_branch
          %197 = sbr.rel (%p195) target = $region16
        $region15: #{tpu_custom_call.1} parent=11 // pred_region
          _
        $region16: #{tpu_custom_call.1} parent=11 // pred_fallthru
          _
        // Predicated region
        $region17: #{tpu_custom_call.1} parent=11 // pred_check
          %p198 = pneg %p152
        $region18: #{tpu_custom_call.1} parent=11 // pred_check_branch
          %200 = sbr.rel (%p198) target = $region20
        $region19: #{tpu_custom_call.1} parent=11 // pred_region
          _
        $region20: #{tpu_custom_call.1} parent=11 // pred_fallthru
          _
      $region12: #{tpu_custom_call.1} parent=5 // pred_fallthru
        _
      %p201 = scmp.lt.s32.totalorder %s14, 8
      // Predicated region
      $region21: #{tpu_custom_call.1} parent=5 // pred_check
        %p202 = pneg %p201
      $region22: #{tpu_custom_call.1} parent=5 // pred_check_branch
        %204 = sbr.rel (%p202) target = $region24
      $region23: #{tpu_custom_call.1} parent=5 // pred_region
        // Predicated region
        $region25: #{tpu_custom_call.1} parent=23 // pred_check
          %p205 = pneg %p48
        $region26: #{tpu_custom_call.1} parent=23 // pred_check_branch
          %207 = sbr.rel (%p205) target = $region28
        $region27: #{tpu_custom_call.1} parent=23 // pred_region
          %s208 = smul.u32 8, %s22
          %p209 = scmp.lt.s32.totalorder %s21, 1
          %s210 = scalar_select %p209, %s21, 1
          %p211 = scmp.lt.s32.totalorder %s208, 31
          %s212 = scalar_select %p211, %s208, 31
          %s213 = smul.addr %s212, 5
          %s214 = smul.addr %s210, 160
          %s215 = sadd.s32 %s213, %s214
          %s216 = smul.addr %s215, 4
          %s217 = scalar_lea.vmem %s0, %s216
          %s218 = smul.u32 8, %s22
        $region28: #{tpu_custom_call.1} parent=23 // pred_fallthru
          _
        // Predicated region
        $region29: #{tpu_custom_call.1} parent=23 // pred_check
          %p219 = pneg %p76
        $region30: #{tpu_custom_call.1} parent=23 // pred_check_branch
          %221 = sbr.rel (%p219) target = $region32
        $region31: #{tpu_custom_call.1} parent=23 // pred_region
          %s222 = smul.u32 8, %s22
          %p223 = scmp.lt.s32.totalorder %s21, 1
          %s224 = scalar_select %p223, %s21, 1
          %p225 = scmp.lt.s32.totalorder %s222, 31
          %s226 = scalar_select %p225, %s222, 31
          %s227 = smul.addr %s226, 5
          %s228 = smul.addr %s224, 160
          %s229 = sadd.s32 %s227, %s228
          %s230 = smul.addr %s229, 4
          %s231 = scalar_lea.vmem %s1, %s230
          %s232 = smul.u32 8, %s22
        $region32: #{tpu_custom_call.1} parent=23 // pred_fallthru
          _
        // Predicated region
        $region33: #{tpu_custom_call.1} parent=23 // pred_check
          %p233 = pneg %p104
        $region34: #{tpu_custom_call.1} parent=23 // pred_check_branch
          %235 = sbr.rel (%p233) target = $region36
        $region35: #{tpu_custom_call.1} parent=23 // pred_region
          %s236 = smul.u32 8, %s22
          %p237 = scmp.lt.s32.totalorder %s21, 1
          %s238 = scalar_select %p237, %s21, 1
          %p239 = scmp.lt.s32.totalorder %s236, 31
          %s240 = scalar_select %p239, %s236, 31
          %s241 = smul.addr %s240, 5
          %s242 = smul.addr %s238, 160
          %s243 = sadd.s32 %s241, %s242
          %s244 = smul.addr %s243, 4
          %s245 = scalar_lea.vmem %s2, %s244
          %s246 = smul.u32 8, %s22
        $region36: #{tpu_custom_call.1} parent=23 // pred_fallthru
          _
      $region24: #{tpu_custom_call.1} parent=5 // pred_fallthru
        _
      %p247 = scmp.le.s32.totalorder 1, %s14
      %p248 = scmp.lt.s32.totalorder %s14, 9
      %p249 = pnand %p247, %p248
      %p250 = pneg %p249
      // Predicated region
      $region37: #{tpu_custom_call.1} parent=5 // pred_check
        _
      $region38: #{tpu_custom_call.1} parent=5 // pred_check_branch
        %252 = sbr.rel (%p249) target = $region40
      $region39: #{tpu_custom_call.1} parent=5 // pred_region
        %s253 = ssub.s32 %s14, 1
        %s254 = smul.u32 8, %s24
        %p255 = scmp.lt.s32.totalorder %s23, 1
        %s256 = scalar_select %p255, %s23, 1
        %p257 = scmp.lt.s32.totalorder %s254, 31
        %s258 = scalar_select %p257, %s254, 31
        %s259 = smul.addr %s258, 5
        %s260 = smul.addr %s256, 160
        %s261 = sadd.s32 %s259, %s260
        %s262 = smul.addr %s261, 4
        %s263 = scalar_lea.vmem %s0, %s262
        %p264 = pneg %p54
        %p265 = pneg %p51
        %s266 = smul.u32 8, %s24
        %p267 = scmp.lt.s32.totalorder %s23, 1
        %s268 = scalar_select %p267, %s23, 1
        %p269 = scmp.lt.s32.totalorder %s266, 31
        %s270 = scalar_select %p269, %s266, 31
        %s271 = smul.addr %s270, 5
        %s272 = smul.addr %s268, 160
        %s273 = sadd.s32 %s271, %s272
        %s274 = smul.addr %s273, 4
        %s275 = scalar_lea.vmem %s1, %s274
        %p276 = pneg %p82
        %p277 = pneg %p79
        %s278 = smul.u32 8, %s24
        %p279 = scmp.lt.s32.totalorder %s23, 1
        %s280 = scalar_select %p279, %s23, 1
        %p281 = scmp.lt.s32.totalorder %s278, 31
        %s282 = scalar_select %p281, %s278, 31
        %s283 = smul.addr %s282, 5
        %s284 = smul.addr %s280, 160
        %s285 = sadd.s32 %s283, %s284
        %s286 = smul.addr %s285, 4
        %s287 = scalar_lea.vmem %s2, %s286
        %p288 = pneg %p110
        %p289 = pneg %p107
        %p290 = pneg %p131
        %p291 = pneg %p128
        %p292 = pneg %p152
        %p293 = pneg %p149
        %p294 = pneg %p180
        %p295 = pneg %p177
        %s296 = sand.u32 %s167, 1
        %s297 = scalar_lea.sflag [#allocation3], %s296
        %s298 = sand.u32 %s167, 1
        %s299 = smul.addr %s298, 128
        %s300 = scalar_lea.vmem [#allocation2], %s299
        %s301 = smul.u32 8, %s24
        %p302 = scmp.lt.s32.totalorder %s23, 1
        %s303 = scalar_select %p302, %s23, 1
        %p304 = scmp.lt.s32.totalorder %s301, 31
        %s305 = scalar_select %p304, %s301, 31
        %s306 = smul.addr %s305, 5
        %s307 = smul.addr %s303, 160
        %s308 = sadd.s32 %s306, %s307
        %s309 = smul.addr %s308, 4
        %s310 = scalar_lea.vmem %s0, %s309
        %s311 = smul.u32 8, %s24
        %s312 = smul.u32 8, %s24
        %p313 = scmp.lt.s32.totalorder %s23, 1
        %s314 = scalar_select %p313, %s23, 1
        %p315 = scmp.lt.s32.totalorder %s312, 31
        %s316 = scalar_select %p315, %s312, 31
        %s317 = smul.addr %s316, 5
        %s318 = smul.addr %s314, 160
        %s319 = sadd.s32 %s317, %s318
        %s320 = smul.addr %s319, 4
        %s321 = scalar_lea.vmem %s1, %s320
        %s322 = smul.u32 8, %s24
        %s323 = smul.u32 8, %s24
        %p324 = scmp.lt.s32.totalorder %s23, 1
        %s325 = scalar_select %p324, %s23, 1
        %p326 = scmp.lt.s32.totalorder %s323, 31
        %s327 = scalar_select %p326, %s323, 31
        %s328 = smul.addr %s327, 5
        %s329 = smul.addr %s325, 160
        %s330 = sadd.s32 %s328, %s329
        %s331 = smul.addr %s330, 4
        %s332 = scalar_lea.vmem %s2, %s331
        %s333 = smul.u32 8, %s24
        %s334 = smul.u32 8, %s24
        %v336 = vld [vmem:[%s4] sm:$0x1]
        %v337 = vld [vmem:[%s310] sm:$0xf]
        %v338 = vld [vmem:[%s310 + $0x4] sm:$0xf]
        %v339 = vld [vmem:[%s310 + $0x8] sm:$0xf]
        %v340 = vld [vmem:[%s310 + $0xc] sm:$0xf]
        %v341 = vld [vmem:[%s3] sm:$0xf]
        %v342 = vld [vmem:[%s3 + $0x4] sm:$0xf]
        %v343 = vld [vmem:[%s310 + $0x10] sm:$0x1]
        %s344 = scalar_lea.vmem %s3, 8
        %v345 = vld [vmem:[%s344] sm:$0xf]
        %v346 = vld [vmem:[%s344 + $0x4] sm:$0xf]
        %v352 = vunpack.c.l.b16 %v337
        %v353 = vunpack.c.l.b16 %v338
        %v354 = vunpack.c.l.b16 %v339
        %v355 = vunpack.c.l.b16 %v340
        %v356 = vunpack.c.l.b16 %v343
        %v357 = vpack.c.b16 %v353, %v352
        %v358 = vpack.c.b16 %v355, %v354
        %v359 = vpack.c.b16 %v356, %v356
        %vm360 = vsmask.f32 7424
        %v362 = vshrl.u32 %v357, 16
        %v364 = vshll.u32 %v357, 16
        %v366 = vrot.slane %v364, 1
        %v367 = vor.u32 %v362, %v366
        %v369 = vshll.u32 %v358, 16
        %v371 = vrot.slane %v369, 1
        %v372 = vsel %vm360, %v367, %v371
        %v373 = vshrl.u32 %v358, 16
        %v375 = vor.u32 %v373, %v371
        %v377 = vshll.u32 %v359, 16
        %v379 = vrot.slane %v377, 1
        %v380 = vsel %vm360, %v375, %v379
        %v383 = vunpack.c.l.b16 %v345
        %v384 = vunpack.c.l.b16 %v346
        %v385 = vpack.c.b16 %v384, %v383
        %vm387 = vcmask 130048
        %v389 = vsel %vm387, %v372, 0
        %v392 = vsel %vm387, %v380, 0
        %394 = vmatpush.bf16.msra.mxu0 0
        %395 = vmatpush.bf16.msra.mxu0 0
        %396 = vmatpush.bf16.msra.mxu0 0
        %397 = vmatpush.bf16.msra.mxu0 0
        %398 = vmatpush.bf16.msra.mxu0 0
        %399 = vmatpush.bf16.msra.mxu0 0
        %400 = vmatpush.bf16.msra.mxu0 0
        %401 = vmatpush.bf16.msra.mxu0 %v385
        %402 = vmatmul.bf16.gmra.mxu0 %v389
        %v403 = vpop.f32.mrf.mxu0
        %v404 = vadd.f32 0.0, %v403
        %v405 = vpop.f32.mrf.mxu0
        %v406 = vadd.f32 0.0, %v405
        %407 = vmatmul.bf16.gmra.mxu0 %v392
        %v408 = vpop.f32.mrf.mxu0
        %v409 = vadd.f32 0.0, %v408
        %v410 = vpop.f32.mrf.mxu0
        %v411 = vadd.f32 0.0, %v410
        %412 = vdwg.mxu0
        %v415 = vunpack.c.l.b16 %v341
        %v416 = vunpack.c.l.b16 %v342
        %v417 = vpack.c.b16 %v416, %v415
        %v419 = vsel %vm387, %v357, 0
        %v421 = vsel %vm387, %v358, 0
        %423 = vmatpush.bf16.msra.mxu0 0
        %424 = vmatpush.bf16.msra.mxu0 0
        %425 = vmatpush.bf16.msra.mxu0 0
        %426 = vmatpush.bf16.msra.mxu0 0
        %427 = vmatpush.bf16.msra.mxu0 0
        %428 = vmatpush.bf16.msra.mxu0 0
        %429 = vmatpush.bf16.msra.mxu0 0
        %430 = vmatpush.bf16.msra.mxu0 %v417
        %431 = vmatmul.bf16.gmra.mxu0 %v419
        %v432 = vpop.f32.mrf.mxu0
        %v433 = vadd.f32 %v404, %v432
        %v434 = vpop.f32.mrf.mxu0
        %v435 = vadd.f32 %v406, %v434
        %436 = vmatmul.bf16.gmra.mxu0 %v421
        %v437 = vpop.f32.mrf.mxu0
        %v438 = vadd.f32 %v409, %v437
        %v439 = vpop.f32.mrf.mxu0
        %v440 = vadd.f32 %v411, %v439
        %441 = vdwg.mxu0
        %v442 = vld [vmem:[%s310] sm:$0xe]
        %s443 = scalar_lea.vmem %s3, 16
        %v444 = vld [vmem:[%s443] sm:$0xf]
        %v445 = vld [vmem:[%s443 + $0x4] sm:$0xf]
        %v447 = vunpack.c.l.b16 %v442
        %v448 = vpack.c.b16 %v353, %v447
        %vm449 = vcmask 1046528
        %v450 = vrot.slane %v448, 1
        %v451 = vrot.slane %v358, 1
        %v452 = vsel %vm449, %v450, %v451
        %v453 = vrot.slane %v359, 1
        %v454 = vsel %vm449, %v451, %v453
        %v457 = vunpack.c.l.b16 %v444
        %v458 = vunpack.c.l.b16 %v445
        %v459 = vpack.c.b16 %v458, %v457
        %v462 = vsel %vm387, %v452, 0
        %v465 = vsel %vm387, %v454, 0
        %467 = vmatpush.bf16.msra.mxu0 0
        %468 = vmatpush.bf16.msra.mxu0 0
        %469 = vmatpush.bf16.msra.mxu0 0
        %470 = vmatpush.bf16.msra.mxu0 0
        %471 = vmatpush.bf16.msra.mxu0 0
        %472 = vmatpush.bf16.msra.mxu0 0
        %473 = vmatpush.bf16.msra.mxu0 0
        %474 = vmatpush.bf16.msra.mxu0 %v459
        %475 = vmatmul.bf16.gmra.mxu0 %v462
        %v476 = vpop.f32.mrf.mxu0
        %v477 = vadd.f32 0.0, %v476
        %v478 = vpop.f32.mrf.mxu0
        %v479 = vadd.f32 0.0, %v478
        %480 = vmatmul.bf16.gmra.mxu0 %v465
        %v481 = vpop.f32.mrf.mxu0
        %v482 = vadd.f32 0.0, %v481
        %v483 = vpop.f32.mrf.mxu0
        %v484 = vadd.f32 0.0, %v483
        %485 = vdwg.mxu0
        %v486 = vadd.f32 %v433, %v477
        %v487 = vadd.f32 %v435, %v479
        %v488 = vadd.f32 %v438, %v482
        %v489 = vadd.f32 %v440, %v484
        %v490 = vld [vmem:[%s321] sm:$0xf]
        %v491 = vld [vmem:[%s321 + $0x4] sm:$0xf]
        %v492 = vld [vmem:[%s321 + $0x8] sm:$0xf]
        %v493 = vld [vmem:[%s321 + $0xc] sm:$0xf]
        %s494 = scalar_lea.vmem %s3, 24
        %v495 = vld [vmem:[%s494] sm:$0xf]
        %v496 = vld [vmem:[%s494 + $0x4] sm:$0xf]
        %v501 = vunpack.c.l.b16 %v490
        %v502 = vunpack.c.l.b16 %v491
        %v503 = vunpack.c.l.b16 %v492
        %v504 = vunpack.c.l.b16 %v493
        %v505 = vpack.c.b16 %v502, %v501
        %v506 = vpack.c.b16 %v504, %v503
        %v509 = vunpack.c.l.b16 %v495
        %v510 = vunpack.c.l.b16 %v496
        %v511 = vpack.c.b16 %v510, %v509
        %v514 = vsel %vm387, %v505, 0
        %v517 = vsel %vm387, %v506, 0
        %519 = vmatpush.bf16.msra.mxu0 0
        %520 = vmatpush.bf16.msra.mxu0 0
        %521 = vmatpush.bf16.msra.mxu0 0
        %522 = vmatpush.bf16.msra.mxu0 0
        %523 = vmatpush.bf16.msra.mxu0 0
        %524 = vmatpush.bf16.msra.mxu0 0
        %525 = vmatpush.bf16.msra.mxu0 0
        %526 = vmatpush.bf16.msra.mxu0 %v511
        %527 = vmatmul.bf16.gmra.mxu0 %v514
        %v528 = vpop.f32.mrf.mxu0
        %v529 = vadd.f32 0.0, %v528
        %v530 = vpop.f32.mrf.mxu0
        %v531 = vadd.f32 0.0, %v530
        %532 = vmatmul.bf16.gmra.mxu0 %v517
        %v533 = vpop.f32.mrf.mxu0
        %v534 = vadd.f32 0.0, %v533
        %v535 = vpop.f32.mrf.mxu0
        %v536 = vadd.f32 0.0, %v535
        %537 = vdwg.mxu0
        %v538 = vadd.f32 %v486, %v529
        %v539 = vadd.f32 %v487, %v531
        %v540 = vadd.f32 %v488, %v534
        %v541 = vadd.f32 %v489, %v536
        %v542 = vld [vmem:[%s321] sm:$0xf]
        %v543 = vld [vmem:[%s321 + $0x4] sm:$0xf]
        %v544 = vld [vmem:[%s321 + $0x8] sm:$0xf]
        %v545 = vld [vmem:[%s321 + $0xc] sm:$0xf]
        %v546 = vld [vmem:[%s321 + $0x10] sm:$0x1]
        %s547 = scalar_lea.vmem %s3, 32
        %v548 = vld [vmem:[%s547] sm:$0xf]
        %v549 = vld [vmem:[%s547 + $0x4] sm:$0xf]
        %v555 = vunpack.c.l.b16 %v542
        %v556 = vunpack.c.l.b16 %v543
        %v557 = vunpack.c.l.b16 %v544
        %v558 = vunpack.c.l.b16 %v545
        %v559 = vunpack.c.l.b16 %v546
        %v560 = vpack.c.b16 %v556, %v555
        %v561 = vpack.c.b16 %v558, %v557
        %v562 = vpack.c.b16 %v559, %v559
        %v564 = vshrl.u32 %v560, 16
        %v566 = vshll.u32 %v560, 16
        %v568 = vrot.slane %v566, 1
        %v569 = vor.u32 %v564, %v568
        %v571 = vshll.u32 %v561, 16
        %v573 = vrot.slane %v571, 1
        %v574 = vsel %vm360, %v569, %v573
        %v575 = vshrl.u32 %v561, 16
        %v577 = vor.u32 %v575, %v573
        %v579 = vshll.u32 %v562, 16
        %v581 = vrot.slane %v579, 1
        %v582 = vsel %vm360, %v577, %v581
        %v585 = vunpack.c.l.b16 %v548
        %v586 = vunpack.c.l.b16 %v549
        %v587 = vpack.c.b16 %v586, %v585
        %v590 = vsel %vm387, %v574, 0
        %v593 = vsel %vm387, %v582, 0
        %595 = vmatpush.bf16.msra.mxu0 0
        %596 = vmatpush.bf16.msra.mxu0 0
        %597 = vmatpush.bf16.msra.mxu0 0
        %598 = vmatpush.bf16.msra.mxu0 0
        %599 = vmatpush.bf16.msra.mxu0 0
        %600 = vmatpush.bf16.msra.mxu0 0
        %601 = vmatpush.bf16.msra.mxu0 0
        %602 = vmatpush.bf16.msra.mxu0 %v587
        %603 = vmatmul.bf16.gmra.mxu0 %v590
        %v604 = vpop.f32.mrf.mxu0
        %v605 = vadd.f32 0.0, %v604
        %v606 = vpop.f32.mrf.mxu0
        %v607 = vadd.f32 0.0, %v606
        %608 = vmatmul.bf16.gmra.mxu0 %v593
        %v609 = vpop.f32.mrf.mxu0
        %v610 = vadd.f32 0.0, %v609
        %v611 = vpop.f32.mrf.mxu0
        %v612 = vadd.f32 0.0, %v611
        %613 = vdwg.mxu0
        %v614 = vadd.f32 %v538, %v605
        %v615 = vadd.f32 %v539, %v607
        %v616 = vadd.f32 %v540, %v610
        %v617 = vadd.f32 %v541, %v612
        %v618 = vld [vmem:[%s321] sm:$0xe]
        %s619 = scalar_lea.vmem %s3, 40
        %v620 = vld [vmem:[%s619] sm:$0xf]
        %v621 = vld [vmem:[%s619 + $0x4] sm:$0xf]
        %v623 = vunpack.c.l.b16 %v618
        %v624 = vpack.c.b16 %v556, %v623
        %v625 = vrot.slane %v624, 1
        %v626 = vrot.slane %v561, 1
        %v627 = vsel %vm449, %v625, %v626
        %v628 = vrot.slane %v562, 1
        %v629 = vsel %vm449, %v626, %v628
        %v632 = vunpack.c.l.b16 %v620
        %v633 = vunpack.c.l.b16 %v621
        %v634 = vpack.c.b16 %v633, %v632
        %v637 = vsel %vm387, %v627, 0
        %v640 = vsel %vm387, %v629, 0
        %642 = vmatpush.bf16.msra.mxu0 0
        %643 = vmatpush.bf16.msra.mxu0 0
        %644 = vmatpush.bf16.msra.mxu0 0
        %645 = vmatpush.bf16.msra.mxu0 0
        %646 = vmatpush.bf16.msra.mxu0 0
        %647 = vmatpush.bf16.msra.mxu0 0
        %648 = vmatpush.bf16.msra.mxu0 0
        %649 = vmatpush.bf16.msra.mxu0 %v634
        %650 = vmatmul.bf16.gmra.mxu0 %v637
        %v651 = vpop.f32.mrf.mxu0
        %v652 = vadd.f32 0.0, %v651
        %v653 = vpop.f32.mrf.mxu0
        %v654 = vadd.f32 0.0, %v653
        %655 = vmatmul.bf16.gmra.mxu0 %v640
        %v656 = vpop.f32.mrf.mxu0
        %v657 = vadd.f32 0.0, %v656
        %v658 = vpop.f32.mrf.mxu0
        %v659 = vadd.f32 0.0, %v658
        %660 = vdwg.mxu0
        %v661 = vadd.f32 %v614, %v652
        %v662 = vadd.f32 %v615, %v654
        %v663 = vadd.f32 %v616, %v657
        %v664 = vadd.f32 %v617, %v659
        %v665 = vld [vmem:[%s332] sm:$0xf]
        %v666 = vld [vmem:[%s332 + $0x4] sm:$0xf]
        %v667 = vld [vmem:[%s332 + $0x8] sm:$0xf]
        %v668 = vld [vmem:[%s332 + $0xc] sm:$0xf]
        %s669 = scalar_lea.vmem %s3, 48
        %v670 = vld [vmem:[%s669] sm:$0xf]
        %v671 = vld [vmem:[%s669 + $0x4] sm:$0xf]
        %v676 = vunpack.c.l.b16 %v665
        %v677 = vunpack.c.l.b16 %v666
        %v678 = vunpack.c.l.b16 %v667
        %v679 = vunpack.c.l.b16 %v668
        %v680 = vpack.c.b16 %v677, %v676
        %v681 = vpack.c.b16 %v679, %v678
        %v684 = vunpack.c.l.b16 %v670
        %v685 = vunpack.c.l.b16 %v671
        %v686 = vpack.c.b16 %v685, %v684
        %v689 = vsel %vm387, %v680, 0
        %v692 = vsel %vm387, %v681, 0
        %694 = vmatpush.bf16.msra.mxu0 0
        %695 = vmatpush.bf16.msra.mxu0 0
        %696 = vmatpush.bf16.msra.mxu0 0
        %697 = vmatpush.bf16.msra.mxu0 0
        %698 = vmatpush.bf16.msra.mxu0 0
        %699 = vmatpush.bf16.msra.mxu0 0
        %700 = vmatpush.bf16.msra.mxu0 0
        %701 = vmatpush.bf16.msra.mxu0 %v686
        %702 = vmatmul.bf16.gmra.mxu0 %v689
        %v703 = vpop.f32.mrf.mxu0
        %v704 = vadd.f32 0.0, %v703
        %v705 = vpop.f32.mrf.mxu0
        %v706 = vadd.f32 0.0, %v705
        %707 = vmatmul.bf16.gmra.mxu0 %v692
        %v708 = vpop.f32.mrf.mxu0
        %v709 = vadd.f32 0.0, %v708
        %v710 = vpop.f32.mrf.mxu0
        %v711 = vadd.f32 0.0, %v710
        %712 = vdwg.mxu0
        %v713 = vadd.f32 %v661, %v704
        %v714 = vadd.f32 %v662, %v706
        %v715 = vadd.f32 %v663, %v709
        %v716 = vadd.f32 %v664, %v711
        %v717 = vld [vmem:[%s332] sm:$0xf]
        %v718 = vld [vmem:[%s332 + $0x4] sm:$0xf]
        %v719 = vld [vmem:[%s332 + $0x8] sm:$0xf]
        %v720 = vld [vmem:[%s332 + $0xc] sm:$0xf]
        %v721 = vld [vmem:[%s332 + $0x10] sm:$0x1]
        %s722 = scalar_lea.vmem %s3, 56
        %v723 = vld [vmem:[%s722] sm:$0xf]
        %v724 = vld [vmem:[%s722 + $0x4] sm:$0xf]
        %v730 = vunpack.c.l.b16 %v717
        %v731 = vunpack.c.l.b16 %v718
        %v732 = vunpack.c.l.b16 %v719
        %v733 = vunpack.c.l.b16 %v720
        %v734 = vunpack.c.l.b16 %v721
        %v735 = vpack.c.b16 %v731, %v730
        %v736 = vpack.c.b16 %v733, %v732
        %v737 = vpack.c.b16 %v734, %v734
        %v739 = vshrl.u32 %v735, 16
        %v741 = vshll.u32 %v735, 16
        %v743 = vrot.slane %v741, 1
        %v744 = vor.u32 %v739, %v743
        %v746 = vshll.u32 %v736, 16
        %v748 = vrot.slane %v746, 1
        %v749 = vsel %vm360, %v744, %v748
        %v750 = vshrl.u32 %v736, 16
        %v752 = vor.u32 %v750, %v748
        %v754 = vshll.u32 %v737, 16
        %v756 = vrot.slane %v754, 1
        %v757 = vsel %vm360, %v752, %v756
        %v760 = vunpack.c.l.b16 %v723
        %v761 = vunpack.c.l.b16 %v724
        %v762 = vpack.c.b16 %v761, %v760
        %v765 = vsel %vm387, %v749, 0
        %v768 = vsel %vm387, %v757, 0
        %770 = vmatpush.bf16.msra.mxu0 0
        %771 = vmatpush.bf16.msra.mxu0 0
        %772 = vmatpush.bf16.msra.mxu0 0
        %773 = vmatpush.bf16.msra.mxu0 0
        %774 = vmatpush.bf16.msra.mxu0 0
        %775 = vmatpush.bf16.msra.mxu0 0
        %776 = vmatpush.bf16.msra.mxu0 0
        %777 = vmatpush.bf16.msra.mxu0 %v762
        %778 = vmatmul.bf16.gmra.mxu0 %v765
        %v779 = vpop.f32.mrf.mxu0
        %v780 = vadd.f32 0.0, %v779
        %v781 = vpop.f32.mrf.mxu0
        %v782 = vadd.f32 0.0, %v781
        %783 = vmatmul.bf16.gmra.mxu0 %v768
        %v784 = vpop.f32.mrf.mxu0
        %v785 = vadd.f32 0.0, %v784
        %v786 = vpop.f32.mrf.mxu0
        %v787 = vadd.f32 0.0, %v786
        %788 = vdwg.mxu0
        %v789 = vadd.f32 %v713, %v780
        %v790 = vadd.f32 %v714, %v782
        %v791 = vadd.f32 %v715, %v785
        %v792 = vadd.f32 %v716, %v787
        %v793 = vld [vmem:[%s332] sm:$0xe]
        %s794 = scalar_lea.vmem %s3, 64
        %v795 = vld [vmem:[%s794] sm:$0xf]
        %v796 = vld [vmem:[%s794 + $0x4] sm:$0xf]
        %v798 = vunpack.c.l.b16 %v793
        %v799 = vpack.c.b16 %v731, %v798
        %v800 = vrot.slane %v799, 1
        %v801 = vrot.slane %v736, 1
        %v802 = vsel %vm449, %v800, %v801
        %v803 = vrot.slane %v737, 1
        %v804 = vsel %vm449, %v801, %v803
        %v807 = vunpack.c.l.b16 %v795
        %v808 = vunpack.c.l.b16 %v796
        %v809 = vpack.c.b16 %v808, %v807
        %v812 = vsel %vm387, %v802, 0
        %v815 = vsel %vm387, %v804, 0
        %817 = vmatpush.bf16.msra.mxu0 0
        %818 = vmatpush.bf16.msra.mxu0 0
        %819 = vmatpush.bf16.msra.mxu0 0
        %820 = vmatpush.bf16.msra.mxu0 0
        %821 = vmatpush.bf16.msra.mxu0 0
        %822 = vmatpush.bf16.msra.mxu0 0
        %823 = vmatpush.bf16.msra.mxu0 0
        %824 = vmatpush.bf16.msra.mxu0 %v809
        %825 = vmatmul.bf16.gmra.mxu0 %v812
        %v826 = vpop.f32.mrf.mxu0
        %v827 = vadd.f32 0.0, %v826
        %v828 = vpop.f32.mrf.mxu0
        %v829 = vadd.f32 0.0, %v828
        %830 = vmatmul.bf16.gmra.mxu0 %v815
        %v831 = vpop.f32.mrf.mxu0
        %v832 = vadd.f32 0.0, %v831
        %v833 = vpop.f32.mrf.mxu0
        %v834 = vadd.f32 0.0, %v833
        %835 = vdwg.mxu0
        %v836 = vadd.f32 %v789, %v827
        %v837 = vadd.f32 %v790, %v829
        %v838 = vadd.f32 %v791, %v832
        %v839 = vadd.f32 %v792, %v834
        %v841 = vperm.slane %v336, 0
        %v843 = vadd.f32 %v836, %v841
        %v844 = vadd.f32 %v837, %v841
        %v845 = vadd.f32 %v838, %v841
        %v846 = vadd.f32 %v839, %v841
        %v847 = vmax.f32 %v843, 0.0
        %v848 = vmax.f32 %v844, 0.0
        %v849 = vmax.f32 %v845, 0.0
        %v850 = vmax.f32 %v846, 0.0
        %v851 = vpack.c.bf16 %v847, %v847
        %v852 = vpack.c.bf16 %v848, %v848
        %v853 = vpack.c.bf16 %v849, %v849
        %v854 = vpack.c.bf16 %v850, %v850
        %vm855 = vcmask 519168
        %856 = vst.msk [vmem:[%s300] sm:$0xf] %vm855, %v851
        %857 = vst.msk [vmem:[%s300 + $0x4] sm:$0xf] %vm855, %v852
        %858 = vst.msk [vmem:[%s300 + $0x8] sm:$0xf] %vm855, %v853
        %859 = vst.msk [vmem:[%s300 + $0xc] sm:$0xf] %vm855, %v854
        %s860 = scalar_lea.vmem %s310, 20
        %v861 = vld [vmem:[%s860] sm:$0xf]
        %v862 = vld [vmem:[%s860 + $0x4] sm:$0xf]
        %v863 = vld [vmem:[%s860 + $0x8] sm:$0xf]
        %v864 = vld [vmem:[%s860 + $0xc] sm:$0xf]
        %v865 = vld [vmem:[%s3] sm:$0xf]
        %v866 = vld [vmem:[%s3 + $0x4] sm:$0xf]
        %v867 = vld [vmem:[%s860 + $0x10] sm:$0x1]
        %v868 = vld [vmem:[%s344] sm:$0xf]
        %v869 = vld [vmem:[%s344 + $0x4] sm:$0xf]
        %v875 = vunpack.c.l.b16 %v861
        %v876 = vunpack.c.l.b16 %v862
        %v877 = vunpack.c.l.b16 %v863
        %v878 = vunpack.c.l.b16 %v864
        %v879 = vunpack.c.l.b16 %v867
        %v880 = vpack.c.b16 %v876, %v875
        %v881 = vpack.c.b16 %v878, %v877
        %v882 = vpack.c.b16 %v879, %v879
        %v884 = vshrl.u32 %v880, 16
        %v886 = vshll.u32 %v880, 16
        %v888 = vrot.slane %v886, 1
        %v889 = vor.u32 %v884, %v888
        %v891 = vshll.u32 %v881, 16
        %v893 = vrot.slane %v891, 1
        %v894 = vsel %vm360, %v889, %v893
        %v895 = vshrl.u32 %v881, 16
        %v897 = vor.u32 %v895, %v893
        %v899 = vshll.u32 %v882, 16
        %v901 = vrot.slane %v899, 1
        %v902 = vsel %vm360, %v897, %v901
        %v905 = vunpack.c.l.b16 %v868
        %v906 = vunpack.c.l.b16 %v869
        %v907 = vpack.c.b16 %v906, %v905
        %v910 = vsel %vm387, %v894, 0
        %v913 = vsel %vm387, %v902, 0
        %915 = vmatpush.bf16.msra.mxu0 0
        %916 = vmatpush.bf16.msra.mxu0 0
        %917 = vmatpush.bf16.msra.mxu0 0
        %918 = vmatpush.bf16.msra.mxu0 0
        %919 = vmatpush.bf16.msra.mxu0 0
        %920 = vmatpush.bf16.msra.mxu0 0
        %921 = vmatpush.bf16.msra.mxu0 0
        %922 = vmatpush.bf16.msra.mxu0 %v907
        %923 = vmatmul.bf16.gmra.mxu0 %v910
        %v924 = vpop.f32.mrf.mxu0
        %v925 = vadd.f32 0.0, %v924
        %v926 = vpop.f32.mrf.mxu0
        %v927 = vadd.f32 0.0, %v926
        %928 = vmatmul.bf16.gmra.mxu0 %v913
        %v929 = vpop.f32.mrf.mxu0
        %v930 = vadd.f32 0.0, %v929
        %v931 = vpop.f32.mrf.mxu0
        %v932 = vadd.f32 0.0, %v931
        %933 = vdwg.mxu0
        %v936 = vunpack.c.l.b16 %v865
        %v937 = vunpack.c.l.b16 %v866
        %v938 = vpack.c.b16 %v937, %v936
        %v940 = vsel %vm387, %v880, 0
        %v942 = vsel %vm387, %v881, 0
        %944 = vmatpush.bf16.msra.mxu0 0
        %945 = vmatpush.bf16.msra.mxu0 0
        %946 = vmatpush.bf16.msra.mxu0 0
        %947 = vmatpush.bf16.msra.mxu0 0
        %948 = vmatpush.bf16.msra.mxu0 0
        %949 = vmatpush.bf16.msra.mxu0 0
        %950 = vmatpush.bf16.msra.mxu0 0
        %951 = vmatpush.bf16.msra.mxu0 %v938
        %952 = vmatmul.bf16.gmra.mxu0 %v940
        %v953 = vpop.f32.mrf.mxu0
        %v954 = vadd.f32 %v925, %v953
        %v955 = vpop.f32.mrf.mxu0
        %v956 = vadd.f32 %v927, %v955
        %957 = vmatmul.bf16.gmra.mxu0 %v942
        %v958 = vpop.f32.mrf.mxu0
        %v959 = vadd.f32 %v930, %v958
        %v960 = vpop.f32.mrf.mxu0
        %v961 = vadd.f32 %v932, %v960
        %962 = vdwg.mxu0
        %v963 = vld [vmem:[%s860] sm:$0xe]
        %v964 = vld [vmem:[%s443] sm:$0xf]
        %v965 = vld [vmem:[%s443 + $0x4] sm:$0xf]
        %v967 = vunpack.c.l.b16 %v963
        %v968 = vpack.c.b16 %v876, %v967
        %v969 = vrot.slane %v968, 1
        %v970 = vrot.slane %v881, 1
        %v971 = vsel %vm449, %v969, %v970
        %v972 = vrot.slane %v882, 1
        %v973 = vsel %vm449, %v970, %v972
        %v976 = vunpack.c.l.b16 %v964
        %v977 = vunpack.c.l.b16 %v965
        %v978 = vpack.c.b16 %v977, %v976
        %v981 = vsel %vm387, %v971, 0
        %v984 = vsel %vm387, %v973, 0
        %986 = vmatpush.bf16.msra.mxu0 0
        %987 = vmatpush.bf16.msra.mxu0 0
        %988 = vmatpush.bf16.msra.mxu0 0
        %989 = vmatpush.bf16.msra.mxu0 0
        %990 = vmatpush.bf16.msra.mxu0 0
        %991 = vmatpush.bf16.msra.mxu0 0
        %992 = vmatpush.bf16.msra.mxu0 0
        %993 = vmatpush.bf16.msra.mxu0 %v978
        %994 = vmatmul.bf16.gmra.mxu0 %v981
        %v995 = vpop.f32.mrf.mxu0
        %v996 = vadd.f32 0.0, %v995
        %v997 = vpop.f32.mrf.mxu0
        %v998 = vadd.f32 0.0, %v997
        %999 = vmatmul.bf16.gmra.mxu0 %v984
        %v1000 = vpop.f32.mrf.mxu0
        %v1001 = vadd.f32 0.0, %v1000
        %v1002 = vpop.f32.mrf.mxu0
        %v1003 = vadd.f32 0.0, %v1002
        %1004 = vdwg.mxu0
        %v1005 = vadd.f32 %v954, %v996
        %v1006 = vadd.f32 %v956, %v998
        %v1007 = vadd.f32 %v959, %v1001
        %v1008 = vadd.f32 %v961, %v1003
        %s1009 = scalar_lea.vmem %s321, 20
        %v1010 = vld [vmem:[%s1009] sm:$0xf]
        %v1011 = vld [vmem:[%s1009 + $0x4] sm:$0xf]
        %v1012 = vld [vmem:[%s1009 + $0x8] sm:$0xf]
        %v1013 = vld [vmem:[%s1009 + $0xc] sm:$0xf]
        %v1014 = vld [vmem:[%s494] sm:$0xf]
        %v1015 = vld [vmem:[%s494 + $0x4] sm:$0xf]
        %v1020 = vunpack.c.l.b16 %v1010
        %v1021 = vunpack.c.l.b16 %v1011
        %v1022 = vunpack.c.l.b16 %v1012
        %v1023 = vunpack.c.l.b16 %v1013
        %v1024 = vpack.c.b16 %v1021, %v1020
        %v1025 = vpack.c.b16 %v1023, %v1022
        %v1028 = vunpack.c.l.b16 %v1014
        %v1029 = vunpack.c.l.b16 %v1015
        %v1030 = vpack.c.b16 %v1029, %v1028
        %v1033 = vsel %vm387, %v1024, 0
        %v1036 = vsel %vm387, %v1025, 0
        %1038 = vmatpush.bf16.msra.mxu0 0
        %1039 = vmatpush.bf16.msra.mxu0 0
        %1040 = vmatpush.bf16.msra.mxu0 0
        %1041 = vmatpush.bf16.msra.mxu0 0
        %1042 = vmatpush.bf16.msra.mxu0 0
        %1043 = vmatpush.bf16.msra.mxu0 0
        %1044 = vmatpush.bf16.msra.mxu0 0
        %1045 = vmatpush.bf16.msra.mxu0 %v1030
        %1046 = vmatmul.bf16.gmra.mxu0 %v1033
        %v1047 = vpop.f32.mrf.mxu0
        %v1048 = vadd.f32 0.0, %v1047
        %v1049 = vpop.f32.mrf.mxu0
        %v1050 = vadd.f32 0.0, %v1049
        %1051 = vmatmul.bf16.gmra.mxu0 %v1036
        %v1052 = vpop.f32.mrf.mxu0
        %v1053 = vadd.f32 0.0, %v1052
        %v1054 = vpop.f32.mrf.mxu0
        %v1055 = vadd.f32 0.0, %v1054
        %1056 = vdwg.mxu0
        %v1057 = vadd.f32 %v1005, %v1048
        %v1058 = vadd.f32 %v1006, %v1050
        %v1059 = vadd.f32 %v1007, %v1053
        %v1060 = vadd.f32 %v1008, %v1055
        %v1061 = vld [vmem:[%s1009] sm:$0xf]
        %v1062 = vld [vmem:[%s1009 + $0x4] sm:$0xf]
        %v1063 = vld [vmem:[%s1009 + $0x8] sm:$0xf]
        %v1064 = vld [vmem:[%s1009 + $0xc] sm:$0xf]
        %v1065 = vld [vmem:[%s1009 + $0x10] sm:$0x1]
        %v1066 = vld [vmem:[%s547] sm:$0xf]
        %v1067 = vld [vmem:[%s547 + $0x4] sm:$0xf]
        %v1073 = vunpack.c.l.b16 %v1061
        %v1074 = vunpack.c.l.b16 %v1062
        %v1075 = vunpack.c.l.b16 %v1063
        %v1076 = vunpack.c.l.b16 %v1064
        %v1077 = vunpack.c.l.b16 %v1065
        %v1078 = vpack.c.b16 %v1074, %v1073
        %v1079 = vpack.c.b16 %v1076, %v1075
        %v1080 = vpack.c.b16 %v1077, %v1077
        %v1082 = vshrl.u32 %v1078, 16
        %v1084 = vshll.u32 %v1078, 16
        %v1086 = vrot.slane %v1084, 1
        %v1087 = vor.u32 %v1082, %v1086
        %v1089 = vshll.u32 %v1079, 16
        %v1091 = vrot.slane %v1089, 1
        %v1092 = vsel %vm360, %v1087, %v1091
        %v1093 = vshrl.u32 %v1079, 16
        %v1095 = vor.u32 %v1093, %v1091
        %v1097 = vshll.u32 %v1080, 16
        %v1099 = vrot.slane %v1097, 1
        %v1100 = vsel %vm360, %v1095, %v1099
        %v1103 = vunpack.c.l.b16 %v1066
        %v1104 = vunpack.c.l.b16 %v1067
        %v1105 = vpack.c.b16 %v1104, %v1103
        %v1108 = vsel %vm387, %v1092, 0
        %v1111 = vsel %vm387, %v1100, 0
        %1113 = vmatpush.bf16.msra.mxu0 0
        %1114 = vmatpush.bf16.msra.mxu0 0
        %1115 = vmatpush.bf16.msra.mxu0 0
        %1116 = vmatpush.bf16.msra.mxu0 0
        %1117 = vmatpush.bf16.msra.mxu0 0
        %1118 = vmatpush.bf16.msra.mxu0 0
        %1119 = vmatpush.bf16.msra.mxu0 0
        %1120 = vmatpush.bf16.msra.mxu0 %v1105
        %1121 = vmatmul.bf16.gmra.mxu0 %v1108
        %v1122 = vpop.f32.mrf.mxu0
        %v1123 = vadd.f32 0.0, %v1122
        %v1124 = vpop.f32.mrf.mxu0
        %v1125 = vadd.f32 0.0, %v1124
        %1126 = vmatmul.bf16.gmra.mxu0 %v1111
        %v1127 = vpop.f32.mrf.mxu0
        %v1128 = vadd.f32 0.0, %v1127
        %v1129 = vpop.f32.mrf.mxu0
        %v1130 = vadd.f32 0.0, %v1129
        %1131 = vdwg.mxu0
        %v1132 = vadd.f32 %v1057, %v1123
        %v1133 = vadd.f32 %v1058, %v1125
        %v1134 = vadd.f32 %v1059, %v1128
        %v1135 = vadd.f32 %v1060, %v1130
        %v1136 = vld [vmem:[%s1009] sm:$0xe]
        %v1137 = vld [vmem:[%s619] sm:$0xf]
        %v1138 = vld [vmem:[%s619 + $0x4] sm:$0xf]
        %v1140 = vunpack.c.l.b16 %v1136
        %v1141 = vpack.c.b16 %v1074, %v1140
        %v1142 = vrot.slane %v1141, 1
        %v1143 = vrot.slane %v1079, 1
        %v1144 = vsel %vm449, %v1142, %v1143
        %v1145 = vrot.slane %v1080, 1
        %v1146 = vsel %vm449, %v1143, %v1145
        %v1149 = vunpack.c.l.b16 %v1137
        %v1150 = vunpack.c.l.b16 %v1138
        %v1151 = vpack.c.b16 %v1150, %v1149
        %v1154 = vsel %vm387, %v1144, 0
        %v1157 = vsel %vm387, %v1146, 0
        %1159 = vmatpush.bf16.msra.mxu0 0
        %1160 = vmatpush.bf16.msra.mxu0 0
        %1161 = vmatpush.bf16.msra.mxu0 0
        %1162 = vmatpush.bf16.msra.mxu0 0
        %1163 = vmatpush.bf16.msra.mxu0 0
        %1164 = vmatpush.bf16.msra.mxu0 0
        %1165 = vmatpush.bf16.msra.mxu0 0
        %1166 = vmatpush.bf16.msra.mxu0 %v1151
        %1167 = vmatmul.bf16.gmra.mxu0 %v1154
        %v1168 = vpop.f32.mrf.mxu0
        %v1169 = vadd.f32 0.0, %v1168
        %v1170 = vpop.f32.mrf.mxu0
        %v1171 = vadd.f32 0.0, %v1170
        %1172 = vmatmul.bf16.gmra.mxu0 %v1157
        %v1173 = vpop.f32.mrf.mxu0
        %v1174 = vadd.f32 0.0, %v1173
        %v1175 = vpop.f32.mrf.mxu0
        %v1176 = vadd.f32 0.0, %v1175
        %1177 = vdwg.mxu0
        %v1178 = vadd.f32 %v1132, %v1169
        %v1179 = vadd.f32 %v1133, %v1171
        %v1180 = vadd.f32 %v1134, %v1174
        %v1181 = vadd.f32 %v1135, %v1176
        %s1182 = scalar_lea.vmem %s332, 20
        %v1183 = vld [vmem:[%s1182] sm:$0xf]
        %v1184 = vld [vmem:[%s1182 + $0x4] sm:$0xf]
        %v1185 = vld [vmem:[%s1182 + $0x8] sm:$0xf]
        %v1186 = vld [vmem:[%s1182 + $0xc] sm:$0xf]
        %v1187 = vld [vmem:[%s669] sm:$0xf]
        %v1188 = vld [vmem:[%s669 + $0x4] sm:$0xf]
        %v1193 = vunpack.c.l.b16 %v1183
        %v1194 = vunpack.c.l.b16 %v1184
        %v1195 = vunpack.c.l.b16 %v1185
        %v1196 = vunpack.c.l.b16 %v1186
        %v1197 = vpack.c.b16 %v1194, %v1193
        %v1198 = vpack.c.b16 %v1196, %v1195
        %v1201 = vunpack.c.l.b16 %v1187
        %v1202 = vunpack.c.l.b16 %v1188
        %v1203 = vpack.c.b16 %v1202, %v1201
        %v1206 = vsel %vm387, %v1197, 0
        %v1209 = vsel %vm387, %v1198, 0
        %1211 = vmatpush.bf16.msra.mxu0 0
        %1212 = vmatpush.bf16.msra.mxu0 0
        %1213 = vmatpush.bf16.msra.mxu0 0
        %1214 = vmatpush.bf16.msra.mxu0 0
        %1215 = vmatpush.bf16.msra.mxu0 0
        %1216 = vmatpush.bf16.msra.mxu0 0
        %1217 = vmatpush.bf16.msra.mxu0 0
        %1218 = vmatpush.bf16.msra.mxu0 %v1203
        %1219 = vmatmul.bf16.gmra.mxu0 %v1206
        %v1220 = vpop.f32.mrf.mxu0
        %v1221 = vadd.f32 0.0, %v1220
        %v1222 = vpop.f32.mrf.mxu0
        %v1223 = vadd.f32 0.0, %v1222
        %1224 = vmatmul.bf16.gmra.mxu0 %v1209
        %v1225 = vpop.f32.mrf.mxu0
        %v1226 = vadd.f32 0.0, %v1225
        %v1227 = vpop.f32.mrf.mxu0
        %v1228 = vadd.f32 0.0, %v1227
        %1229 = vdwg.mxu0
        %v1230 = vadd.f32 %v1178, %v1221
        %v1231 = vadd.f32 %v1179, %v1223
        %v1232 = vadd.f32 %v1180, %v1226
        %v1233 = vadd.f32 %v1181, %v1228
        %v1234 = vld [vmem:[%s1182] sm:$0xf]
        %v1235 = vld [vmem:[%s1182 + $0x4] sm:$0xf]
        %v1236 = vld [vmem:[%s1182 + $0x8] sm:$0xf]
        %v1237 = vld [vmem:[%s1182 + $0xc] sm:$0xf]
        %v1238 = vld [vmem:[%s1182 + $0x10] sm:$0x1]
        %v1239 = vld [vmem:[%s722] sm:$0xf]
        %v1240 = vld [vmem:[%s722 + $0x4] sm:$0xf]
        %v1246 = vunpack.c.l.b16 %v1234
        %v1247 = vunpack.c.l.b16 %v1235
        %v1248 = vunpack.c.l.b16 %v1236
        %v1249 = vunpack.c.l.b16 %v1237
        %v1250 = vunpack.c.l.b16 %v1238
        %v1251 = vpack.c.b16 %v1247, %v1246
        %v1252 = vpack.c.b16 %v1249, %v1248
        %v1253 = vpack.c.b16 %v1250, %v1250
        %v1255 = vshrl.u32 %v1251, 16
        %v1257 = vshll.u32 %v1251, 16
        %v1259 = vrot.slane %v1257, 1
        %v1260 = vor.u32 %v1255, %v1259
        %v1262 = vshll.u32 %v1252, 16
        %v1264 = vrot.slane %v1262, 1
        %v1265 = vsel %vm360, %v1260, %v1264
        %v1266 = vshrl.u32 %v1252, 16
        %v1268 = vor.u32 %v1266, %v1264
        %v1270 = vshll.u32 %v1253, 16
        %v1272 = vrot.slane %v1270, 1
        %v1273 = vsel %vm360, %v1268, %v1272
        %v1276 = vunpack.c.l.b16 %v1239
        %v1277 = vunpack.c.l.b16 %v1240
        %v1278 = vpack.c.b16 %v1277, %v1276
        %v1281 = vsel %vm387, %v1265, 0
        %v1284 = vsel %vm387, %v1273, 0
        %1286 = vmatpush.bf16.msra.mxu0 0
        %1287 = vmatpush.bf16.msra.mxu0 0
        %1288 = vmatpush.bf16.msra.mxu0 0
        %1289 = vmatpush.bf16.msra.mxu0 0
        %1290 = vmatpush.bf16.msra.mxu0 0
        %1291 = vmatpush.bf16.msra.mxu0 0
        %1292 = vmatpush.bf16.msra.mxu0 0
        %1293 = vmatpush.bf16.msra.mxu0 %v1278
        %1294 = vmatmul.bf16.gmra.mxu0 %v1281
        %v1295 = vpop.f32.mrf.mxu0
        %v1296 = vadd.f32 0.0, %v1295
        %v1297 = vpop.f32.mrf.mxu0
        %v1298 = vadd.f32 0.0, %v1297
        %1299 = vmatmul.bf16.gmra.mxu0 %v1284
        %v1300 = vpop.f32.mrf.mxu0
        %v1301 = vadd.f32 0.0, %v1300
        %v1302 = vpop.f32.mrf.mxu0
        %v1303 = vadd.f32 0.0, %v1302
        %1304 = vdwg.mxu0
        %v1305 = vadd.f32 %v1230, %v1296
        %v1306 = vadd.f32 %v1231, %v1298
        %v1307 = vadd.f32 %v1232, %v1301
        %v1308 = vadd.f32 %v1233, %v1303
        %v1309 = vld [vmem:[%s1182] sm:$0xe]
        %v1310 = vld [vmem:[%s794] sm:$0xf]
        %v1311 = vld [vmem:[%s794 + $0x4] sm:$0xf]
        %v1313 = vunpack.c.l.b16 %v1309
        %v1314 = vpack.c.b16 %v1247, %v1313
        %v1315 = vrot.slane %v1314, 1
        %v1316 = vrot.slane %v1252, 1
        %v1317 = vsel %vm449, %v1315, %v1316
        %v1318 = vrot.slane %v1253, 1
        %v1319 = vsel %vm449, %v1316, %v1318
        %v1322 = vunpack.c.l.b16 %v1310
        %v1323 = vunpack.c.l.b16 %v1311
        %v1324 = vpack.c.b16 %v1323, %v1322
        %v1327 = vsel %vm387, %v1317, 0
        %v1330 = vsel %vm387, %v1319, 0
        %1332 = vmatpush.bf16.msra.mxu0 0
        %1333 = vmatpush.bf16.msra.mxu0 0
        %1334 = vmatpush.bf16.msra.mxu0 0
        %1335 = vmatpush.bf16.msra.mxu0 0
        %1336 = vmatpush.bf16.msra.mxu0 0
        %1337 = vmatpush.bf16.msra.mxu0 0
        %1338 = vmatpush.bf16.msra.mxu0 0
        %1339 = vmatpush.bf16.msra.mxu0 %v1324
        %1340 = vmatmul.bf16.gmra.mxu0 %v1327
        %v1341 = vpop.f32.mrf.mxu0
        %v1342 = vadd.f32 0.0, %v1341
        %v1343 = vpop.f32.mrf.mxu0
        %v1344 = vadd.f32 0.0, %v1343
        %1345 = vmatmul.bf16.gmra.mxu0 %v1330
        %v1346 = vpop.f32.mrf.mxu0
        %v1347 = vadd.f32 0.0, %v1346
        %v1348 = vpop.f32.mrf.mxu0
        %v1349 = vadd.f32 0.0, %v1348
        %1350 = vdwg.mxu0
        %v1351 = vadd.f32 %v1305, %v1342
        %v1352 = vadd.f32 %v1306, %v1344
        %v1353 = vadd.f32 %v1307, %v1347
        %v1354 = vadd.f32 %v1308, %v1349
        %v1355 = vadd.f32 %v1351, %v841
        %v1356 = vadd.f32 %v1352, %v841
        %v1357 = vadd.f32 %v1353, %v841
        %v1358 = vadd.f32 %v1354, %v841
        %v1359 = vmax.f32 %v1355, 0.0
        %v1360 = vmax.f32 %v1356, 0.0
        %v1361 = vmax.f32 %v1357, 0.0
        %v1362 = vmax.f32 %v1358, 0.0
        %v1363 = vpack.c.bf16 %v1359, %v1359
        %v1364 = vpack.c.bf16 %v1360, %v1360
        %v1365 = vpack.c.bf16 %v1361, %v1361
        %v1366 = vpack.c.bf16 %v1362, %v1362
        %s1367 = scalar_lea.vmem %s300, 16 [#allocation2]
        %1368 = vst.msk [vmem:[%s1367] sm:$0xf] %vm855, %v1363
        %1369 = vst.msk [vmem:[%s1367 + $0x4] sm:$0xf] %vm855, %v1364
        %1370 = vst.msk [vmem:[%s1367 + $0x8] sm:$0xf] %vm855, %v1365
        %1371 = vst.msk [vmem:[%s1367 + $0xc] sm:$0xf] %vm855, %v1366
        %s1372 = scalar_lea.vmem %s310, 40
        %v1373 = vld [vmem:[%s1372] sm:$0xf]
        %v1374 = vld [vmem:[%s1372 + $0x4] sm:$0xf]
        %v1375 = vld [vmem:[%s1372 + $0x8] sm:$0xf]
        %v1376 = vld [vmem:[%s1372 + $0xc] sm:$0xf]
        %v1377 = vld [vmem:[%s3] sm:$0xf]
        %v1378 = vld [vmem:[%s3 + $0x4] sm:$0xf]
        %v1379 = vld [vmem:[%s1372 + $0x10] sm:$0x1]
        %v1380 = vld [vmem:[%s344] sm:$0xf]
        %v1381 = vld [vmem:[%s344 + $0x4] sm:$0xf]
        %v1387 = vunpack.c.l.b16 %v1373
        %v1388 = vunpack.c.l.b16 %v1374
        %v1389 = vunpack.c.l.b16 %v1375
        %v1390 = vunpack.c.l.b16 %v1376
        %v1391 = vunpack.c.l.b16 %v1379
        %v1392 = vpack.c.b16 %v1388, %v1387
        %v1393 = vpack.c.b16 %v1390, %v1389
        %v1394 = vpack.c.b16 %v1391, %v1391
        %v1396 = vshrl.u32 %v1392, 16
        %v1398 = vshll.u32 %v1392, 16
        %v1400 = vrot.slane %v1398, 1
        %v1401 = vor.u32 %v1396, %v1400
        %v1403 = vshll.u32 %v1393, 16
        %v1405 = vrot.slane %v1403, 1
        %v1406 = vsel %vm360, %v1401, %v1405
        %v1407 = vshrl.u32 %v1393, 16
        %v1409 = vor.u32 %v1407, %v1405
        %v1411 = vshll.u32 %v1394, 16
        %v1413 = vrot.slane %v1411, 1
        %v1414 = vsel %vm360, %v1409, %v1413
        %v1417 = vunpack.c.l.b16 %v1380
        %v1418 = vunpack.c.l.b16 %v1381
        %v1419 = vpack.c.b16 %v1418, %v1417
        %v1422 = vsel %vm387, %v1406, 0
        %v1425 = vsel %vm387, %v1414, 0
        %1427 = vmatpush.bf16.msra.mxu0 0
        %1428 = vmatpush.bf16.msra.mxu0 0
        %1429 = vmatpush.bf16.msra.mxu0 0
        %1430 = vmatpush.bf16.msra.mxu0 0
        %1431 = vmatpush.bf16.msra.mxu0 0
        %1432 = vmatpush.bf16.msra.mxu0 0
        %1433 = vmatpush.bf16.msra.mxu0 0
        %1434 = vmatpush.bf16.msra.mxu0 %v1419
        %1435 = vmatmul.bf16.gmra.mxu0 %v1422
        %v1436 = vpop.f32.mrf.mxu0
        %v1437 = vadd.f32 0.0, %v1436
        %v1438 = vpop.f32.mrf.mxu0
        %v1439 = vadd.f32 0.0, %v1438
        %1440 = vmatmul.bf16.gmra.mxu0 %v1425
        %v1441 = vpop.f32.mrf.mxu0
        %v1442 = vadd.f32 0.0, %v1441
        %v1443 = vpop.f32.mrf.mxu0
        %v1444 = vadd.f32 0.0, %v1443
        %1445 = vdwg.mxu0
        %v1448 = vunpack.c.l.b16 %v1377
        %v1449 = vunpack.c.l.b16 %v1378
        %v1450 = vpack.c.b16 %v1449, %v1448
        %v1452 = vsel %vm387, %v1392, 0
        %v1454 = vsel %vm387, %v1393, 0
        %1456 = vmatpush.bf16.msra.mxu0 0
        %1457 = vmatpush.bf16.msra.mxu0 0
        %1458 = vmatpush.bf16.msra.mxu0 0
        %1459 = vmatpush.bf16.msra.mxu0 0
        %1460 = vmatpush.bf16.msra.mxu0 0
        %1461 = vmatpush.bf16.msra.mxu0 0
        %1462 = vmatpush.bf16.msra.mxu0 0
        %1463 = vmatpush.bf16.msra.mxu0 %v1450
        %1464 = vmatmul.bf16.gmra.mxu0 %v1452
        %v1465 = vpop.f32.mrf.mxu0
        %v1466 = vadd.f32 %v1437, %v1465
        %v1467 = vpop.f32.mrf.mxu0
        %v1468 = vadd.f32 %v1439, %v1467
        %1469 = vmatmul.bf16.gmra.mxu0 %v1454
        %v1470 = vpop.f32.mrf.mxu0
        %v1471 = vadd.f32 %v1442, %v1470
        %v1472 = vpop.f32.mrf.mxu0
        %v1473 = vadd.f32 %v1444, %v1472
        %1474 = vdwg.mxu0
        %v1475 = vld [vmem:[%s1372] sm:$0xe]
        %v1476 = vld [vmem:[%s443] sm:$0xf]
        %v1477 = vld [vmem:[%s443 + $0x4] sm:$0xf]
        %v1479 = vunpack.c.l.b16 %v1475
        %v1480 = vpack.c.b16 %v1388, %v1479
        %v1481 = vrot.slane %v1480, 1
        %v1482 = vrot.slane %v1393, 1
        %v1483 = vsel %vm449, %v1481, %v1482
        %v1484 = vrot.slane %v1394, 1
        %v1485 = vsel %vm449, %v1482, %v1484
        %v1488 = vunpack.c.l.b16 %v1476
        %v1489 = vunpack.c.l.b16 %v1477
        %v1490 = vpack.c.b16 %v1489, %v1488
        %v1493 = vsel %vm387, %v1483, 0
        %v1496 = vsel %vm387, %v1485, 0
        %1498 = vmatpush.bf16.msra.mxu0 0
        %1499 = vmatpush.bf16.msra.mxu0 0
        %1500 = vmatpush.bf16.msra.mxu0 0
        %1501 = vmatpush.bf16.msra.mxu0 0
        %1502 = vmatpush.bf16.msra.mxu0 0
        %1503 = vmatpush.bf16.msra.mxu0 0
        %1504 = vmatpush.bf16.msra.mxu0 0
        %1505 = vmatpush.bf16.msra.mxu0 %v1490
        %1506 = vmatmul.bf16.gmra.mxu0 %v1493
        %v1507 = vpop.f32.mrf.mxu0
        %v1508 = vadd.f32 0.0, %v1507
        %v1509 = vpop.f32.mrf.mxu0
        %v1510 = vadd.f32 0.0, %v1509
        %1511 = vmatmul.bf16.gmra.mxu0 %v1496
        %v1512 = vpop.f32.mrf.mxu0
        %v1513 = vadd.f32 0.0, %v1512
        %v1514 = vpop.f32.mrf.mxu0
        %v1515 = vadd.f32 0.0, %v1514
        %1516 = vdwg.mxu0
        %v1517 = vadd.f32 %v1466, %v1508
        %v1518 = vadd.f32 %v1468, %v1510
        %v1519 = vadd.f32 %v1471, %v1513
        %v1520 = vadd.f32 %v1473, %v1515
        %s1521 = scalar_lea.vmem %s321, 40
        %v1522 = vld [vmem:[%s1521] sm:$0xf]
        %v1523 = vld [vmem:[%s1521 + $0x4] sm:$0xf]
        %v1524 = vld [vmem:[%s1521 + $0x8] sm:$0xf]
        %v1525 = vld [vmem:[%s1521 + $0xc] sm:$0xf]
        %v1526 = vld [vmem:[%s494] sm:$0xf]
        %v1527 = vld [vmem:[%s494 + $0x4] sm:$0xf]
        %v1532 = vunpack.c.l.b16 %v1522
        %v1533 = vunpack.c.l.b16 %v1523
        %v1534 = vunpack.c.l.b16 %v1524
        %v1535 = vunpack.c.l.b16 %v1525
        %v1536 = vpack.c.b16 %v1533, %v1532
        %v1537 = vpack.c.b16 %v1535, %v1534
        %v1540 = vunpack.c.l.b16 %v1526
        %v1541 = vunpack.c.l.b16 %v1527
        %v1542 = vpack.c.b16 %v1541, %v1540
        %v1545 = vsel %vm387, %v1536, 0
        %v1548 = vsel %vm387, %v1537, 0
        %1550 = vmatpush.bf16.msra.mxu0 0
        %1551 = vmatpush.bf16.msra.mxu0 0
        %1552 = vmatpush.bf16.msra.mxu0 0
        %1553 = vmatpush.bf16.msra.mxu0 0
        %1554 = vmatpush.bf16.msra.mxu0 0
        %1555 = vmatpush.bf16.msra.mxu0 0
        %1556 = vmatpush.bf16.msra.mxu0 0
        %1557 = vmatpush.bf16.msra.mxu0 %v1542
        %1558 = vmatmul.bf16.gmra.mxu0 %v1545
        %v1559 = vpop.f32.mrf.mxu0
        %v1560 = vadd.f32 0.0, %v1559
        %v1561 = vpop.f32.mrf.mxu0
        %v1562 = vadd.f32 0.0, %v1561
        %1563 = vmatmul.bf16.gmra.mxu0 %v1548
        %v1564 = vpop.f32.mrf.mxu0
        %v1565 = vadd.f32 0.0, %v1564
        %v1566 = vpop.f32.mrf.mxu0
        %v1567 = vadd.f32 0.0, %v1566
        %1568 = vdwg.mxu0
        %v1569 = vadd.f32 %v1517, %v1560
        %v1570 = vadd.f32 %v1518, %v1562
        %v1571 = vadd.f32 %v1519, %v1565
        %v1572 = vadd.f32 %v1520, %v1567
        %v1573 = vld [vmem:[%s1521] sm:$0xf]
        %v1574 = vld [vmem:[%s1521 + $0x4] sm:$0xf]
        %v1575 = vld [vmem:[%s1521 + $0x8] sm:$0xf]
        %v1576 = vld [vmem:[%s1521 + $0xc] sm:$0xf]
        %v1577 = vld [vmem:[%s1521 + $0x10] sm:$0x1]
        %v1578 = vld [vmem:[%s547] sm:$0xf]
        %v1579 = vld [vmem:[%s547 + $0x4] sm:$0xf]
        %v1585 = vunpack.c.l.b16 %v1573
        %v1586 = vunpack.c.l.b16 %v1574
        %v1587 = vunpack.c.l.b16 %v1575
        %v1588 = vunpack.c.l.b16 %v1576
        %v1589 = vunpack.c.l.b16 %v1577
        %v1590 = vpack.c.b16 %v1586, %v1585
        %v1591 = vpack.c.b16 %v1588, %v1587
        %v1592 = vpack.c.b16 %v1589, %v1589
        %v1594 = vshrl.u32 %v1590, 16
        %v1596 = vshll.u32 %v1590, 16
        %v1598 = vrot.slane %v1596, 1
        %v1599 = vor.u32 %v1594, %v1598
        %v1601 = vshll.u32 %v1591, 16
        %v1603 = vrot.slane %v1601, 1
        %v1604 = vsel %vm360, %v1599, %v1603
        %v1605 = vshrl.u32 %v1591, 16
        %v1607 = vor.u32 %v1605, %v1603
        %v1609 = vshll.u32 %v1592, 16
        %v1611 = vrot.slane %v1609, 1
        %v1612 = vsel %vm360, %v1607, %v1611
        %v1615 = vunpack.c.l.b16 %v1578
        %v1616 = vunpack.c.l.b16 %v1579
        %v1617 = vpack.c.b16 %v1616, %v1615
        %v1620 = vsel %vm387, %v1604, 0
        %v1623 = vsel %vm387, %v1612, 0
        %1625 = vmatpush.bf16.msra.mxu0 0
        %1626 = vmatpush.bf16.msra.mxu0 0
        %1627 = vmatpush.bf16.msra.mxu0 0
        %1628 = vmatpush.bf16.msra.mxu0 0
        %1629 = vmatpush.bf16.msra.mxu0 0
        %1630 = vmatpush.bf16.msra.mxu0 0
        %1631 = vmatpush.bf16.msra.mxu0 0
        %1632 = vmatpush.bf16.msra.mxu0 %v1617
        %1633 = vmatmul.bf16.gmra.mxu0 %v1620
        %v1634 = vpop.f32.mrf.mxu0
        %v1635 = vadd.f32 0.0, %v1634
        %v1636 = vpop.f32.mrf.mxu0
        %v1637 = vadd.f32 0.0, %v1636
        %1638 = vmatmul.bf16.gmra.mxu0 %v1623
        %v1639 = vpop.f32.mrf.mxu0
        %v1640 = vadd.f32 0.0, %v1639
        %v1641 = vpop.f32.mrf.mxu0
        %v1642 = vadd.f32 0.0, %v1641
        %1643 = vdwg.mxu0
        %v1644 = vadd.f32 %v1569, %v1635
        %v1645 = vadd.f32 %v1570, %v1637
        %v1646 = vadd.f32 %v1571, %v1640
        %v1647 = vadd.f32 %v1572, %v1642
        %v1648 = vld [vmem:[%s1521] sm:$0xe]
        %v1649 = vld [vmem:[%s619] sm:$0xf]
        %v1650 = vld [vmem:[%s619 + $0x4] sm:$0xf]
        %v1652 = vunpack.c.l.b16 %v1648
        %v1653 = vpack.c.b16 %v1586, %v1652
        %v1654 = vrot.slane %v1653, 1
        %v1655 = vrot.slane %v1591, 1
        %v1656 = vsel %vm449, %v1654, %v1655
        %v1657 = vrot.slane %v1592, 1
        %v1658 = vsel %vm449, %v1655, %v1657
        %v1661 = vunpack.c.l.b16 %v1649
        %v1662 = vunpack.c.l.b16 %v1650
        %v1663 = vpack.c.b16 %v1662, %v1661
        %v1666 = vsel %vm387, %v1656, 0
        %v1669 = vsel %vm387, %v1658, 0
        %1671 = vmatpush.bf16.msra.mxu0 0
        %1672 = vmatpush.bf16.msra.mxu0 0
        %1673 = vmatpush.bf16.msra.mxu0 0
        %1674 = vmatpush.bf16.msra.mxu0 0
        %1675 = vmatpush.bf16.msra.mxu0 0
        %1676 = vmatpush.bf16.msra.mxu0 0
        %1677 = vmatpush.bf16.msra.mxu0 0
        %1678 = vmatpush.bf16.msra.mxu0 %v1663
        %1679 = vmatmul.bf16.gmra.mxu0 %v1666
        %v1680 = vpop.f32.mrf.mxu0
        %v1681 = vadd.f32 0.0, %v1680
        %v1682 = vpop.f32.mrf.mxu0
        %v1683 = vadd.f32 0.0, %v1682
        %1684 = vmatmul.bf16.gmra.mxu0 %v1669
        %v1685 = vpop.f32.mrf.mxu0
        %v1686 = vadd.f32 0.0, %v1685
        %v1687 = vpop.f32.mrf.mxu0
        %v1688 = vadd.f32 0.0, %v1687
        %1689 = vdwg.mxu0
        %v1690 = vadd.f32 %v1644, %v1681
        %v1691 = vadd.f32 %v1645, %v1683
        %v1692 = vadd.f32 %v1646, %v1686
        %v1693 = vadd.f32 %v1647, %v1688
        %s1694 = scalar_lea.vmem %s332, 40
        %v1695 = vld [vmem:[%s1694] sm:$0xf]
        %v1696 = vld [vmem:[%s1694 + $0x4] sm:$0xf]
        %v1697 = vld [vmem:[%s1694 + $0x8] sm:$0xf]
        %v1698 = vld [vmem:[%s1694 + $0xc] sm:$0xf]
        %v1699 = vld [vmem:[%s669] sm:$0xf]
        %v1700 = vld [vmem:[%s669 + $0x4] sm:$0xf]
        %v1705 = vunpack.c.l.b16 %v1695
        %v1706 = vunpack.c.l.b16 %v1696
        %v1707 = vunpack.c.l.b16 %v1697
        %v1708 = vunpack.c.l.b16 %v1698
        %v1709 = vpack.c.b16 %v1706, %v1705
        %v1710 = vpack.c.b16 %v1708, %v1707
        %v1713 = vunpack.c.l.b16 %v1699
        %v1714 = vunpack.c.l.b16 %v1700
        %v1715 = vpack.c.b16 %v1714, %v1713
        %v1718 = vsel %vm387, %v1709, 0
        %v1721 = vsel %vm387, %v1710, 0
        %1723 = vmatpush.bf16.msra.mxu0 0
        %1724 = vmatpush.bf16.msra.mxu0 0
        %1725 = vmatpush.bf16.msra.mxu0 0
        %1726 = vmatpush.bf16.msra.mxu0 0
        %1727 = vmatpush.bf16.msra.mxu0 0
        %1728 = vmatpush.bf16.msra.mxu0 0
        %1729 = vmatpush.bf16.msra.mxu0 0
        %1730 = vmatpush.bf16.msra.mxu0 %v1715
        %1731 = vmatmul.bf16.gmra.mxu0 %v1718
        %v1732 = vpop.f32.mrf.mxu0
        %v1733 = vadd.f32 0.0, %v1732
        %v1734 = vpop.f32.mrf.mxu0
        %v1735 = vadd.f32 0.0, %v1734
        %1736 = vmatmul.bf16.gmra.mxu0 %v1721
        %v1737 = vpop.f32.mrf.mxu0
        %v1738 = vadd.f32 0.0, %v1737
        %v1739 = vpop.f32.mrf.mxu0
        %v1740 = vadd.f32 0.0, %v1739
        %1741 = vdwg.mxu0
        %v1742 = vadd.f32 %v1690, %v1733
        %v1743 = vadd.f32 %v1691, %v1735
        %v1744 = vadd.f32 %v1692, %v1738
        %v1745 = vadd.f32 %v1693, %v1740
        %v1746 = vld [vmem:[%s1694] sm:$0xf]
        %v1747 = vld [vmem:[%s1694 + $0x4] sm:$0xf]
        %v1748 = vld [vmem:[%s1694 + $0x8] sm:$0xf]
        %v1749 = vld [vmem:[%s1694 + $0xc] sm:$0xf]
        %v1750 = vld [vmem:[%s1694 + $0x10] sm:$0x1]
        %v1751 = vld [vmem:[%s722] sm:$0xf]
        %v1752 = vld [vmem:[%s722 + $0x4] sm:$0xf]
        %v1758 = vunpack.c.l.b16 %v1746
        %v1759 = vunpack.c.l.b16 %v1747
        %v1760 = vunpack.c.l.b16 %v1748
        %v1761 = vunpack.c.l.b16 %v1749
        %v1762 = vunpack.c.l.b16 %v1750
        %v1763 = vpack.c.b16 %v1759, %v1758
        %v1764 = vpack.c.b16 %v1761, %v1760
        %v1765 = vpack.c.b16 %v1762, %v1762
        %v1767 = vshrl.u32 %v1763, 16
        %v1769 = vshll.u32 %v1763, 16
        %v1771 = vrot.slane %v1769, 1
        %v1772 = vor.u32 %v1767, %v1771
        %v1774 = vshll.u32 %v1764, 16
        %v1776 = vrot.slane %v1774, 1
        %v1777 = vsel %vm360, %v1772, %v1776
        %v1778 = vshrl.u32 %v1764, 16
        %v1780 = vor.u32 %v1778, %v1776
        %v1782 = vshll.u32 %v1765, 16
        %v1784 = vrot.slane %v1782, 1
        %v1785 = vsel %vm360, %v1780, %v1784
        %v1788 = vunpack.c.l.b16 %v1751
        %v1789 = vunpack.c.l.b16 %v1752
        %v1790 = vpack.c.b16 %v1789, %v1788
        %v1793 = vsel %vm387, %v1777, 0
        %v1796 = vsel %vm387, %v1785, 0
        %1798 = vmatpush.bf16.msra.mxu0 0
        %1799 = vmatpush.bf16.msra.mxu0 0
        %1800 = vmatpush.bf16.msra.mxu0 0
        %1801 = vmatpush.bf16.msra.mxu0 0
        %1802 = vmatpush.bf16.msra.mxu0 0
        %1803 = vmatpush.bf16.msra.mxu0 0
        %1804 = vmatpush.bf16.msra.mxu0 0
        %1805 = vmatpush.bf16.msra.mxu0 %v1790
        %1806 = vmatmul.bf16.gmra.mxu0 %v1793
        %v1807 = vpop.f32.mrf.mxu0
        %v1808 = vadd.f32 0.0, %v1807
        %v1809 = vpop.f32.mrf.mxu0
        %v1810 = vadd.f32 0.0, %v1809
        %1811 = vmatmul.bf16.gmra.mxu0 %v1796
        %v1812 = vpop.f32.mrf.mxu0
        %v1813 = vadd.f32 0.0, %v1812
        %v1814 = vpop.f32.mrf.mxu0
        %v1815 = vadd.f32 0.0, %v1814
        %1816 = vdwg.mxu0
        %v1817 = vadd.f32 %v1742, %v1808
        %v1818 = vadd.f32 %v1743, %v1810
        %v1819 = vadd.f32 %v1744, %v1813
        %v1820 = vadd.f32 %v1745, %v1815
        %v1821 = vld [vmem:[%s1694] sm:$0xe]
        %v1822 = vld [vmem:[%s794] sm:$0xf]
        %v1823 = vld [vmem:[%s794 + $0x4] sm:$0xf]
        %v1825 = vunpack.c.l.b16 %v1821
        %v1826 = vpack.c.b16 %v1759, %v1825
        %v1827 = vrot.slane %v1826, 1
        %v1828 = vrot.slane %v1764, 1
        %v1829 = vsel %vm449, %v1827, %v1828
        %v1830 = vrot.slane %v1765, 1
        %v1831 = vsel %vm449, %v1828, %v1830
        %v1834 = vunpack.c.l.b16 %v1822
        %v1835 = vunpack.c.l.b16 %v1823
        %v1836 = vpack.c.b16 %v1835, %v1834
        %v1839 = vsel %vm387, %v1829, 0
        %v1842 = vsel %vm387, %v1831, 0
        %1844 = vmatpush.bf16.msra.mxu0 0
        %1845 = vmatpush.bf16.msra.mxu0 0
        %1846 = vmatpush.bf16.msra.mxu0 0
        %1847 = vmatpush.bf16.msra.mxu0 0
        %1848 = vmatpush.bf16.msra.mxu0 0
        %1849 = vmatpush.bf16.msra.mxu0 0
        %1850 = vmatpush.bf16.msra.mxu0 0
        %1851 = vmatpush.bf16.msra.mxu0 %v1836
        %1852 = vmatmul.bf16.gmra.mxu0 %v1839
        %v1853 = vpop.f32.mrf.mxu0
        %v1854 = vadd.f32 0.0, %v1853
        %v1855 = vpop.f32.mrf.mxu0
        %v1856 = vadd.f32 0.0, %v1855
        %1857 = vmatmul.bf16.gmra.mxu0 %v1842
        %v1858 = vpop.f32.mrf.mxu0
        %v1859 = vadd.f32 0.0, %v1858
        %v1860 = vpop.f32.mrf.mxu0
        %v1861 = vadd.f32 0.0, %v1860
        %1862 = vdwg.mxu0
        %v1863 = vadd.f32 %v1817, %v1854
        %v1864 = vadd.f32 %v1818, %v1856
        %v1865 = vadd.f32 %v1819, %v1859
        %v1866 = vadd.f32 %v1820, %v1861
        %v1867 = vadd.f32 %v1863, %v841
        %v1868 = vadd.f32 %v1864, %v841
        %v1869 = vadd.f32 %v1865, %v841
        %v1870 = vadd.f32 %v1866, %v841
        %v1871 = vmax.f32 %v1867, 0.0
        %v1872 = vmax.f32 %v1868, 0.0
        %v1873 = vmax.f32 %v1869, 0.0
        %v1874 = vmax.f32 %v1870, 0.0
        %v1875 = vpack.c.bf16 %v1871, %v1871
        %v1876 = vpack.c.bf16 %v1872, %v1872
        %v1877 = vpack.c.bf16 %v1873, %v1873
        %v1878 = vpack.c.bf16 %v1874, %v1874
        %s1879 = scalar_lea.vmem %s300, 32 [#allocation2]
        %1880 = vst.msk [vmem:[%s1879] sm:$0xf] %vm855, %v1875
        %1881 = vst.msk [vmem:[%s1879 + $0x4] sm:$0xf] %vm855, %v1876
        %1882 = vst.msk [vmem:[%s1879 + $0x8] sm:$0xf] %vm855, %v1877
        %1883 = vst.msk [vmem:[%s1879 + $0xc] sm:$0xf] %vm855, %v1878
        %s1884 = scalar_lea.vmem %s310, 60
        %v1885 = vld [vmem:[%s1884] sm:$0xf]
        %v1886 = vld [vmem:[%s1884 + $0x4] sm:$0xf]
        %v1887 = vld [vmem:[%s1884 + $0x8] sm:$0xf]
        %v1888 = vld [vmem:[%s1884 + $0xc] sm:$0xf]
        %v1889 = vld [vmem:[%s3] sm:$0xf]
        %v1890 = vld [vmem:[%s3 + $0x4] sm:$0xf]
        %v1891 = vld [vmem:[%s1884 + $0x10] sm:$0x1]
        %v1892 = vld [vmem:[%s344] sm:$0xf]
        %v1893 = vld [vmem:[%s344 + $0x4] sm:$0xf]
        %v1899 = vunpack.c.l.b16 %v1885
        %v1900 = vunpack.c.l.b16 %v1886
        %v1901 = vunpack.c.l.b16 %v1887
        %v1902 = vunpack.c.l.b16 %v1888
        %v1903 = vunpack.c.l.b16 %v1891
        %v1904 = vpack.c.b16 %v1900, %v1899
        %v1905 = vpack.c.b16 %v1902, %v1901
        %v1906 = vpack.c.b16 %v1903, %v1903
        %v1908 = vshrl.u32 %v1904, 16
        %v1910 = vshll.u32 %v1904, 16
        %v1912 = vrot.slane %v1910, 1
        %v1913 = vor.u32 %v1908, %v1912
        %v1915 = vshll.u32 %v1905, 16
        %v1917 = vrot.slane %v1915, 1
        %v1918 = vsel %vm360, %v1913, %v1917
        %v1919 = vshrl.u32 %v1905, 16
        %v1921 = vor.u32 %v1919, %v1917
        %v1923 = vshll.u32 %v1906, 16
        %v1925 = vrot.slane %v1923, 1
        %v1926 = vsel %vm360, %v1921, %v1925
        %v1929 = vunpack.c.l.b16 %v1892
        %v1930 = vunpack.c.l.b16 %v1893
        %v1931 = vpack.c.b16 %v1930, %v1929
        %v1934 = vsel %vm387, %v1918, 0
        %v1937 = vsel %vm387, %v1926, 0
        %1939 = vmatpush.bf16.msra.mxu0 0
        %1940 = vmatpush.bf16.msra.mxu0 0
        %1941 = vmatpush.bf16.msra.mxu0 0
        %1942 = vmatpush.bf16.msra.mxu0 0
        %1943 = vmatpush.bf16.msra.mxu0 0
        %1944 = vmatpush.bf16.msra.mxu0 0
        %1945 = vmatpush.bf16.msra.mxu0 0
        %1946 = vmatpush.bf16.msra.mxu0 %v1931
        %1947 = vmatmul.bf16.gmra.mxu0 %v1934
        %v1948 = vpop.f32.mrf.mxu0
        %v1949 = vadd.f32 0.0, %v1948
        %v1950 = vpop.f32.mrf.mxu0
        %v1951 = vadd.f32 0.0, %v1950
        %1952 = vmatmul.bf16.gmra.mxu0 %v1937
        %v1953 = vpop.f32.mrf.mxu0
        %v1954 = vadd.f32 0.0, %v1953
        %v1955 = vpop.f32.mrf.mxu0
        %v1956 = vadd.f32 0.0, %v1955
        %1957 = vdwg.mxu0
        %v1960 = vunpack.c.l.b16 %v1889
        %v1961 = vunpack.c.l.b16 %v1890
        %v1962 = vpack.c.b16 %v1961, %v1960
        %v1964 = vsel %vm387, %v1904, 0
        %v1966 = vsel %vm387, %v1905, 0
        %1968 = vmatpush.bf16.msra.mxu0 0
        %1969 = vmatpush.bf16.msra.mxu0 0
        %1970 = vmatpush.bf16.msra.mxu0 0
        %1971 = vmatpush.bf16.msra.mxu0 0
        %1972 = vmatpush.bf16.msra.mxu0 0
        %1973 = vmatpush.bf16.msra.mxu0 0
        %1974 = vmatpush.bf16.msra.mxu0 0
        %1975 = vmatpush.bf16.msra.mxu0 %v1962
        %1976 = vmatmul.bf16.gmra.mxu0 %v1964
        %v1977 = vpop.f32.mrf.mxu0
        %v1978 = vadd.f32 %v1949, %v1977
        %v1979 = vpop.f32.mrf.mxu0
        %v1980 = vadd.f32 %v1951, %v1979
        %1981 = vmatmul.bf16.gmra.mxu0 %v1966
        %v1982 = vpop.f32.mrf.mxu0
        %v1983 = vadd.f32 %v1954, %v1982
        %v1984 = vpop.f32.mrf.mxu0
        %v1985 = vadd.f32 %v1956, %v1984
        %1986 = vdwg.mxu0
        %v1987 = vld [vmem:[%s1884] sm:$0xe]
        %v1988 = vld [vmem:[%s443] sm:$0xf]
        %v1989 = vld [vmem:[%s443 + $0x4] sm:$0xf]
        %v1991 = vunpack.c.l.b16 %v1987
        %v1992 = vpack.c.b16 %v1900, %v1991
        %v1993 = vrot.slane %v1992, 1
        %v1994 = vrot.slane %v1905, 1
        %v1995 = vsel %vm449, %v1993, %v1994
        %v1996 = vrot.slane %v1906, 1
        %v1997 = vsel %vm449, %v1994, %v1996
        %v2000 = vunpack.c.l.b16 %v1988
        %v2001 = vunpack.c.l.b16 %v1989
        %v2002 = vpack.c.b16 %v2001, %v2000
        %v2005 = vsel %vm387, %v1995, 0
        %v2008 = vsel %vm387, %v1997, 0
        %2010 = vmatpush.bf16.msra.mxu0 0
        %2011 = vmatpush.bf16.msra.mxu0 0
        %2012 = vmatpush.bf16.msra.mxu0 0
        %2013 = vmatpush.bf16.msra.mxu0 0
        %2014 = vmatpush.bf16.msra.mxu0 0
        %2015 = vmatpush.bf16.msra.mxu0 0
        %2016 = vmatpush.bf16.msra.mxu0 0
        %2017 = vmatpush.bf16.msra.mxu0 %v2002
        %2018 = vmatmul.bf16.gmra.mxu0 %v2005
        %v2019 = vpop.f32.mrf.mxu0
        %v2020 = vadd.f32 0.0, %v2019
        %v2021 = vpop.f32.mrf.mxu0
        %v2022 = vadd.f32 0.0, %v2021
        %2023 = vmatmul.bf16.gmra.mxu0 %v2008
        %v2024 = vpop.f32.mrf.mxu0
        %v2025 = vadd.f32 0.0, %v2024
        %v2026 = vpop.f32.mrf.mxu0
        %v2027 = vadd.f32 0.0, %v2026
        %2028 = vdwg.mxu0
        %v2029 = vadd.f32 %v1978, %v2020
        %v2030 = vadd.f32 %v1980, %v2022
        %v2031 = vadd.f32 %v1983, %v2025
        %v2032 = vadd.f32 %v1985, %v2027
        %s2033 = scalar_lea.vmem %s321, 60
        %v2034 = vld [vmem:[%s2033] sm:$0xf]
        %v2035 = vld [vmem:[%s2033 + $0x4] sm:$0xf]
        %v2036 = vld [vmem:[%s2033 + $0x8] sm:$0xf]
        %v2037 = vld [vmem:[%s2033 + $0xc] sm:$0xf]
        %v2038 = vld [vmem:[%s494] sm:$0xf]
        %v2039 = vld [vmem:[%s494 + $0x4] sm:$0xf]
        %v2044 = vunpack.c.l.b16 %v2034
        %v2045 = vunpack.c.l.b16 %v2035
        %v2046 = vunpack.c.l.b16 %v2036
        %v2047 = vunpack.c.l.b16 %v2037
        %v2048 = vpack.c.b16 %v2045, %v2044
        %v2049 = vpack.c.b16 %v2047, %v2046
        %v2052 = vunpack.c.l.b16 %v2038
        %v2053 = vunpack.c.l.b16 %v2039
        %v2054 = vpack.c.b16 %v2053, %v2052
        %v2057 = vsel %vm387, %v2048, 0
        %v2060 = vsel %vm387, %v2049, 0
        %2062 = vmatpush.bf16.msra.mxu0 0
        %2063 = vmatpush.bf16.msra.mxu0 0
        %2064 = vmatpush.bf16.msra.mxu0 0
        %2065 = vmatpush.bf16.msra.mxu0 0
        %2066 = vmatpush.bf16.msra.mxu0 0
        %2067 = vmatpush.bf16.msra.mxu0 0
        %2068 = vmatpush.bf16.msra.mxu0 0
        %2069 = vmatpush.bf16.msra.mxu0 %v2054
        %2070 = vmatmul.bf16.gmra.mxu0 %v2057
        %v2071 = vpop.f32.mrf.mxu0
        %v2072 = vadd.f32 0.0, %v2071
        %v2073 = vpop.f32.mrf.mxu0
        %v2074 = vadd.f32 0.0, %v2073
        %2075 = vmatmul.bf16.gmra.mxu0 %v2060
        %v2076 = vpop.f32.mrf.mxu0
        %v2077 = vadd.f32 0.0, %v2076
        %v2078 = vpop.f32.mrf.mxu0
        %v2079 = vadd.f32 0.0, %v2078
        %2080 = vdwg.mxu0
        %v2081 = vadd.f32 %v2029, %v2072
        %v2082 = vadd.f32 %v2030, %v2074
        %v2083 = vadd.f32 %v2031, %v2077
        %v2084 = vadd.f32 %v2032, %v2079
        %v2085 = vld [vmem:[%s2033] sm:$0xf]
        %v2086 = vld [vmem:[%s2033 + $0x4] sm:$0xf]
        %v2087 = vld [vmem:[%s2033 + $0x8] sm:$0xf]
        %v2088 = vld [vmem:[%s2033 + $0xc] sm:$0xf]
        %v2089 = vld [vmem:[%s2033 + $0x10] sm:$0x1]
        %v2090 = vld [vmem:[%s547] sm:$0xf]
        %v2091 = vld [vmem:[%s547 + $0x4] sm:$0xf]
        %v2097 = vunpack.c.l.b16 %v2085
        %v2098 = vunpack.c.l.b16 %v2086
        %v2099 = vunpack.c.l.b16 %v2087
        %v2100 = vunpack.c.l.b16 %v2088
        %v2101 = vunpack.c.l.b16 %v2089
        %v2102 = vpack.c.b16 %v2098, %v2097
        %v2103 = vpack.c.b16 %v2100, %v2099
        %v2104 = vpack.c.b16 %v2101, %v2101
        %v2106 = vshrl.u32 %v2102, 16
        %v2108 = vshll.u32 %v2102, 16
        %v2110 = vrot.slane %v2108, 1
        %v2111 = vor.u32 %v2106, %v2110
        %v2113 = vshll.u32 %v2103, 16
        %v2115 = vrot.slane %v2113, 1
        %v2116 = vsel %vm360, %v2111, %v2115
        %v2117 = vshrl.u32 %v2103, 16
        %v2119 = vor.u32 %v2117, %v2115
        %v2121 = vshll.u32 %v2104, 16
        %v2123 = vrot.slane %v2121, 1
        %v2124 = vsel %vm360, %v2119, %v2123
        %v2127 = vunpack.c.l.b16 %v2090
        %v2128 = vunpack.c.l.b16 %v2091
        %v2129 = vpack.c.b16 %v2128, %v2127
        %v2132 = vsel %vm387, %v2116, 0
        %v2135 = vsel %vm387, %v2124, 0
        %2137 = vmatpush.bf16.msra.mxu0 0
        %2138 = vmatpush.bf16.msra.mxu0 0
        %2139 = vmatpush.bf16.msra.mxu0 0
        %2140 = vmatpush.bf16.msra.mxu0 0
        %2141 = vmatpush.bf16.msra.mxu0 0
        %2142 = vmatpush.bf16.msra.mxu0 0
        %2143 = vmatpush.bf16.msra.mxu0 0
        %2144 = vmatpush.bf16.msra.mxu0 %v2129
        %2145 = vmatmul.bf16.gmra.mxu0 %v2132
        %v2146 = vpop.f32.mrf.mxu0
        %v2147 = vadd.f32 0.0, %v2146
        %v2148 = vpop.f32.mrf.mxu0
        %v2149 = vadd.f32 0.0, %v2148
        %2150 = vmatmul.bf16.gmra.mxu0 %v2135
        %v2151 = vpop.f32.mrf.mxu0
        %v2152 = vadd.f32 0.0, %v2151
        %v2153 = vpop.f32.mrf.mxu0
        %v2154 = vadd.f32 0.0, %v2153
        %2155 = vdwg.mxu0
        %v2156 = vadd.f32 %v2081, %v2147
        %v2157 = vadd.f32 %v2082, %v2149
        %v2158 = vadd.f32 %v2083, %v2152
        %v2159 = vadd.f32 %v2084, %v2154
        %v2160 = vld [vmem:[%s2033] sm:$0xe]
        %v2161 = vld [vmem:[%s619] sm:$0xf]
        %v2162 = vld [vmem:[%s619 + $0x4] sm:$0xf]
        %v2164 = vunpack.c.l.b16 %v2160
        %v2165 = vpack.c.b16 %v2098, %v2164
        %v2166 = vrot.slane %v2165, 1
        %v2167 = vrot.slane %v2103, 1
        %v2168 = vsel %vm449, %v2166, %v2167
        %v2169 = vrot.slane %v2104, 1
        %v2170 = vsel %vm449, %v2167, %v2169
        %v2173 = vunpack.c.l.b16 %v2161
        %v2174 = vunpack.c.l.b16 %v2162
        %v2175 = vpack.c.b16 %v2174, %v2173
        %v2178 = vsel %vm387, %v2168, 0
        %v2181 = vsel %vm387, %v2170, 0
        %2183 = vmatpush.bf16.msra.mxu0 0
        %2184 = vmatpush.bf16.msra.mxu0 0
        %2185 = vmatpush.bf16.msra.mxu0 0
        %2186 = vmatpush.bf16.msra.mxu0 0
        %2187 = vmatpush.bf16.msra.mxu0 0
        %2188 = vmatpush.bf16.msra.mxu0 0
        %2189 = vmatpush.bf16.msra.mxu0 0
        %2190 = vmatpush.bf16.msra.mxu0 %v2175
        %2191 = vmatmul.bf16.gmra.mxu0 %v2178
        %v2192 = vpop.f32.mrf.mxu0
        %v2193 = vadd.f32 0.0, %v2192
        %v2194 = vpop.f32.mrf.mxu0
        %v2195 = vadd.f32 0.0, %v2194
        %2196 = vmatmul.bf16.gmra.mxu0 %v2181
        %v2197 = vpop.f32.mrf.mxu0
        %v2198 = vadd.f32 0.0, %v2197
        %v2199 = vpop.f32.mrf.mxu0
        %v2200 = vadd.f32 0.0, %v2199
        %2201 = vdwg.mxu0
        %v2202 = vadd.f32 %v2156, %v2193
        %v2203 = vadd.f32 %v2157, %v2195
        %v2204 = vadd.f32 %v2158, %v2198
        %v2205 = vadd.f32 %v2159, %v2200
        %s2206 = scalar_lea.vmem %s332, 60
        %v2207 = vld [vmem:[%s2206] sm:$0xf]
        %v2208 = vld [vmem:[%s2206 + $0x4] sm:$0xf]
        %v2209 = vld [vmem:[%s2206 + $0x8] sm:$0xf]
        %v2210 = vld [vmem:[%s2206 + $0xc] sm:$0xf]
        %v2211 = vld [vmem:[%s669] sm:$0xf]
        %v2212 = vld [vmem:[%s669 + $0x4] sm:$0xf]
        %v2217 = vunpack.c.l.b16 %v2207
        %v2218 = vunpack.c.l.b16 %v2208
        %v2219 = vunpack.c.l.b16 %v2209
        %v2220 = vunpack.c.l.b16 %v2210
        %v2221 = vpack.c.b16 %v2218, %v2217
        %v2222 = vpack.c.b16 %v2220, %v2219
        %v2225 = vunpack.c.l.b16 %v2211
        %v2226 = vunpack.c.l.b16 %v2212
        %v2227 = vpack.c.b16 %v2226, %v2225
        %v2230 = vsel %vm387, %v2221, 0
        %v2233 = vsel %vm387, %v2222, 0
        %2235 = vmatpush.bf16.msra.mxu0 0
        %2236 = vmatpush.bf16.msra.mxu0 0
        %2237 = vmatpush.bf16.msra.mxu0 0
        %2238 = vmatpush.bf16.msra.mxu0 0
        %2239 = vmatpush.bf16.msra.mxu0 0
        %2240 = vmatpush.bf16.msra.mxu0 0
        %2241 = vmatpush.bf16.msra.mxu0 0
        %2242 = vmatpush.bf16.msra.mxu0 %v2227
        %2243 = vmatmul.bf16.gmra.mxu0 %v2230
        %v2244 = vpop.f32.mrf.mxu0
        %v2245 = vadd.f32 0.0, %v2244
        %v2246 = vpop.f32.mrf.mxu0
        %v2247 = vadd.f32 0.0, %v2246
        %2248 = vmatmul.bf16.gmra.mxu0 %v2233
        %v2249 = vpop.f32.mrf.mxu0
        %v2250 = vadd.f32 0.0, %v2249
        %v2251 = vpop.f32.mrf.mxu0
        %v2252 = vadd.f32 0.0, %v2251
        %2253 = vdwg.mxu0
        %v2254 = vadd.f32 %v2202, %v2245
        %v2255 = vadd.f32 %v2203, %v2247
        %v2256 = vadd.f32 %v2204, %v2250
        %v2257 = vadd.f32 %v2205, %v2252
        %v2258 = vld [vmem:[%s2206] sm:$0xf]
        %v2259 = vld [vmem:[%s2206 + $0x4] sm:$0xf]
        %v2260 = vld [vmem:[%s2206 + $0x8] sm:$0xf]
        %v2261 = vld [vmem:[%s2206 + $0xc] sm:$0xf]
        %v2262 = vld [vmem:[%s2206 + $0x10] sm:$0x1]
        %v2263 = vld [vmem:[%s722] sm:$0xf]
        %v2264 = vld [vmem:[%s722 + $0x4] sm:$0xf]
        %v2270 = vunpack.c.l.b16 %v2258
        %v2271 = vunpack.c.l.b16 %v2259
        %v2272 = vunpack.c.l.b16 %v2260
        %v2273 = vunpack.c.l.b16 %v2261
        %v2274 = vunpack.c.l.b16 %v2262
        %v2275 = vpack.c.b16 %v2271, %v2270
        %v2276 = vpack.c.b16 %v2273, %v2272
        %v2277 = vpack.c.b16 %v2274, %v2274
        %v2279 = vshrl.u32 %v2275, 16
        %v2281 = vshll.u32 %v2275, 16
        %v2283 = vrot.slane %v2281, 1
        %v2284 = vor.u32 %v2279, %v2283
        %v2286 = vshll.u32 %v2276, 16
        %v2288 = vrot.slane %v2286, 1
        %v2289 = vsel %vm360, %v2284, %v2288
        %v2290 = vshrl.u32 %v2276, 16
        %v2292 = vor.u32 %v2290, %v2288
        %v2294 = vshll.u32 %v2277, 16
        %v2296 = vrot.slane %v2294, 1
        %v2297 = vsel %vm360, %v2292, %v2296
        %v2300 = vunpack.c.l.b16 %v2263
        %v2301 = vunpack.c.l.b16 %v2264
        %v2302 = vpack.c.b16 %v2301, %v2300
        %v2305 = vsel %vm387, %v2289, 0
        %v2308 = vsel %vm387, %v2297, 0
        %2310 = vmatpush.bf16.msra.mxu0 0
        %2311 = vmatpush.bf16.msra.mxu0 0
        %2312 = vmatpush.bf16.msra.mxu0 0
        %2313 = vmatpush.bf16.msra.mxu0 0
        %2314 = vmatpush.bf16.msra.mxu0 0
        %2315 = vmatpush.bf16.msra.mxu0 0
        %2316 = vmatpush.bf16.msra.mxu0 0
        %2317 = vmatpush.bf16.msra.mxu0 %v2302
        %2318 = vmatmul.bf16.gmra.mxu0 %v2305
        %v2319 = vpop.f32.mrf.mxu0
        %v2320 = vadd.f32 0.0, %v2319
        %v2321 = vpop.f32.mrf.mxu0
        %v2322 = vadd.f32 0.0, %v2321
        %2323 = vmatmul.bf16.gmra.mxu0 %v2308
        %v2324 = vpop.f32.mrf.mxu0
        %v2325 = vadd.f32 0.0, %v2324
        %v2326 = vpop.f32.mrf.mxu0
        %v2327 = vadd.f32 0.0, %v2326
        %2328 = vdwg.mxu0
        %v2329 = vadd.f32 %v2254, %v2320
        %v2330 = vadd.f32 %v2255, %v2322
        %v2331 = vadd.f32 %v2256, %v2325
        %v2332 = vadd.f32 %v2257, %v2327
        %v2333 = vld [vmem:[%s2206] sm:$0xe]
        %v2334 = vld [vmem:[%s794] sm:$0xf]
        %v2335 = vld [vmem:[%s794 + $0x4] sm:$0xf]
        %v2337 = vunpack.c.l.b16 %v2333
        %v2338 = vpack.c.b16 %v2271, %v2337
        %v2339 = vrot.slane %v2338, 1
        %v2340 = vrot.slane %v2276, 1
        %v2341 = vsel %vm449, %v2339, %v2340
        %v2342 = vrot.slane %v2277, 1
        %v2343 = vsel %vm449, %v2340, %v2342
        %v2346 = vunpack.c.l.b16 %v2334
        %v2347 = vunpack.c.l.b16 %v2335
        %v2348 = vpack.c.b16 %v2347, %v2346
        %v2351 = vsel %vm387, %v2341, 0
        %v2354 = vsel %vm387, %v2343, 0
        %2356 = vmatpush.bf16.msra.mxu0 0
        %2357 = vmatpush.bf16.msra.mxu0 0
        %2358 = vmatpush.bf16.msra.mxu0 0
        %2359 = vmatpush.bf16.msra.mxu0 0
        %2360 = vmatpush.bf16.msra.mxu0 0
        %2361 = vmatpush.bf16.msra.mxu0 0
        %2362 = vmatpush.bf16.msra.mxu0 0
        %2363 = vmatpush.bf16.msra.mxu0 %v2348
        %2364 = vmatmul.bf16.gmra.mxu0 %v2351
        %v2365 = vpop.f32.mrf.mxu0
        %v2366 = vadd.f32 0.0, %v2365
        %v2367 = vpop.f32.mrf.mxu0
        %v2368 = vadd.f32 0.0, %v2367
        %2369 = vmatmul.bf16.gmra.mxu0 %v2354
        %v2370 = vpop.f32.mrf.mxu0
        %v2371 = vadd.f32 0.0, %v2370
        %v2372 = vpop.f32.mrf.mxu0
        %v2373 = vadd.f32 0.0, %v2372
        %2374 = vdwg.mxu0
        %v2375 = vadd.f32 %v2329, %v2366
        %v2376 = vadd.f32 %v2330, %v2368
        %v2377 = vadd.f32 %v2331, %v2371
        %v2378 = vadd.f32 %v2332, %v2373
        %v2379 = vadd.f32 %v2375, %v841
        %v2380 = vadd.f32 %v2376, %v841
        %v2381 = vadd.f32 %v2377, %v841
        %v2382 = vadd.f32 %v2378, %v841
        %v2383 = vmax.f32 %v2379, 0.0
        %v2384 = vmax.f32 %v2380, 0.0
        %v2385 = vmax.f32 %v2381, 0.0
        %v2386 = vmax.f32 %v2382, 0.0
        %v2387 = vpack.c.bf16 %v2383, %v2383
        %v2388 = vpack.c.bf16 %v2384, %v2384
        %v2389 = vpack.c.bf16 %v2385, %v2385
        %v2390 = vpack.c.bf16 %v2386, %v2386
        %s2391 = scalar_lea.vmem %s300, 48 [#allocation2]
        %2392 = vst.msk [vmem:[%s2391] sm:$0xf] %vm855, %v2387
        %2393 = vst.msk [vmem:[%s2391 + $0x4] sm:$0xf] %vm855, %v2388
        %2394 = vst.msk [vmem:[%s2391 + $0x8] sm:$0xf] %vm855, %v2389
        %2395 = vst.msk [vmem:[%s2391 + $0xc] sm:$0xf] %vm855, %v2390
        %s2396 = scalar_lea.vmem %s310, 80
        %v2397 = vld [vmem:[%s2396] sm:$0xf]
        %v2398 = vld [vmem:[%s2396 + $0x4] sm:$0xf]
        %v2399 = vld [vmem:[%s2396 + $0x8] sm:$0xf]
        %v2400 = vld [vmem:[%s2396 + $0xc] sm:$0xf]
        %v2401 = vld [vmem:[%s3] sm:$0xf]
        %v2402 = vld [vmem:[%s3 + $0x4] sm:$0xf]
        %v2403 = vld [vmem:[%s2396 + $0x10] sm:$0x1]
        %v2404 = vld [vmem:[%s344] sm:$0xf]
        %v2405 = vld [vmem:[%s344 + $0x4] sm:$0xf]
        %v2411 = vunpack.c.l.b16 %v2397
        %v2412 = vunpack.c.l.b16 %v2398
        %v2413 = vunpack.c.l.b16 %v2399
        %v2414 = vunpack.c.l.b16 %v2400
        %v2415 = vunpack.c.l.b16 %v2403
        %v2416 = vpack.c.b16 %v2412, %v2411
        %v2417 = vpack.c.b16 %v2414, %v2413
        %v2418 = vpack.c.b16 %v2415, %v2415
        %v2420 = vshrl.u32 %v2416, 16
        %v2422 = vshll.u32 %v2416, 16
        %v2424 = vrot.slane %v2422, 1
        %v2425 = vor.u32 %v2420, %v2424
        %v2427 = vshll.u32 %v2417, 16
        %v2429 = vrot.slane %v2427, 1
        %v2430 = vsel %vm360, %v2425, %v2429
        %v2431 = vshrl.u32 %v2417, 16
        %v2433 = vor.u32 %v2431, %v2429
        %v2435 = vshll.u32 %v2418, 16
        %v2437 = vrot.slane %v2435, 1
        %v2438 = vsel %vm360, %v2433, %v2437
        %v2441 = vunpack.c.l.b16 %v2404
        %v2442 = vunpack.c.l.b16 %v2405
        %v2443 = vpack.c.b16 %v2442, %v2441
        %v2446 = vsel %vm387, %v2430, 0
        %v2449 = vsel %vm387, %v2438, 0
        %2451 = vmatpush.bf16.msra.mxu0 0
        %2452 = vmatpush.bf16.msra.mxu0 0
        %2453 = vmatpush.bf16.msra.mxu0 0
        %2454 = vmatpush.bf16.msra.mxu0 0
        %2455 = vmatpush.bf16.msra.mxu0 0
        %2456 = vmatpush.bf16.msra.mxu0 0
        %2457 = vmatpush.bf16.msra.mxu0 0
        %2458 = vmatpush.bf16.msra.mxu0 %v2443
        %2459 = vmatmul.bf16.gmra.mxu0 %v2446
        %v2460 = vpop.f32.mrf.mxu0
        %v2461 = vadd.f32 0.0, %v2460
        %v2462 = vpop.f32.mrf.mxu0
        %v2463 = vadd.f32 0.0, %v2462
        %2464 = vmatmul.bf16.gmra.mxu0 %v2449
        %v2465 = vpop.f32.mrf.mxu0
        %v2466 = vadd.f32 0.0, %v2465
        %v2467 = vpop.f32.mrf.mxu0
        %v2468 = vadd.f32 0.0, %v2467
        %2469 = vdwg.mxu0
        %v2472 = vunpack.c.l.b16 %v2401
        %v2473 = vunpack.c.l.b16 %v2402
        %v2474 = vpack.c.b16 %v2473, %v2472
        %v2476 = vsel %vm387, %v2416, 0
        %v2478 = vsel %vm387, %v2417, 0
        %2480 = vmatpush.bf16.msra.mxu0 0
        %2481 = vmatpush.bf16.msra.mxu0 0
        %2482 = vmatpush.bf16.msra.mxu0 0
        %2483 = vmatpush.bf16.msra.mxu0 0
        %2484 = vmatpush.bf16.msra.mxu0 0
        %2485 = vmatpush.bf16.msra.mxu0 0
        %2486 = vmatpush.bf16.msra.mxu0 0
        %2487 = vmatpush.bf16.msra.mxu0 %v2474
        %2488 = vmatmul.bf16.gmra.mxu0 %v2476
        %v2489 = vpop.f32.mrf.mxu0
        %v2490 = vadd.f32 %v2461, %v2489
        %v2491 = vpop.f32.mrf.mxu0
        %v2492 = vadd.f32 %v2463, %v2491
        %2493 = vmatmul.bf16.gmra.mxu0 %v2478
        %v2494 = vpop.f32.mrf.mxu0
        %v2495 = vadd.f32 %v2466, %v2494
        %v2496 = vpop.f32.mrf.mxu0
        %v2497 = vadd.f32 %v2468, %v2496
        %2498 = vdwg.mxu0
        %v2499 = vld [vmem:[%s2396] sm:$0xe]
        %v2500 = vld [vmem:[%s443] sm:$0xf]
        %v2501 = vld [vmem:[%s443 + $0x4] sm:$0xf]
        %v2503 = vunpack.c.l.b16 %v2499
        %v2504 = vpack.c.b16 %v2412, %v2503
        %v2505 = vrot.slane %v2504, 1
        %v2506 = vrot.slane %v2417, 1
        %v2507 = vsel %vm449, %v2505, %v2506
        %v2508 = vrot.slane %v2418, 1
        %v2509 = vsel %vm449, %v2506, %v2508
        %v2512 = vunpack.c.l.b16 %v2500
        %v2513 = vunpack.c.l.b16 %v2501
        %v2514 = vpack.c.b16 %v2513, %v2512
        %v2517 = vsel %vm387, %v2507, 0
        %v2520 = vsel %vm387, %v2509, 0
        %2522 = vmatpush.bf16.msra.mxu0 0
        %2523 = vmatpush.bf16.msra.mxu0 0
        %2524 = vmatpush.bf16.msra.mxu0 0
        %2525 = vmatpush.bf16.msra.mxu0 0
        %2526 = vmatpush.bf16.msra.mxu0 0
        %2527 = vmatpush.bf16.msra.mxu0 0
        %2528 = vmatpush.bf16.msra.mxu0 0
        %2529 = vmatpush.bf16.msra.mxu0 %v2514
        %2530 = vmatmul.bf16.gmra.mxu0 %v2517
        %v2531 = vpop.f32.mrf.mxu0
        %v2532 = vadd.f32 0.0, %v2531
        %v2533 = vpop.f32.mrf.mxu0
        %v2534 = vadd.f32 0.0, %v2533
        %2535 = vmatmul.bf16.gmra.mxu0 %v2520
        %v2536 = vpop.f32.mrf.mxu0
        %v2537 = vadd.f32 0.0, %v2536
        %v2538 = vpop.f32.mrf.mxu0
        %v2539 = vadd.f32 0.0, %v2538
        %2540 = vdwg.mxu0
        %v2541 = vadd.f32 %v2490, %v2532
        %v2542 = vadd.f32 %v2492, %v2534
        %v2543 = vadd.f32 %v2495, %v2537
        %v2544 = vadd.f32 %v2497, %v2539
        %s2545 = scalar_lea.vmem %s321, 80
        %v2546 = vld [vmem:[%s2545] sm:$0xf]
        %v2547 = vld [vmem:[%s2545 + $0x4] sm:$0xf]
        %v2548 = vld [vmem:[%s2545 + $0x8] sm:$0xf]
        %v2549 = vld [vmem:[%s2545 + $0xc] sm:$0xf]
        %v2550 = vld [vmem:[%s494] sm:$0xf]
        %v2551 = vld [vmem:[%s494 + $0x4] sm:$0xf]
        %v2556 = vunpack.c.l.b16 %v2546
        %v2557 = vunpack.c.l.b16 %v2547
        %v2558 = vunpack.c.l.b16 %v2548
        %v2559 = vunpack.c.l.b16 %v2549
        %v2560 = vpack.c.b16 %v2557, %v2556
        %v2561 = vpack.c.b16 %v2559, %v2558
        %v2564 = vunpack.c.l.b16 %v2550
        %v2565 = vunpack.c.l.b16 %v2551
        %v2566 = vpack.c.b16 %v2565, %v2564
        %v2569 = vsel %vm387, %v2560, 0
        %v2572 = vsel %vm387, %v2561, 0
        %2574 = vmatpush.bf16.msra.mxu0 0
        %2575 = vmatpush.bf16.msra.mxu0 0
        %2576 = vmatpush.bf16.msra.mxu0 0
        %2577 = vmatpush.bf16.msra.mxu0 0
        %2578 = vmatpush.bf16.msra.mxu0 0
        %2579 = vmatpush.bf16.msra.mxu0 0
        %2580 = vmatpush.bf16.msra.mxu0 0
        %2581 = vmatpush.bf16.msra.mxu0 %v2566
        %2582 = vmatmul.bf16.gmra.mxu0 %v2569
        %v2583 = vpop.f32.mrf.mxu0
        %v2584 = vadd.f32 0.0, %v2583
        %v2585 = vpop.f32.mrf.mxu0
        %v2586 = vadd.f32 0.0, %v2585
        %2587 = vmatmul.bf16.gmra.mxu0 %v2572
        %v2588 = vpop.f32.mrf.mxu0
        %v2589 = vadd.f32 0.0, %v2588
        %v2590 = vpop.f32.mrf.mxu0
        %v2591 = vadd.f32 0.0, %v2590
        %2592 = vdwg.mxu0
        %v2593 = vadd.f32 %v2541, %v2584
        %v2594 = vadd.f32 %v2542, %v2586
        %v2595 = vadd.f32 %v2543, %v2589
        %v2596 = vadd.f32 %v2544, %v2591
        %v2597 = vld [vmem:[%s2545] sm:$0xf]
        %v2598 = vld [vmem:[%s2545 + $0x4] sm:$0xf]
        %v2599 = vld [vmem:[%s2545 + $0x8] sm:$0xf]
        %v2600 = vld [vmem:[%s2545 + $0xc] sm:$0xf]
        %v2601 = vld [vmem:[%s2545 + $0x10] sm:$0x1]
        %v2602 = vld [vmem:[%s547] sm:$0xf]
        %v2603 = vld [vmem:[%s547 + $0x4] sm:$0xf]
        %v2609 = vunpack.c.l.b16 %v2597
        %v2610 = vunpack.c.l.b16 %v2598
        %v2611 = vunpack.c.l.b16 %v2599
        %v2612 = vunpack.c.l.b16 %v2600
        %v2613 = vunpack.c.l.b16 %v2601
        %v2614 = vpack.c.b16 %v2610, %v2609
        %v2615 = vpack.c.b16 %v2612, %v2611
        %v2616 = vpack.c.b16 %v2613, %v2613
        %v2618 = vshrl.u32 %v2614, 16
        %v2620 = vshll.u32 %v2614, 16
        %v2622 = vrot.slane %v2620, 1
        %v2623 = vor.u32 %v2618, %v2622
        %v2625 = vshll.u32 %v2615, 16
        %v2627 = vrot.slane %v2625, 1
        %v2628 = vsel %vm360, %v2623, %v2627
        %v2629 = vshrl.u32 %v2615, 16
        %v2631 = vor.u32 %v2629, %v2627
        %v2633 = vshll.u32 %v2616, 16
        %v2635 = vrot.slane %v2633, 1
        %v2636 = vsel %vm360, %v2631, %v2635
        %v2639 = vunpack.c.l.b16 %v2602
        %v2640 = vunpack.c.l.b16 %v2603
        %v2641 = vpack.c.b16 %v2640, %v2639
        %v2644 = vsel %vm387, %v2628, 0
        %v2647 = vsel %vm387, %v2636, 0
        %2649 = vmatpush.bf16.msra.mxu0 0
        %2650 = vmatpush.bf16.msra.mxu0 0
        %2651 = vmatpush.bf16.msra.mxu0 0
        %2652 = vmatpush.bf16.msra.mxu0 0
        %2653 = vmatpush.bf16.msra.mxu0 0
        %2654 = vmatpush.bf16.msra.mxu0 0
        %2655 = vmatpush.bf16.msra.mxu0 0
        %2656 = vmatpush.bf16.msra.mxu0 %v2641
        %2657 = vmatmul.bf16.gmra.mxu0 %v2644
        %v2658 = vpop.f32.mrf.mxu0
        %v2659 = vadd.f32 0.0, %v2658
        %v2660 = vpop.f32.mrf.mxu0
        %v2661 = vadd.f32 0.0, %v2660
        %2662 = vmatmul.bf16.gmra.mxu0 %v2647
        %v2663 = vpop.f32.mrf.mxu0
        %v2664 = vadd.f32 0.0, %v2663
        %v2665 = vpop.f32.mrf.mxu0
        %v2666 = vadd.f32 0.0, %v2665
        %2667 = vdwg.mxu0
        %v2668 = vadd.f32 %v2593, %v2659
        %v2669 = vadd.f32 %v2594, %v2661
        %v2670 = vadd.f32 %v2595, %v2664
        %v2671 = vadd.f32 %v2596, %v2666
        %v2672 = vld [vmem:[%s2545] sm:$0xe]
        %v2673 = vld [vmem:[%s619] sm:$0xf]
        %v2674 = vld [vmem:[%s619 + $0x4] sm:$0xf]
        %v2676 = vunpack.c.l.b16 %v2672
        %v2677 = vpack.c.b16 %v2610, %v2676
        %v2678 = vrot.slane %v2677, 1
        %v2679 = vrot.slane %v2615, 1
        %v2680 = vsel %vm449, %v2678, %v2679
        %v2681 = vrot.slane %v2616, 1
        %v2682 = vsel %vm449, %v2679, %v2681
        %v2685 = vunpack.c.l.b16 %v2673
        %v2686 = vunpack.c.l.b16 %v2674
        %v2687 = vpack.c.b16 %v2686, %v2685
        %v2690 = vsel %vm387, %v2680, 0
        %v2693 = vsel %vm387, %v2682, 0
        %2695 = vmatpush.bf16.msra.mxu0 0
        %2696 = vmatpush.bf16.msra.mxu0 0
        %2697 = vmatpush.bf16.msra.mxu0 0
        %2698 = vmatpush.bf16.msra.mxu0 0
        %2699 = vmatpush.bf16.msra.mxu0 0
        %2700 = vmatpush.bf16.msra.mxu0 0
        %2701 = vmatpush.bf16.msra.mxu0 0
        %2702 = vmatpush.bf16.msra.mxu0 %v2687
        %2703 = vmatmul.bf16.gmra.mxu0 %v2690
        %v2704 = vpop.f32.mrf.mxu0
        %v2705 = vadd.f32 0.0, %v2704
        %v2706 = vpop.f32.mrf.mxu0
        %v2707 = vadd.f32 0.0, %v2706
        %2708 = vmatmul.bf16.gmra.mxu0 %v2693
        %v2709 = vpop.f32.mrf.mxu0
        %v2710 = vadd.f32 0.0, %v2709
        %v2711 = vpop.f32.mrf.mxu0
        %v2712 = vadd.f32 0.0, %v2711
        %2713 = vdwg.mxu0
        %v2714 = vadd.f32 %v2668, %v2705
        %v2715 = vadd.f32 %v2669, %v2707
        %v2716 = vadd.f32 %v2670, %v2710
        %v2717 = vadd.f32 %v2671, %v2712
        %s2718 = scalar_lea.vmem %s332, 80
        %v2719 = vld [vmem:[%s2718] sm:$0xf]
        %v2720 = vld [vmem:[%s2718 + $0x4] sm:$0xf]
        %v2721 = vld [vmem:[%s2718 + $0x8] sm:$0xf]
        %v2722 = vld [vmem:[%s2718 + $0xc] sm:$0xf]
        %v2723 = vld [vmem:[%s669] sm:$0xf]
        %v2724 = vld [vmem:[%s669 + $0x4] sm:$0xf]
        %v2729 = vunpack.c.l.b16 %v2719
        %v2730 = vunpack.c.l.b16 %v2720
        %v2731 = vunpack.c.l.b16 %v2721
        %v2732 = vunpack.c.l.b16 %v2722
        %v2733 = vpack.c.b16 %v2730, %v2729
        %v2734 = vpack.c.b16 %v2732, %v2731
        %v2737 = vunpack.c.l.b16 %v2723
        %v2738 = vunpack.c.l.b16 %v2724
        %v2739 = vpack.c.b16 %v2738, %v2737
        %v2742 = vsel %vm387, %v2733, 0
        %v2745 = vsel %vm387, %v2734, 0
        %2747 = vmatpush.bf16.msra.mxu0 0
        %2748 = vmatpush.bf16.msra.mxu0 0
        %2749 = vmatpush.bf16.msra.mxu0 0
        %2750 = vmatpush.bf16.msra.mxu0 0
        %2751 = vmatpush.bf16.msra.mxu0 0
        %2752 = vmatpush.bf16.msra.mxu0 0
        %2753 = vmatpush.bf16.msra.mxu0 0
        %2754 = vmatpush.bf16.msra.mxu0 %v2739
        %2755 = vmatmul.bf16.gmra.mxu0 %v2742
        %v2756 = vpop.f32.mrf.mxu0
        %v2757 = vadd.f32 0.0, %v2756
        %v2758 = vpop.f32.mrf.mxu0
        %v2759 = vadd.f32 0.0, %v2758
        %2760 = vmatmul.bf16.gmra.mxu0 %v2745
        %v2761 = vpop.f32.mrf.mxu0
        %v2762 = vadd.f32 0.0, %v2761
        %v2763 = vpop.f32.mrf.mxu0
        %v2764 = vadd.f32 0.0, %v2763
        %2765 = vdwg.mxu0
        %v2766 = vadd.f32 %v2714, %v2757
        %v2767 = vadd.f32 %v2715, %v2759
        %v2768 = vadd.f32 %v2716, %v2762
        %v2769 = vadd.f32 %v2717, %v2764
        %v2770 = vld [vmem:[%s2718] sm:$0xf]
        %v2771 = vld [vmem:[%s2718 + $0x4] sm:$0xf]
        %v2772 = vld [vmem:[%s2718 + $0x8] sm:$0xf]
        %v2773 = vld [vmem:[%s2718 + $0xc] sm:$0xf]
        %v2774 = vld [vmem:[%s2718 + $0x10] sm:$0x1]
        %v2775 = vld [vmem:[%s722] sm:$0xf]
        %v2776 = vld [vmem:[%s722 + $0x4] sm:$0xf]
        %v2782 = vunpack.c.l.b16 %v2770
        %v2783 = vunpack.c.l.b16 %v2771
        %v2784 = vunpack.c.l.b16 %v2772
        %v2785 = vunpack.c.l.b16 %v2773
        %v2786 = vunpack.c.l.b16 %v2774
        %v2787 = vpack.c.b16 %v2783, %v2782
        %v2788 = vpack.c.b16 %v2785, %v2784
        %v2789 = vpack.c.b16 %v2786, %v2786
        %v2791 = vshrl.u32 %v2787, 16
        %v2793 = vshll.u32 %v2787, 16
        %v2795 = vrot.slane %v2793, 1
        %v2796 = vor.u32 %v2791, %v2795
        %v2798 = vshll.u32 %v2788, 16
        %v2800 = vrot.slane %v2798, 1
        %v2801 = vsel %vm360, %v2796, %v2800
        %v2802 = vshrl.u32 %v2788, 16
        %v2804 = vor.u32 %v2802, %v2800
        %v2806 = vshll.u32 %v2789, 16
        %v2808 = vrot.slane %v2806, 1
        %v2809 = vsel %vm360, %v2804, %v2808
        %v2812 = vunpack.c.l.b16 %v2775
        %v2813 = vunpack.c.l.b16 %v2776
        %v2814 = vpack.c.b16 %v2813, %v2812
        %v2817 = vsel %vm387, %v2801, 0
        %v2820 = vsel %vm387, %v2809, 0
        %2822 = vmatpush.bf16.msra.mxu0 0
        %2823 = vmatpush.bf16.msra.mxu0 0
        %2824 = vmatpush.bf16.msra.mxu0 0
        %2825 = vmatpush.bf16.msra.mxu0 0
        %2826 = vmatpush.bf16.msra.mxu0 0
        %2827 = vmatpush.bf16.msra.mxu0 0
        %2828 = vmatpush.bf16.msra.mxu0 0
        %2829 = vmatpush.bf16.msra.mxu0 %v2814
        %2830 = vmatmul.bf16.gmra.mxu0 %v2817
        %v2831 = vpop.f32.mrf.mxu0
        %v2832 = vadd.f32 0.0, %v2831
        %v2833 = vpop.f32.mrf.mxu0
        %v2834 = vadd.f32 0.0, %v2833
        %2835 = vmatmul.bf16.gmra.mxu0 %v2820
        %v2836 = vpop.f32.mrf.mxu0
        %v2837 = vadd.f32 0.0, %v2836
        %v2838 = vpop.f32.mrf.mxu0
        %v2839 = vadd.f32 0.0, %v2838
        %2840 = vdwg.mxu0
        %v2841 = vadd.f32 %v2766, %v2832
        %v2842 = vadd.f32 %v2767, %v2834
        %v2843 = vadd.f32 %v2768, %v2837
        %v2844 = vadd.f32 %v2769, %v2839
        %v2845 = vld [vmem:[%s2718] sm:$0xe]
        %v2846 = vld [vmem:[%s794] sm:$0xf]
        %v2847 = vld [vmem:[%s794 + $0x4] sm:$0xf]
        %v2849 = vunpack.c.l.b16 %v2845
        %v2850 = vpack.c.b16 %v2783, %v2849
        %v2851 = vrot.slane %v2850, 1
        %v2852 = vrot.slane %v2788, 1
        %v2853 = vsel %vm449, %v2851, %v2852
        %v2854 = vrot.slane %v2789, 1
        %v2855 = vsel %vm449, %v2852, %v2854
        %v2858 = vunpack.c.l.b16 %v2846
        %v2859 = vunpack.c.l.b16 %v2847
        %v2860 = vpack.c.b16 %v2859, %v2858
        %v2863 = vsel %vm387, %v2853, 0
        %v2866 = vsel %vm387, %v2855, 0
        %2868 = vmatpush.bf16.msra.mxu0 0
        %2869 = vmatpush.bf16.msra.mxu0 0
        %2870 = vmatpush.bf16.msra.mxu0 0
        %2871 = vmatpush.bf16.msra.mxu0 0
        %2872 = vmatpush.bf16.msra.mxu0 0
        %2873 = vmatpush.bf16.msra.mxu0 0
        %2874 = vmatpush.bf16.msra.mxu0 0
        %2875 = vmatpush.bf16.msra.mxu0 %v2860
        %2876 = vmatmul.bf16.gmra.mxu0 %v2863
        %v2877 = vpop.f32.mrf.mxu0
        %v2878 = vadd.f32 0.0, %v2877
        %v2879 = vpop.f32.mrf.mxu0
        %v2880 = vadd.f32 0.0, %v2879
        %2881 = vmatmul.bf16.gmra.mxu0 %v2866
        %v2882 = vpop.f32.mrf.mxu0
        %v2883 = vadd.f32 0.0, %v2882
        %v2884 = vpop.f32.mrf.mxu0
        %v2885 = vadd.f32 0.0, %v2884
        %2886 = vdwg.mxu0
        %v2887 = vadd.f32 %v2841, %v2878
        %v2888 = vadd.f32 %v2842, %v2880
        %v2889 = vadd.f32 %v2843, %v2883
        %v2890 = vadd.f32 %v2844, %v2885
        %v2891 = vadd.f32 %v2887, %v841
        %v2892 = vadd.f32 %v2888, %v841
        %v2893 = vadd.f32 %v2889, %v841
        %v2894 = vadd.f32 %v2890, %v841
        %v2895 = vmax.f32 %v2891, 0.0
        %v2896 = vmax.f32 %v2892, 0.0
        %v2897 = vmax.f32 %v2893, 0.0
        %v2898 = vmax.f32 %v2894, 0.0
        %v2899 = vpack.c.bf16 %v2895, %v2895
        %v2900 = vpack.c.bf16 %v2896, %v2896
        %v2901 = vpack.c.bf16 %v2897, %v2897
        %v2902 = vpack.c.bf16 %v2898, %v2898
        %s2903 = scalar_lea.vmem %s300, 64 [#allocation2]
        %2904 = vst.msk [vmem:[%s2903] sm:$0xf] %vm855, %v2899
        %2905 = vst.msk [vmem:[%s2903 + $0x4] sm:$0xf] %vm855, %v2900
        %2906 = vst.msk [vmem:[%s2903 + $0x8] sm:$0xf] %vm855, %v2901
        %2907 = vst.msk [vmem:[%s2903 + $0xc] sm:$0xf] %vm855, %v2902
        %s2908 = scalar_lea.vmem %s310, 100
        %v2909 = vld [vmem:[%s2908] sm:$0xf]
        %v2910 = vld [vmem:[%s2908 + $0x4] sm:$0xf]
        %v2911 = vld [vmem:[%s2908 + $0x8] sm:$0xf]
        %v2912 = vld [vmem:[%s2908 + $0xc] sm:$0xf]
        %v2913 = vld [vmem:[%s3] sm:$0xf]
        %v2914 = vld [vmem:[%s3 + $0x4] sm:$0xf]
        %v2915 = vld [vmem:[%s2908 + $0x10] sm:$0x1]
        %v2916 = vld [vmem:[%s344] sm:$0xf]
        %v2917 = vld [vmem:[%s344 + $0x4] sm:$0xf]
        %v2923 = vunpack.c.l.b16 %v2909
        %v2924 = vunpack.c.l.b16 %v2910
        %v2925 = vunpack.c.l.b16 %v2911
        %v2926 = vunpack.c.l.b16 %v2912
        %v2927 = vunpack.c.l.b16 %v2915
        %v2928 = vpack.c.b16 %v2924, %v2923
        %v2929 = vpack.c.b16 %v2926, %v2925
        %v2930 = vpack.c.b16 %v2927, %v2927
        %v2932 = vshrl.u32 %v2928, 16
        %v2934 = vshll.u32 %v2928, 16
        %v2936 = vrot.slane %v2934, 1
        %v2937 = vor.u32 %v2932, %v2936
        %v2939 = vshll.u32 %v2929, 16
        %v2941 = vrot.slane %v2939, 1
        %v2942 = vsel %vm360, %v2937, %v2941
        %v2943 = vshrl.u32 %v2929, 16
        %v2945 = vor.u32 %v2943, %v2941
        %v2947 = vshll.u32 %v2930, 16
        %v2949 = vrot.slane %v2947, 1
        %v2950 = vsel %vm360, %v2945, %v2949
        %v2953 = vunpack.c.l.b16 %v2916
        %v2954 = vunpack.c.l.b16 %v2917
        %v2955 = vpack.c.b16 %v2954, %v2953
        %v2958 = vsel %vm387, %v2942, 0
        %v2961 = vsel %vm387, %v2950, 0
        %2963 = vmatpush.bf16.msra.mxu0 0
        %2964 = vmatpush.bf16.msra.mxu0 0
        %2965 = vmatpush.bf16.msra.mxu0 0
        %2966 = vmatpush.bf16.msra.mxu0 0
        %2967 = vmatpush.bf16.msra.mxu0 0
        %2968 = vmatpush.bf16.msra.mxu0 0
        %2969 = vmatpush.bf16.msra.mxu0 0
        %2970 = vmatpush.bf16.msra.mxu0 %v2955
        %2971 = vmatmul.bf16.gmra.mxu0 %v2958
        %v2972 = vpop.f32.mrf.mxu0
        %v2973 = vadd.f32 0.0, %v2972
        %v2974 = vpop.f32.mrf.mxu0
        %v2975 = vadd.f32 0.0, %v2974
        %2976 = vmatmul.bf16.gmra.mxu0 %v2961
        %v2977 = vpop.f32.mrf.mxu0
        %v2978 = vadd.f32 0.0, %v2977
        %v2979 = vpop.f32.mrf.mxu0
        %v2980 = vadd.f32 0.0, %v2979
        %2981 = vdwg.mxu0
        %v2984 = vunpack.c.l.b16 %v2913
        %v2985 = vunpack.c.l.b16 %v2914
        %v2986 = vpack.c.b16 %v2985, %v2984
        %v2988 = vsel %vm387, %v2928, 0
        %v2990 = vsel %vm387, %v2929, 0
        %2992 = vmatpush.bf16.msra.mxu0 0
        %2993 = vmatpush.bf16.msra.mxu0 0
        %2994 = vmatpush.bf16.msra.mxu0 0
        %2995 = vmatpush.bf16.msra.mxu0 0
        %2996 = vmatpush.bf16.msra.mxu0 0
        %2997 = vmatpush.bf16.msra.mxu0 0
        %2998 = vmatpush.bf16.msra.mxu0 0
        %2999 = vmatpush.bf16.msra.mxu0 %v2986
        %3000 = vmatmul.bf16.gmra.mxu0 %v2988
        %v3001 = vpop.f32.mrf.mxu0
        %v3002 = vadd.f32 %v2973, %v3001
        %v3003 = vpop.f32.mrf.mxu0
        %v3004 = vadd.f32 %v2975, %v3003
        %3005 = vmatmul.bf16.gmra.mxu0 %v2990
        %v3006 = vpop.f32.mrf.mxu0
        %v3007 = vadd.f32 %v2978, %v3006
        %v3008 = vpop.f32.mrf.mxu0
        %v3009 = vadd.f32 %v2980, %v3008
        %3010 = vdwg.mxu0
        %v3011 = vld [vmem:[%s2908] sm:$0xe]
        %v3012 = vld [vmem:[%s443] sm:$0xf]
        %v3013 = vld [vmem:[%s443 + $0x4] sm:$0xf]
        %v3015 = vunpack.c.l.b16 %v3011
        %v3016 = vpack.c.b16 %v2924, %v3015
        %v3017 = vrot.slane %v3016, 1
        %v3018 = vrot.slane %v2929, 1
        %v3019 = vsel %vm449, %v3017, %v3018
        %v3020 = vrot.slane %v2930, 1
        %v3021 = vsel %vm449, %v3018, %v3020
        %v3024 = vunpack.c.l.b16 %v3012
        %v3025 = vunpack.c.l.b16 %v3013
        %v3026 = vpack.c.b16 %v3025, %v3024
        %v3029 = vsel %vm387, %v3019, 0
        %v3032 = vsel %vm387, %v3021, 0
        %3034 = vmatpush.bf16.msra.mxu0 0
        %3035 = vmatpush.bf16.msra.mxu0 0
        %3036 = vmatpush.bf16.msra.mxu0 0
        %3037 = vmatpush.bf16.msra.mxu0 0
        %3038 = vmatpush.bf16.msra.mxu0 0
        %3039 = vmatpush.bf16.msra.mxu0 0
        %3040 = vmatpush.bf16.msra.mxu0 0
        %3041 = vmatpush.bf16.msra.mxu0 %v3026
        %3042 = vmatmul.bf16.gmra.mxu0 %v3029
        %v3043 = vpop.f32.mrf.mxu0
        %v3044 = vadd.f32 0.0, %v3043
        %v3045 = vpop.f32.mrf.mxu0
        %v3046 = vadd.f32 0.0, %v3045
        %3047 = vmatmul.bf16.gmra.mxu0 %v3032
        %v3048 = vpop.f32.mrf.mxu0
        %v3049 = vadd.f32 0.0, %v3048
        %v3050 = vpop.f32.mrf.mxu0
        %v3051 = vadd.f32 0.0, %v3050
        %3052 = vdwg.mxu0
        %v3053 = vadd.f32 %v3002, %v3044
        %v3054 = vadd.f32 %v3004, %v3046
        %v3055 = vadd.f32 %v3007, %v3049
        %v3056 = vadd.f32 %v3009, %v3051
        %s3057 = scalar_lea.vmem %s321, 100
        %v3058 = vld [vmem:[%s3057] sm:$0xf]
        %v3059 = vld [vmem:[%s3057 + $0x4] sm:$0xf]
        %v3060 = vld [vmem:[%s3057 + $0x8] sm:$0xf]
        %v3061 = vld [vmem:[%s3057 + $0xc] sm:$0xf]
        %v3062 = vld [vmem:[%s494] sm:$0xf]
        %v3063 = vld [vmem:[%s494 + $0x4] sm:$0xf]
        %v3068 = vunpack.c.l.b16 %v3058
        %v3069 = vunpack.c.l.b16 %v3059
        %v3070 = vunpack.c.l.b16 %v3060
        %v3071 = vunpack.c.l.b16 %v3061
        %v3072 = vpack.c.b16 %v3069, %v3068
        %v3073 = vpack.c.b16 %v3071, %v3070
        %v3076 = vunpack.c.l.b16 %v3062
        %v3077 = vunpack.c.l.b16 %v3063
        %v3078 = vpack.c.b16 %v3077, %v3076
        %v3081 = vsel %vm387, %v3072, 0
        %v3084 = vsel %vm387, %v3073, 0
        %3086 = vmatpush.bf16.msra.mxu0 0
        %3087 = vmatpush.bf16.msra.mxu0 0
        %3088 = vmatpush.bf16.msra.mxu0 0
        %3089 = vmatpush.bf16.msra.mxu0 0
        %3090 = vmatpush.bf16.msra.mxu0 0
        %3091 = vmatpush.bf16.msra.mxu0 0
        %3092 = vmatpush.bf16.msra.mxu0 0
        %3093 = vmatpush.bf16.msra.mxu0 %v3078
        %3094 = vmatmul.bf16.gmra.mxu0 %v3081
        %v3095 = vpop.f32.mrf.mxu0
        %v3096 = vadd.f32 0.0, %v3095
        %v3097 = vpop.f32.mrf.mxu0
        %v3098 = vadd.f32 0.0, %v3097
        %3099 = vmatmul.bf16.gmra.mxu0 %v3084
        %v3100 = vpop.f32.mrf.mxu0
        %v3101 = vadd.f32 0.0, %v3100
        %v3102 = vpop.f32.mrf.mxu0
        %v3103 = vadd.f32 0.0, %v3102
        %3104 = vdwg.mxu0
        %v3105 = vadd.f32 %v3053, %v3096
        %v3106 = vadd.f32 %v3054, %v3098
        %v3107 = vadd.f32 %v3055, %v3101
        %v3108 = vadd.f32 %v3056, %v3103
        %v3109 = vld [vmem:[%s3057] sm:$0xf]
        %v3110 = vld [vmem:[%s3057 + $0x4] sm:$0xf]
        %v3111 = vld [vmem:[%s3057 + $0x8] sm:$0xf]
        %v3112 = vld [vmem:[%s3057 + $0xc] sm:$0xf]
        %v3113 = vld [vmem:[%s3057 + $0x10] sm:$0x1]
        %v3114 = vld [vmem:[%s547] sm:$0xf]
        %v3115 = vld [vmem:[%s547 + $0x4] sm:$0xf]
        %v3121 = vunpack.c.l.b16 %v3109
        %v3122 = vunpack.c.l.b16 %v3110
        %v3123 = vunpack.c.l.b16 %v3111
        %v3124 = vunpack.c.l.b16 %v3112
        %v3125 = vunpack.c.l.b16 %v3113
        %v3126 = vpack.c.b16 %v3122, %v3121
        %v3127 = vpack.c.b16 %v3124, %v3123
        %v3128 = vpack.c.b16 %v3125, %v3125
        %v3130 = vshrl.u32 %v3126, 16
        %v3132 = vshll.u32 %v3126, 16
        %v3134 = vrot.slane %v3132, 1
        %v3135 = vor.u32 %v3130, %v3134
        %v3137 = vshll.u32 %v3127, 16
        %v3139 = vrot.slane %v3137, 1
        %v3140 = vsel %vm360, %v3135, %v3139
        %v3141 = vshrl.u32 %v3127, 16
        %v3143 = vor.u32 %v3141, %v3139
        %v3145 = vshll.u32 %v3128, 16
        %v3147 = vrot.slane %v3145, 1
        %v3148 = vsel %vm360, %v3143, %v3147
        %v3151 = vunpack.c.l.b16 %v3114
        %v3152 = vunpack.c.l.b16 %v3115
        %v3153 = vpack.c.b16 %v3152, %v3151
        %v3156 = vsel %vm387, %v3140, 0
        %v3159 = vsel %vm387, %v3148, 0
        %3161 = vmatpush.bf16.msra.mxu0 0
        %3162 = vmatpush.bf16.msra.mxu0 0
        %3163 = vmatpush.bf16.msra.mxu0 0
        %3164 = vmatpush.bf16.msra.mxu0 0
        %3165 = vmatpush.bf16.msra.mxu0 0
        %3166 = vmatpush.bf16.msra.mxu0 0
        %3167 = vmatpush.bf16.msra.mxu0 0
        %3168 = vmatpush.bf16.msra.mxu0 %v3153
        %3169 = vmatmul.bf16.gmra.mxu0 %v3156
        %v3170 = vpop.f32.mrf.mxu0
        %v3171 = vadd.f32 0.0, %v3170
        %v3172 = vpop.f32.mrf.mxu0
        %v3173 = vadd.f32 0.0, %v3172
        %3174 = vmatmul.bf16.gmra.mxu0 %v3159
        %v3175 = vpop.f32.mrf.mxu0
        %v3176 = vadd.f32 0.0, %v3175
        %v3177 = vpop.f32.mrf.mxu0
        %v3178 = vadd.f32 0.0, %v3177
        %3179 = vdwg.mxu0
        %v3180 = vadd.f32 %v3105, %v3171
        %v3181 = vadd.f32 %v3106, %v3173
        %v3182 = vadd.f32 %v3107, %v3176
        %v3183 = vadd.f32 %v3108, %v3178
        %v3184 = vld [vmem:[%s3057] sm:$0xe]
        %v3185 = vld [vmem:[%s619] sm:$0xf]
        %v3186 = vld [vmem:[%s619 + $0x4] sm:$0xf]
        %v3188 = vunpack.c.l.b16 %v3184
        %v3189 = vpack.c.b16 %v3122, %v3188
        %v3190 = vrot.slane %v3189, 1
        %v3191 = vrot.slane %v3127, 1
        %v3192 = vsel %vm449, %v3190, %v3191
        %v3193 = vrot.slane %v3128, 1
        %v3194 = vsel %vm449, %v3191, %v3193
        %v3197 = vunpack.c.l.b16 %v3185
        %v3198 = vunpack.c.l.b16 %v3186
        %v3199 = vpack.c.b16 %v3198, %v3197
        %v3202 = vsel %vm387, %v3192, 0
        %v3205 = vsel %vm387, %v3194, 0
        %3207 = vmatpush.bf16.msra.mxu0 0
        %3208 = vmatpush.bf16.msra.mxu0 0
        %3209 = vmatpush.bf16.msra.mxu0 0
        %3210 = vmatpush.bf16.msra.mxu0 0
        %3211 = vmatpush.bf16.msra.mxu0 0
        %3212 = vmatpush.bf16.msra.mxu0 0
        %3213 = vmatpush.bf16.msra.mxu0 0
        %3214 = vmatpush.bf16.msra.mxu0 %v3199
        %3215 = vmatmul.bf16.gmra.mxu0 %v3202
        %v3216 = vpop.f32.mrf.mxu0
        %v3217 = vadd.f32 0.0, %v3216
        %v3218 = vpop.f32.mrf.mxu0
        %v3219 = vadd.f32 0.0, %v3218
        %3220 = vmatmul.bf16.gmra.mxu0 %v3205
        %v3221 = vpop.f32.mrf.mxu0
        %v3222 = vadd.f32 0.0, %v3221
        %v3223 = vpop.f32.mrf.mxu0
        %v3224 = vadd.f32 0.0, %v3223
        %3225 = vdwg.mxu0
        %v3226 = vadd.f32 %v3180, %v3217
        %v3227 = vadd.f32 %v3181, %v3219
        %v3228 = vadd.f32 %v3182, %v3222
        %v3229 = vadd.f32 %v3183, %v3224
        %s3230 = scalar_lea.vmem %s332, 100
        %v3231 = vld [vmem:[%s3230] sm:$0xf]
        %v3232 = vld [vmem:[%s3230 + $0x4] sm:$0xf]
        %v3233 = vld [vmem:[%s3230 + $0x8] sm:$0xf]
        %v3234 = vld [vmem:[%s3230 + $0xc] sm:$0xf]
        %v3235 = vld [vmem:[%s669] sm:$0xf]
        %v3236 = vld [vmem:[%s669 + $0x4] sm:$0xf]
        %v3241 = vunpack.c.l.b16 %v3231
        %v3242 = vunpack.c.l.b16 %v3232
        %v3243 = vunpack.c.l.b16 %v3233
        %v3244 = vunpack.c.l.b16 %v3234
        %v3245 = vpack.c.b16 %v3242, %v3241
        %v3246 = vpack.c.b16 %v3244, %v3243
        %v3249 = vunpack.c.l.b16 %v3235
        %v3250 = vunpack.c.l.b16 %v3236
        %v3251 = vpack.c.b16 %v3250, %v3249
        %v3254 = vsel %vm387, %v3245, 0
        %v3257 = vsel %vm387, %v3246, 0
        %3259 = vmatpush.bf16.msra.mxu0 0
        %3260 = vmatpush.bf16.msra.mxu0 0
        %3261 = vmatpush.bf16.msra.mxu0 0
        %3262 = vmatpush.bf16.msra.mxu0 0
        %3263 = vmatpush.bf16.msra.mxu0 0
        %3264 = vmatpush.bf16.msra.mxu0 0
        %3265 = vmatpush.bf16.msra.mxu0 0
        %3266 = vmatpush.bf16.msra.mxu0 %v3251
        %3267 = vmatmul.bf16.gmra.mxu0 %v3254
        %v3268 = vpop.f32.mrf.mxu0
        %v3269 = vadd.f32 0.0, %v3268
        %v3270 = vpop.f32.mrf.mxu0
        %v3271 = vadd.f32 0.0, %v3270
        %3272 = vmatmul.bf16.gmra.mxu0 %v3257
        %v3273 = vpop.f32.mrf.mxu0
        %v3274 = vadd.f32 0.0, %v3273
        %v3275 = vpop.f32.mrf.mxu0
        %v3276 = vadd.f32 0.0, %v3275
        %3277 = vdwg.mxu0
        %v3278 = vadd.f32 %v3226, %v3269
        %v3279 = vadd.f32 %v3227, %v3271
        %v3280 = vadd.f32 %v3228, %v3274
        %v3281 = vadd.f32 %v3229, %v3276
        %v3282 = vld [vmem:[%s3230] sm:$0xf]
        %v3283 = vld [vmem:[%s3230 + $0x4] sm:$0xf]
        %v3284 = vld [vmem:[%s3230 + $0x8] sm:$0xf]
        %v3285 = vld [vmem:[%s3230 + $0xc] sm:$0xf]
        %v3286 = vld [vmem:[%s3230 + $0x10] sm:$0x1]
        %v3287 = vld [vmem:[%s722] sm:$0xf]
        %v3288 = vld [vmem:[%s722 + $0x4] sm:$0xf]
        %v3294 = vunpack.c.l.b16 %v3282
        %v3295 = vunpack.c.l.b16 %v3283
        %v3296 = vunpack.c.l.b16 %v3284
        %v3297 = vunpack.c.l.b16 %v3285
        %v3298 = vunpack.c.l.b16 %v3286
        %v3299 = vpack.c.b16 %v3295, %v3294
        %v3300 = vpack.c.b16 %v3297, %v3296
        %v3301 = vpack.c.b16 %v3298, %v3298
        %v3303 = vshrl.u32 %v3299, 16
        %v3305 = vshll.u32 %v3299, 16
        %v3307 = vrot.slane %v3305, 1
        %v3308 = vor.u32 %v3303, %v3307
        %v3310 = vshll.u32 %v3300, 16
        %v3312 = vrot.slane %v3310, 1
        %v3313 = vsel %vm360, %v3308, %v3312
        %v3314 = vshrl.u32 %v3300, 16
        %v3316 = vor.u32 %v3314, %v3312
        %v3318 = vshll.u32 %v3301, 16
        %v3320 = vrot.slane %v3318, 1
        %v3321 = vsel %vm360, %v3316, %v3320
        %v3324 = vunpack.c.l.b16 %v3287
        %v3325 = vunpack.c.l.b16 %v3288
        %v3326 = vpack.c.b16 %v3325, %v3324
        %v3329 = vsel %vm387, %v3313, 0
        %v3332 = vsel %vm387, %v3321, 0
        %3334 = vmatpush.bf16.msra.mxu0 0
        %3335 = vmatpush.bf16.msra.mxu0 0
        %3336 = vmatpush.bf16.msra.mxu0 0
        %3337 = vmatpush.bf16.msra.mxu0 0
        %3338 = vmatpush.bf16.msra.mxu0 0
        %3339 = vmatpush.bf16.msra.mxu0 0
        %3340 = vmatpush.bf16.msra.mxu0 0
        %3341 = vmatpush.bf16.msra.mxu0 %v3326
        %3342 = vmatmul.bf16.gmra.mxu0 %v3329
        %v3343 = vpop.f32.mrf.mxu0
        %v3344 = vadd.f32 0.0, %v3343
        %v3345 = vpop.f32.mrf.mxu0
        %v3346 = vadd.f32 0.0, %v3345
        %3347 = vmatmul.bf16.gmra.mxu0 %v3332
        %v3348 = vpop.f32.mrf.mxu0
        %v3349 = vadd.f32 0.0, %v3348
        %v3350 = vpop.f32.mrf.mxu0
        %v3351 = vadd.f32 0.0, %v3350
        %3352 = vdwg.mxu0
        %v3353 = vadd.f32 %v3278, %v3344
        %v3354 = vadd.f32 %v3279, %v3346
        %v3355 = vadd.f32 %v3280, %v3349
        %v3356 = vadd.f32 %v3281, %v3351
        %v3357 = vld [vmem:[%s3230] sm:$0xe]
        %v3358 = vld [vmem:[%s794] sm:$0xf]
        %v3359 = vld [vmem:[%s794 + $0x4] sm:$0xf]
        %v3361 = vunpack.c.l.b16 %v3357
        %v3362 = vpack.c.b16 %v3295, %v3361
        %v3363 = vrot.slane %v3362, 1
        %v3364 = vrot.slane %v3300, 1
        %v3365 = vsel %vm449, %v3363, %v3364
        %v3366 = vrot.slane %v3301, 1
        %v3367 = vsel %vm449, %v3364, %v3366
        %v3370 = vunpack.c.l.b16 %v3358
        %v3371 = vunpack.c.l.b16 %v3359
        %v3372 = vpack.c.b16 %v3371, %v3370
        %v3375 = vsel %vm387, %v3365, 0
        %v3378 = vsel %vm387, %v3367, 0
        %3380 = vmatpush.bf16.msra.mxu0 0
        %3381 = vmatpush.bf16.msra.mxu0 0
        %3382 = vmatpush.bf16.msra.mxu0 0
        %3383 = vmatpush.bf16.msra.mxu0 0
        %3384 = vmatpush.bf16.msra.mxu0 0
        %3385 = vmatpush.bf16.msra.mxu0 0
        %3386 = vmatpush.bf16.msra.mxu0 0
        %3387 = vmatpush.bf16.msra.mxu0 %v3372
        %3388 = vmatmul.bf16.gmra.mxu0 %v3375
        %v3389 = vpop.f32.mrf.mxu0
        %v3390 = vadd.f32 0.0, %v3389
        %v3391 = vpop.f32.mrf.mxu0
        %v3392 = vadd.f32 0.0, %v3391
        %3393 = vmatmul.bf16.gmra.mxu0 %v3378
        %v3394 = vpop.f32.mrf.mxu0
        %v3395 = vadd.f32 0.0, %v3394
        %v3396 = vpop.f32.mrf.mxu0
        %v3397 = vadd.f32 0.0, %v3396
        %3398 = vdwg.mxu0
        %v3399 = vadd.f32 %v3353, %v3390
        %v3400 = vadd.f32 %v3354, %v3392
        %v3401 = vadd.f32 %v3355, %v3395
        %v3402 = vadd.f32 %v3356, %v3397
        %v3403 = vadd.f32 %v3399, %v841
        %v3404 = vadd.f32 %v3400, %v841
        %v3405 = vadd.f32 %v3401, %v841
        %v3406 = vadd.f32 %v3402, %v841
        %v3407 = vmax.f32 %v3403, 0.0
        %v3408 = vmax.f32 %v3404, 0.0
        %v3409 = vmax.f32 %v3405, 0.0
        %v3410 = vmax.f32 %v3406, 0.0
        %v3411 = vpack.c.bf16 %v3407, %v3407
        %v3412 = vpack.c.bf16 %v3408, %v3408
        %v3413 = vpack.c.bf16 %v3409, %v3409
        %v3414 = vpack.c.bf16 %v3410, %v3410
        %s3415 = scalar_lea.vmem %s300, 80 [#allocation2]
        %3416 = vst.msk [vmem:[%s3415] sm:$0xf] %vm855, %v3411
        %3417 = vst.msk [vmem:[%s3415 + $0x4] sm:$0xf] %vm855, %v3412
        %3418 = vst.msk [vmem:[%s3415 + $0x8] sm:$0xf] %vm855, %v3413
        %3419 = vst.msk [vmem:[%s3415 + $0xc] sm:$0xf] %vm855, %v3414
        %s3420 = scalar_lea.vmem %s310, 120
        %v3421 = vld [vmem:[%s3420] sm:$0xf]
        %v3422 = vld [vmem:[%s3420 + $0x4] sm:$0xf]
        %v3423 = vld [vmem:[%s3420 + $0x8] sm:$0xf]
        %v3424 = vld [vmem:[%s3420 + $0xc] sm:$0xf]
        %v3425 = vld [vmem:[%s3] sm:$0xf]
        %v3426 = vld [vmem:[%s3 + $0x4] sm:$0xf]
        %v3427 = vld [vmem:[%s3420 + $0x10] sm:$0x1]
        %v3428 = vld [vmem:[%s344] sm:$0xf]
        %v3429 = vld [vmem:[%s344 + $0x4] sm:$0xf]
        %v3435 = vunpack.c.l.b16 %v3421
        %v3436 = vunpack.c.l.b16 %v3422
        %v3437 = vunpack.c.l.b16 %v3423
        %v3438 = vunpack.c.l.b16 %v3424
        %v3439 = vunpack.c.l.b16 %v3427
        %v3440 = vpack.c.b16 %v3436, %v3435
        %v3441 = vpack.c.b16 %v3438, %v3437
        %v3442 = vpack.c.b16 %v3439, %v3439
        %v3444 = vshrl.u32 %v3440, 16
        %v3446 = vshll.u32 %v3440, 16
        %v3448 = vrot.slane %v3446, 1
        %v3449 = vor.u32 %v3444, %v3448
        %v3451 = vshll.u32 %v3441, 16
        %v3453 = vrot.slane %v3451, 1
        %v3454 = vsel %vm360, %v3449, %v3453
        %v3455 = vshrl.u32 %v3441, 16
        %v3457 = vor.u32 %v3455, %v3453
        %v3459 = vshll.u32 %v3442, 16
        %v3461 = vrot.slane %v3459, 1
        %v3462 = vsel %vm360, %v3457, %v3461
        %v3465 = vunpack.c.l.b16 %v3428
        %v3466 = vunpack.c.l.b16 %v3429
        %v3467 = vpack.c.b16 %v3466, %v3465
        %v3470 = vsel %vm387, %v3454, 0
        %v3473 = vsel %vm387, %v3462, 0
        %3475 = vmatpush.bf16.msra.mxu0 0
        %3476 = vmatpush.bf16.msra.mxu0 0
        %3477 = vmatpush.bf16.msra.mxu0 0
        %3478 = vmatpush.bf16.msra.mxu0 0
        %3479 = vmatpush.bf16.msra.mxu0 0
        %3480 = vmatpush.bf16.msra.mxu0 0
        %3481 = vmatpush.bf16.msra.mxu0 0
        %3482 = vmatpush.bf16.msra.mxu0 %v3467
        %3483 = vmatmul.bf16.gmra.mxu0 %v3470
        %v3484 = vpop.f32.mrf.mxu0
        %v3485 = vadd.f32 0.0, %v3484
        %v3486 = vpop.f32.mrf.mxu0
        %v3487 = vadd.f32 0.0, %v3486
        %3488 = vmatmul.bf16.gmra.mxu0 %v3473
        %v3489 = vpop.f32.mrf.mxu0
        %v3490 = vadd.f32 0.0, %v3489
        %v3491 = vpop.f32.mrf.mxu0
        %v3492 = vadd.f32 0.0, %v3491
        %3493 = vdwg.mxu0
        %v3496 = vunpack.c.l.b16 %v3425
        %v3497 = vunpack.c.l.b16 %v3426
        %v3498 = vpack.c.b16 %v3497, %v3496
        %v3500 = vsel %vm387, %v3440, 0
        %v3502 = vsel %vm387, %v3441, 0
        %3504 = vmatpush.bf16.msra.mxu0 0
        %3505 = vmatpush.bf16.msra.mxu0 0
        %3506 = vmatpush.bf16.msra.mxu0 0
        %3507 = vmatpush.bf16.msra.mxu0 0
        %3508 = vmatpush.bf16.msra.mxu0 0
        %3509 = vmatpush.bf16.msra.mxu0 0
        %3510 = vmatpush.bf16.msra.mxu0 0
        %3511 = vmatpush.bf16.msra.mxu0 %v3498
        %3512 = vmatmul.bf16.gmra.mxu0 %v3500
        %v3513 = vpop.f32.mrf.mxu0
        %v3514 = vadd.f32 %v3485, %v3513
        %v3515 = vpop.f32.mrf.mxu0
        %v3516 = vadd.f32 %v3487, %v3515
        %3517 = vmatmul.bf16.gmra.mxu0 %v3502
        %v3518 = vpop.f32.mrf.mxu0
        %v3519 = vadd.f32 %v3490, %v3518
        %v3520 = vpop.f32.mrf.mxu0
        %v3521 = vadd.f32 %v3492, %v3520
        %3522 = vdwg.mxu0
        %v3523 = vld [vmem:[%s3420] sm:$0xe]
        %v3524 = vld [vmem:[%s443] sm:$0xf]
        %v3525 = vld [vmem:[%s443 + $0x4] sm:$0xf]
        %v3527 = vunpack.c.l.b16 %v3523
        %v3528 = vpack.c.b16 %v3436, %v3527
        %v3529 = vrot.slane %v3528, 1
        %v3530 = vrot.slane %v3441, 1
        %v3531 = vsel %vm449, %v3529, %v3530
        %v3532 = vrot.slane %v3442, 1
        %v3533 = vsel %vm449, %v3530, %v3532
        %v3536 = vunpack.c.l.b16 %v3524
        %v3537 = vunpack.c.l.b16 %v3525
        %v3538 = vpack.c.b16 %v3537, %v3536
        %v3541 = vsel %vm387, %v3531, 0
        %v3544 = vsel %vm387, %v3533, 0
        %3546 = vmatpush.bf16.msra.mxu0 0
        %3547 = vmatpush.bf16.msra.mxu0 0
        %3548 = vmatpush.bf16.msra.mxu0 0
        %3549 = vmatpush.bf16.msra.mxu0 0
        %3550 = vmatpush.bf16.msra.mxu0 0
        %3551 = vmatpush.bf16.msra.mxu0 0
        %3552 = vmatpush.bf16.msra.mxu0 0
        %3553 = vmatpush.bf16.msra.mxu0 %v3538
        %3554 = vmatmul.bf16.gmra.mxu0 %v3541
        %v3555 = vpop.f32.mrf.mxu0
        %v3556 = vadd.f32 0.0, %v3555
        %v3557 = vpop.f32.mrf.mxu0
        %v3558 = vadd.f32 0.0, %v3557
        %3559 = vmatmul.bf16.gmra.mxu0 %v3544
        %v3560 = vpop.f32.mrf.mxu0
        %v3561 = vadd.f32 0.0, %v3560
        %v3562 = vpop.f32.mrf.mxu0
        %v3563 = vadd.f32 0.0, %v3562
        %3564 = vdwg.mxu0
        %v3565 = vadd.f32 %v3514, %v3556
        %v3566 = vadd.f32 %v3516, %v3558
        %v3567 = vadd.f32 %v3519, %v3561
        %v3568 = vadd.f32 %v3521, %v3563
        %s3569 = scalar_lea.vmem %s321, 120
        %v3570 = vld [vmem:[%s3569] sm:$0xf]
        %v3571 = vld [vmem:[%s3569 + $0x4] sm:$0xf]
        %v3572 = vld [vmem:[%s3569 + $0x8] sm:$0xf]
        %v3573 = vld [vmem:[%s3569 + $0xc] sm:$0xf]
        %v3574 = vld [vmem:[%s494] sm:$0xf]
        %v3575 = vld [vmem:[%s494 + $0x4] sm:$0xf]
        %v3580 = vunpack.c.l.b16 %v3570
        %v3581 = vunpack.c.l.b16 %v3571
        %v3582 = vunpack.c.l.b16 %v3572
        %v3583 = vunpack.c.l.b16 %v3573
        %v3584 = vpack.c.b16 %v3581, %v3580
        %v3585 = vpack.c.b16 %v3583, %v3582
        %v3588 = vunpack.c.l.b16 %v3574
        %v3589 = vunpack.c.l.b16 %v3575
        %v3590 = vpack.c.b16 %v3589, %v3588
        %v3593 = vsel %vm387, %v3584, 0
        %v3596 = vsel %vm387, %v3585, 0
        %3598 = vmatpush.bf16.msra.mxu0 0
        %3599 = vmatpush.bf16.msra.mxu0 0
        %3600 = vmatpush.bf16.msra.mxu0 0
        %3601 = vmatpush.bf16.msra.mxu0 0
        %3602 = vmatpush.bf16.msra.mxu0 0
        %3603 = vmatpush.bf16.msra.mxu0 0
        %3604 = vmatpush.bf16.msra.mxu0 0
        %3605 = vmatpush.bf16.msra.mxu0 %v3590
        %3606 = vmatmul.bf16.gmra.mxu0 %v3593
        %v3607 = vpop.f32.mrf.mxu0
        %v3608 = vadd.f32 0.0, %v3607
        %v3609 = vpop.f32.mrf.mxu0
        %v3610 = vadd.f32 0.0, %v3609
        %3611 = vmatmul.bf16.gmra.mxu0 %v3596
        %v3612 = vpop.f32.mrf.mxu0
        %v3613 = vadd.f32 0.0, %v3612
        %v3614 = vpop.f32.mrf.mxu0
        %v3615 = vadd.f32 0.0, %v3614
        %3616 = vdwg.mxu0
        %v3617 = vadd.f32 %v3565, %v3608
        %v3618 = vadd.f32 %v3566, %v3610
        %v3619 = vadd.f32 %v3567, %v3613
        %v3620 = vadd.f32 %v3568, %v3615
        %v3621 = vld [vmem:[%s3569] sm:$0xf]
        %v3622 = vld [vmem:[%s3569 + $0x4] sm:$0xf]
        %v3623 = vld [vmem:[%s3569 + $0x8] sm:$0xf]
        %v3624 = vld [vmem:[%s3569 + $0xc] sm:$0xf]
        %v3625 = vld [vmem:[%s3569 + $0x10] sm:$0x1]
        %v3626 = vld [vmem:[%s547] sm:$0xf]
        %v3627 = vld [vmem:[%s547 + $0x4] sm:$0xf]
        %v3633 = vunpack.c.l.b16 %v3621
        %v3634 = vunpack.c.l.b16 %v3622
        %v3635 = vunpack.c.l.b16 %v3623
        %v3636 = vunpack.c.l.b16 %v3624
        %v3637 = vunpack.c.l.b16 %v3625
        %v3638 = vpack.c.b16 %v3634, %v3633
        %v3639 = vpack.c.b16 %v3636, %v3635
        %v3640 = vpack.c.b16 %v3637, %v3637
        %v3642 = vshrl.u32 %v3638, 16
        %v3644 = vshll.u32 %v3638, 16
        %v3646 = vrot.slane %v3644, 1
        %v3647 = vor.u32 %v3642, %v3646
        %v3649 = vshll.u32 %v3639, 16
        %v3651 = vrot.slane %v3649, 1
        %v3652 = vsel %vm360, %v3647, %v3651
        %v3653 = vshrl.u32 %v3639, 16
        %v3655 = vor.u32 %v3653, %v3651
        %v3657 = vshll.u32 %v3640, 16
        %v3659 = vrot.slane %v3657, 1
        %v3660 = vsel %vm360, %v3655, %v3659
        %v3663 = vunpack.c.l.b16 %v3626
        %v3664 = vunpack.c.l.b16 %v3627
        %v3665 = vpack.c.b16 %v3664, %v3663
        %v3668 = vsel %vm387, %v3652, 0
        %v3671 = vsel %vm387, %v3660, 0
        %3673 = vmatpush.bf16.msra.mxu0 0
        %3674 = vmatpush.bf16.msra.mxu0 0
        %3675 = vmatpush.bf16.msra.mxu0 0
        %3676 = vmatpush.bf16.msra.mxu0 0
        %3677 = vmatpush.bf16.msra.mxu0 0
        %3678 = vmatpush.bf16.msra.mxu0 0
        %3679 = vmatpush.bf16.msra.mxu0 0
        %3680 = vmatpush.bf16.msra.mxu0 %v3665
        %3681 = vmatmul.bf16.gmra.mxu0 %v3668
        %v3682 = vpop.f32.mrf.mxu0
        %v3683 = vadd.f32 0.0, %v3682
        %v3684 = vpop.f32.mrf.mxu0
        %v3685 = vadd.f32 0.0, %v3684
        %3686 = vmatmul.bf16.gmra.mxu0 %v3671
        %v3687 = vpop.f32.mrf.mxu0
        %v3688 = vadd.f32 0.0, %v3687
        %v3689 = vpop.f32.mrf.mxu0
        %v3690 = vadd.f32 0.0, %v3689
        %3691 = vdwg.mxu0
        %v3692 = vadd.f32 %v3617, %v3683
        %v3693 = vadd.f32 %v3618, %v3685
        %v3694 = vadd.f32 %v3619, %v3688
        %v3695 = vadd.f32 %v3620, %v3690
        %v3696 = vld [vmem:[%s3569] sm:$0xe]
        %v3697 = vld [vmem:[%s619] sm:$0xf]
        %v3698 = vld [vmem:[%s619 + $0x4] sm:$0xf]
        %v3700 = vunpack.c.l.b16 %v3696
        %v3701 = vpack.c.b16 %v3634, %v3700
        %v3702 = vrot.slane %v3701, 1
        %v3703 = vrot.slane %v3639, 1
        %v3704 = vsel %vm449, %v3702, %v3703
        %v3705 = vrot.slane %v3640, 1
        %v3706 = vsel %vm449, %v3703, %v3705
        %v3709 = vunpack.c.l.b16 %v3697
        %v3710 = vunpack.c.l.b16 %v3698
        %v3711 = vpack.c.b16 %v3710, %v3709
        %v3714 = vsel %vm387, %v3704, 0
        %v3717 = vsel %vm387, %v3706, 0
        %3719 = vmatpush.bf16.msra.mxu0 0
        %3720 = vmatpush.bf16.msra.mxu0 0
        %3721 = vmatpush.bf16.msra.mxu0 0
        %3722 = vmatpush.bf16.msra.mxu0 0
        %3723 = vmatpush.bf16.msra.mxu0 0
        %3724 = vmatpush.bf16.msra.mxu0 0
        %3725 = vmatpush.bf16.msra.mxu0 0
        %3726 = vmatpush.bf16.msra.mxu0 %v3711
        %3727 = vmatmul.bf16.gmra.mxu0 %v3714
        %v3728 = vpop.f32.mrf.mxu0
        %v3729 = vadd.f32 0.0, %v3728
        %v3730 = vpop.f32.mrf.mxu0
        %v3731 = vadd.f32 0.0, %v3730
        %3732 = vmatmul.bf16.gmra.mxu0 %v3717
        %v3733 = vpop.f32.mrf.mxu0
        %v3734 = vadd.f32 0.0, %v3733
        %v3735 = vpop.f32.mrf.mxu0
        %v3736 = vadd.f32 0.0, %v3735
        %3737 = vdwg.mxu0
        %v3738 = vadd.f32 %v3692, %v3729
        %v3739 = vadd.f32 %v3693, %v3731
        %v3740 = vadd.f32 %v3694, %v3734
        %v3741 = vadd.f32 %v3695, %v3736
        %s3742 = scalar_lea.vmem %s332, 120
        %v3743 = vld [vmem:[%s3742] sm:$0xf]
        %v3744 = vld [vmem:[%s3742 + $0x4] sm:$0xf]
        %v3745 = vld [vmem:[%s3742 + $0x8] sm:$0xf]
        %v3746 = vld [vmem:[%s3742 + $0xc] sm:$0xf]
        %v3747 = vld [vmem:[%s669] sm:$0xf]
        %v3748 = vld [vmem:[%s669 + $0x4] sm:$0xf]
        %v3753 = vunpack.c.l.b16 %v3743
        %v3754 = vunpack.c.l.b16 %v3744
        %v3755 = vunpack.c.l.b16 %v3745
        %v3756 = vunpack.c.l.b16 %v3746
        %v3757 = vpack.c.b16 %v3754, %v3753
        %v3758 = vpack.c.b16 %v3756, %v3755
        %v3761 = vunpack.c.l.b16 %v3747
        %v3762 = vunpack.c.l.b16 %v3748
        %v3763 = vpack.c.b16 %v3762, %v3761
        %v3766 = vsel %vm387, %v3757, 0
        %v3769 = vsel %vm387, %v3758, 0
        %3771 = vmatpush.bf16.msra.mxu0 0
        %3772 = vmatpush.bf16.msra.mxu0 0
        %3773 = vmatpush.bf16.msra.mxu0 0
        %3774 = vmatpush.bf16.msra.mxu0 0
        %3775 = vmatpush.bf16.msra.mxu0 0
        %3776 = vmatpush.bf16.msra.mxu0 0
        %3777 = vmatpush.bf16.msra.mxu0 0
        %3778 = vmatpush.bf16.msra.mxu0 %v3763
        %3779 = vmatmul.bf16.gmra.mxu0 %v3766
        %v3780 = vpop.f32.mrf.mxu0
        %v3781 = vadd.f32 0.0, %v3780
        %v3782 = vpop.f32.mrf.mxu0
        %v3783 = vadd.f32 0.0, %v3782
        %3784 = vmatmul.bf16.gmra.mxu0 %v3769
        %v3785 = vpop.f32.mrf.mxu0
        %v3786 = vadd.f32 0.0, %v3785
        %v3787 = vpop.f32.mrf.mxu0
        %v3788 = vadd.f32 0.0, %v3787
        %3789 = vdwg.mxu0
        %v3790 = vadd.f32 %v3738, %v3781
        %v3791 = vadd.f32 %v3739, %v3783
        %v3792 = vadd.f32 %v3740, %v3786
        %v3793 = vadd.f32 %v3741, %v3788
        %v3794 = vld [vmem:[%s3742] sm:$0xf]
        %v3795 = vld [vmem:[%s3742 + $0x4] sm:$0xf]
        %v3796 = vld [vmem:[%s3742 + $0x8] sm:$0xf]
        %v3797 = vld [vmem:[%s3742 + $0xc] sm:$0xf]
        %v3798 = vld [vmem:[%s3742 + $0x10] sm:$0x1]
        %v3799 = vld [vmem:[%s722] sm:$0xf]
        %v3800 = vld [vmem:[%s722 + $0x4] sm:$0xf]
        %v3806 = vunpack.c.l.b16 %v3794
        %v3807 = vunpack.c.l.b16 %v3795
        %v3808 = vunpack.c.l.b16 %v3796
        %v3809 = vunpack.c.l.b16 %v3797
        %v3810 = vunpack.c.l.b16 %v3798
        %v3811 = vpack.c.b16 %v3807, %v3806
        %v3812 = vpack.c.b16 %v3809, %v3808
        %v3813 = vpack.c.b16 %v3810, %v3810
        %v3815 = vshrl.u32 %v3811, 16
        %v3817 = vshll.u32 %v3811, 16
        %v3819 = vrot.slane %v3817, 1
        %v3820 = vor.u32 %v3815, %v3819
        %v3822 = vshll.u32 %v3812, 16
        %v3824 = vrot.slane %v3822, 1
        %v3825 = vsel %vm360, %v3820, %v3824
        %v3826 = vshrl.u32 %v3812, 16
        %v3828 = vor.u32 %v3826, %v3824
        %v3830 = vshll.u32 %v3813, 16
        %v3832 = vrot.slane %v3830, 1
        %v3833 = vsel %vm360, %v3828, %v3832
        %v3836 = vunpack.c.l.b16 %v3799
        %v3837 = vunpack.c.l.b16 %v3800
        %v3838 = vpack.c.b16 %v3837, %v3836
        %v3841 = vsel %vm387, %v3825, 0
        %v3844 = vsel %vm387, %v3833, 0
        %3846 = vmatpush.bf16.msra.mxu0 0
        %3847 = vmatpush.bf16.msra.mxu0 0
        %3848 = vmatpush.bf16.msra.mxu0 0
        %3849 = vmatpush.bf16.msra.mxu0 0
        %3850 = vmatpush.bf16.msra.mxu0 0
        %3851 = vmatpush.bf16.msra.mxu0 0
        %3852 = vmatpush.bf16.msra.mxu0 0
        %3853 = vmatpush.bf16.msra.mxu0 %v3838
        %3854 = vmatmul.bf16.gmra.mxu0 %v3841
        %v3855 = vpop.f32.mrf.mxu0
        %v3856 = vadd.f32 0.0, %v3855
        %v3857 = vpop.f32.mrf.mxu0
        %v3858 = vadd.f32 0.0, %v3857
        %3859 = vmatmul.bf16.gmra.mxu0 %v3844
        %v3860 = vpop.f32.mrf.mxu0
        %v3861 = vadd.f32 0.0, %v3860
        %v3862 = vpop.f32.mrf.mxu0
        %v3863 = vadd.f32 0.0, %v3862
        %3864 = vdwg.mxu0
        %v3865 = vadd.f32 %v3790, %v3856
        %v3866 = vadd.f32 %v3791, %v3858
        %v3867 = vadd.f32 %v3792, %v3861
        %v3868 = vadd.f32 %v3793, %v3863
        %v3869 = vld [vmem:[%s3742] sm:$0xe]
        %v3870 = vld [vmem:[%s794] sm:$0xf]
        %v3871 = vld [vmem:[%s794 + $0x4] sm:$0xf]
        %v3873 = vunpack.c.l.b16 %v3869
        %v3874 = vpack.c.b16 %v3807, %v3873
        %v3875 = vrot.slane %v3874, 1
        %v3876 = vrot.slane %v3812, 1
        %v3877 = vsel %vm449, %v3875, %v3876
        %v3878 = vrot.slane %v3813, 1
        %v3879 = vsel %vm449, %v3876, %v3878
        %v3882 = vunpack.c.l.b16 %v3870
        %v3883 = vunpack.c.l.b16 %v3871
        %v3884 = vpack.c.b16 %v3883, %v3882
        %v3887 = vsel %vm387, %v3877, 0
        %v3890 = vsel %vm387, %v3879, 0
        %3892 = vmatpush.bf16.msra.mxu0 0
        %3893 = vmatpush.bf16.msra.mxu0 0
        %3894 = vmatpush.bf16.msra.mxu0 0
        %3895 = vmatpush.bf16.msra.mxu0 0
        %3896 = vmatpush.bf16.msra.mxu0 0
        %3897 = vmatpush.bf16.msra.mxu0 0
        %3898 = vmatpush.bf16.msra.mxu0 0
        %3899 = vmatpush.bf16.msra.mxu0 %v3884
        %3900 = vmatmul.bf16.gmra.mxu0 %v3887
        %v3901 = vpop.f32.mrf.mxu0
        %v3902 = vadd.f32 0.0, %v3901
        %v3903 = vpop.f32.mrf.mxu0
        %v3904 = vadd.f32 0.0, %v3903
        %3905 = vmatmul.bf16.gmra.mxu0 %v3890
        %v3906 = vpop.f32.mrf.mxu0
        %v3907 = vadd.f32 0.0, %v3906
        %v3908 = vpop.f32.mrf.mxu0
        %v3909 = vadd.f32 0.0, %v3908
        %3910 = vdwg.mxu0
        %v3911 = vadd.f32 %v3865, %v3902
        %v3912 = vadd.f32 %v3866, %v3904
        %v3913 = vadd.f32 %v3867, %v3907
        %v3914 = vadd.f32 %v3868, %v3909
        %v3915 = vadd.f32 %v3911, %v841
        %v3916 = vadd.f32 %v3912, %v841
        %v3917 = vadd.f32 %v3913, %v841
        %v3918 = vadd.f32 %v3914, %v841
        %v3919 = vmax.f32 %v3915, 0.0
        %v3920 = vmax.f32 %v3916, 0.0
        %v3921 = vmax.f32 %v3917, 0.0
        %v3922 = vmax.f32 %v3918, 0.0
        %v3923 = vpack.c.bf16 %v3919, %v3919
        %v3924 = vpack.c.bf16 %v3920, %v3920
        %v3925 = vpack.c.bf16 %v3921, %v3921
        %v3926 = vpack.c.bf16 %v3922, %v3922
        %s3927 = scalar_lea.vmem %s300, 96 [#allocation2]
        %3928 = vst.msk [vmem:[%s3927] sm:$0xf] %vm855, %v3923
        %3929 = vst.msk [vmem:[%s3927 + $0x4] sm:$0xf] %vm855, %v3924
        %3930 = vst.msk [vmem:[%s3927 + $0x8] sm:$0xf] %vm855, %v3925
        %3931 = vst.msk [vmem:[%s3927 + $0xc] sm:$0xf] %vm855, %v3926
        %s3932 = scalar_lea.vmem %s310, 140
        %v3933 = vld [vmem:[%s3932] sm:$0xf]
        %v3934 = vld [vmem:[%s3932 + $0x4] sm:$0xf]
        %v3935 = vld [vmem:[%s3932 + $0x8] sm:$0xf]
        %v3936 = vld [vmem:[%s3932 + $0xc] sm:$0xf]
        %v3937 = vld [vmem:[%s3] sm:$0xf]
        %v3938 = vld [vmem:[%s3 + $0x4] sm:$0xf]
        %v3939 = vld [vmem:[%s3932 + $0x10] sm:$0x1]
        %v3940 = vld [vmem:[%s344] sm:$0xf]
        %v3941 = vld [vmem:[%s344 + $0x4] sm:$0xf]
        %v3947 = vunpack.c.l.b16 %v3933
        %v3948 = vunpack.c.l.b16 %v3934
        %v3949 = vunpack.c.l.b16 %v3935
        %v3950 = vunpack.c.l.b16 %v3936
        %v3951 = vunpack.c.l.b16 %v3939
        %v3952 = vpack.c.b16 %v3948, %v3947
        %v3953 = vpack.c.b16 %v3950, %v3949
        %v3954 = vpack.c.b16 %v3951, %v3951
        %v3956 = vshrl.u32 %v3952, 16
        %v3958 = vshll.u32 %v3952, 16
        %v3960 = vrot.slane %v3958, 1
        %v3961 = vor.u32 %v3956, %v3960
        %v3963 = vshll.u32 %v3953, 16
        %v3965 = vrot.slane %v3963, 1
        %v3966 = vsel %vm360, %v3961, %v3965
        %v3967 = vshrl.u32 %v3953, 16
        %v3969 = vor.u32 %v3967, %v3965
        %v3971 = vshll.u32 %v3954, 16
        %v3973 = vrot.slane %v3971, 1
        %v3974 = vsel %vm360, %v3969, %v3973
        %v3977 = vunpack.c.l.b16 %v3940
        %v3978 = vunpack.c.l.b16 %v3941
        %v3979 = vpack.c.b16 %v3978, %v3977
        %v3982 = vsel %vm387, %v3966, 0
        %v3985 = vsel %vm387, %v3974, 0
        %3987 = vmatpush.bf16.msra.mxu0 0
        %3988 = vmatpush.bf16.msra.mxu0 0
        %3989 = vmatpush.bf16.msra.mxu0 0
        %3990 = vmatpush.bf16.msra.mxu0 0
        %3991 = vmatpush.bf16.msra.mxu0 0
        %3992 = vmatpush.bf16.msra.mxu0 0
        %3993 = vmatpush.bf16.msra.mxu0 0
        %3994 = vmatpush.bf16.msra.mxu0 %v3979
        %3995 = vmatmul.bf16.gmra.mxu0 %v3982
        %v3996 = vpop.f32.mrf.mxu0
        %v3997 = vadd.f32 0.0, %v3996
        %v3998 = vpop.f32.mrf.mxu0
        %v3999 = vadd.f32 0.0, %v3998
        %4000 = vmatmul.bf16.gmra.mxu0 %v3985
        %v4001 = vpop.f32.mrf.mxu0
        %v4002 = vadd.f32 0.0, %v4001
        %v4003 = vpop.f32.mrf.mxu0
        %v4004 = vadd.f32 0.0, %v4003
        %4005 = vdwg.mxu0
        %v4008 = vunpack.c.l.b16 %v3937
        %v4009 = vunpack.c.l.b16 %v3938
        %v4010 = vpack.c.b16 %v4009, %v4008
        %v4012 = vsel %vm387, %v3952, 0
        %v4014 = vsel %vm387, %v3953, 0
        %4016 = vmatpush.bf16.msra.mxu0 0
        %4017 = vmatpush.bf16.msra.mxu0 0
        %4018 = vmatpush.bf16.msra.mxu0 0
        %4019 = vmatpush.bf16.msra.mxu0 0
        %4020 = vmatpush.bf16.msra.mxu0 0
        %4021 = vmatpush.bf16.msra.mxu0 0
        %4022 = vmatpush.bf16.msra.mxu0 0
        %4023 = vmatpush.bf16.msra.mxu0 %v4010
        %4024 = vmatmul.bf16.gmra.mxu0 %v4012
        %v4025 = vpop.f32.mrf.mxu0
        %v4026 = vadd.f32 %v3997, %v4025
        %v4027 = vpop.f32.mrf.mxu0
        %v4028 = vadd.f32 %v3999, %v4027
        %4029 = vmatmul.bf16.gmra.mxu0 %v4014
        %v4030 = vpop.f32.mrf.mxu0
        %v4031 = vadd.f32 %v4002, %v4030
        %v4032 = vpop.f32.mrf.mxu0
        %v4033 = vadd.f32 %v4004, %v4032
        %4034 = vdwg.mxu0
        %v4035 = vld [vmem:[%s3932] sm:$0xe]
        %v4036 = vld [vmem:[%s443] sm:$0xf]
        %v4037 = vld [vmem:[%s443 + $0x4] sm:$0xf]
        %v4039 = vunpack.c.l.b16 %v4035
        %v4040 = vpack.c.b16 %v3948, %v4039
        %v4041 = vrot.slane %v4040, 1
        %v4042 = vrot.slane %v3953, 1
        %v4043 = vsel %vm449, %v4041, %v4042
        %v4044 = vrot.slane %v3954, 1
        %v4045 = vsel %vm449, %v4042, %v4044
        %v4048 = vunpack.c.l.b16 %v4036
        %v4049 = vunpack.c.l.b16 %v4037
        %v4050 = vpack.c.b16 %v4049, %v4048
        %v4053 = vsel %vm387, %v4043, 0
        %v4056 = vsel %vm387, %v4045, 0
        %4058 = vmatpush.bf16.msra.mxu0 0
        %4059 = vmatpush.bf16.msra.mxu0 0
        %4060 = vmatpush.bf16.msra.mxu0 0
        %4061 = vmatpush.bf16.msra.mxu0 0
        %4062 = vmatpush.bf16.msra.mxu0 0
        %4063 = vmatpush.bf16.msra.mxu0 0
        %4064 = vmatpush.bf16.msra.mxu0 0
        %4065 = vmatpush.bf16.msra.mxu0 %v4050
        %4066 = vmatmul.bf16.gmra.mxu0 %v4053
        %v4067 = vpop.f32.mrf.mxu0
        %v4068 = vadd.f32 0.0, %v4067
        %v4069 = vpop.f32.mrf.mxu0
        %v4070 = vadd.f32 0.0, %v4069
        %4071 = vmatmul.bf16.gmra.mxu0 %v4056
        %v4072 = vpop.f32.mrf.mxu0
        %v4073 = vadd.f32 0.0, %v4072
        %v4074 = vpop.f32.mrf.mxu0
        %v4075 = vadd.f32 0.0, %v4074
        %4076 = vdwg.mxu0
        %v4077 = vadd.f32 %v4026, %v4068
        %v4078 = vadd.f32 %v4028, %v4070
        %v4079 = vadd.f32 %v4031, %v4073
        %v4080 = vadd.f32 %v4033, %v4075
        %s4081 = scalar_lea.vmem %s321, 140
        %v4082 = vld [vmem:[%s4081] sm:$0xf]
        %v4083 = vld [vmem:[%s4081 + $0x4] sm:$0xf]
        %v4084 = vld [vmem:[%s4081 + $0x8] sm:$0xf]
        %v4085 = vld [vmem:[%s4081 + $0xc] sm:$0xf]
        %v4086 = vld [vmem:[%s494] sm:$0xf]
        %v4087 = vld [vmem:[%s494 + $0x4] sm:$0xf]
        %v4092 = vunpack.c.l.b16 %v4082
        %v4093 = vunpack.c.l.b16 %v4083
        %v4094 = vunpack.c.l.b16 %v4084
        %v4095 = vunpack.c.l.b16 %v4085
        %v4096 = vpack.c.b16 %v4093, %v4092
        %v4097 = vpack.c.b16 %v4095, %v4094
        %v4100 = vunpack.c.l.b16 %v4086
        %v4101 = vunpack.c.l.b16 %v4087
        %v4102 = vpack.c.b16 %v4101, %v4100
        %v4105 = vsel %vm387, %v4096, 0
        %v4108 = vsel %vm387, %v4097, 0
        %4110 = vmatpush.bf16.msra.mxu0 0
        %4111 = vmatpush.bf16.msra.mxu0 0
        %4112 = vmatpush.bf16.msra.mxu0 0
        %4113 = vmatpush.bf16.msra.mxu0 0
        %4114 = vmatpush.bf16.msra.mxu0 0
        %4115 = vmatpush.bf16.msra.mxu0 0
        %4116 = vmatpush.bf16.msra.mxu0 0
        %4117 = vmatpush.bf16.msra.mxu0 %v4102
        %4118 = vmatmul.bf16.gmra.mxu0 %v4105
        %v4119 = vpop.f32.mrf.mxu0
        %v4120 = vadd.f32 0.0, %v4119
        %v4121 = vpop.f32.mrf.mxu0
        %v4122 = vadd.f32 0.0, %v4121
        %4123 = vmatmul.bf16.gmra.mxu0 %v4108
        %v4124 = vpop.f32.mrf.mxu0
        %v4125 = vadd.f32 0.0, %v4124
        %v4126 = vpop.f32.mrf.mxu0
        %v4127 = vadd.f32 0.0, %v4126
        %4128 = vdwg.mxu0
        %v4129 = vadd.f32 %v4077, %v4120
        %v4130 = vadd.f32 %v4078, %v4122
        %v4131 = vadd.f32 %v4079, %v4125
        %v4132 = vadd.f32 %v4080, %v4127
        %v4133 = vld [vmem:[%s4081] sm:$0xf]
        %v4134 = vld [vmem:[%s4081 + $0x4] sm:$0xf]
        %v4135 = vld [vmem:[%s4081 + $0x8] sm:$0xf]
        %v4136 = vld [vmem:[%s4081 + $0xc] sm:$0xf]
        %v4137 = vld [vmem:[%s4081 + $0x10] sm:$0x1]
        %v4138 = vld [vmem:[%s547] sm:$0xf]
        %v4139 = vld [vmem:[%s547 + $0x4] sm:$0xf]
        %v4145 = vunpack.c.l.b16 %v4133
        %v4146 = vunpack.c.l.b16 %v4134
        %v4147 = vunpack.c.l.b16 %v4135
        %v4148 = vunpack.c.l.b16 %v4136
        %v4149 = vunpack.c.l.b16 %v4137
        %v4150 = vpack.c.b16 %v4146, %v4145
        %v4151 = vpack.c.b16 %v4148, %v4147
        %v4152 = vpack.c.b16 %v4149, %v4149
        %v4154 = vshrl.u32 %v4150, 16
        %v4156 = vshll.u32 %v4150, 16
        %v4158 = vrot.slane %v4156, 1
        %v4159 = vor.u32 %v4154, %v4158
        %v4161 = vshll.u32 %v4151, 16
        %v4163 = vrot.slane %v4161, 1
        %v4164 = vsel %vm360, %v4159, %v4163
        %v4165 = vshrl.u32 %v4151, 16
        %v4167 = vor.u32 %v4165, %v4163
        %v4169 = vshll.u32 %v4152, 16
        %v4171 = vrot.slane %v4169, 1
        %v4172 = vsel %vm360, %v4167, %v4171
        %v4175 = vunpack.c.l.b16 %v4138
        %v4176 = vunpack.c.l.b16 %v4139
        %v4177 = vpack.c.b16 %v4176, %v4175
        %v4180 = vsel %vm387, %v4164, 0
        %v4183 = vsel %vm387, %v4172, 0
        %4185 = vmatpush.bf16.msra.mxu0 0
        %4186 = vmatpush.bf16.msra.mxu0 0
        %4187 = vmatpush.bf16.msra.mxu0 0
        %4188 = vmatpush.bf16.msra.mxu0 0
        %4189 = vmatpush.bf16.msra.mxu0 0
        %4190 = vmatpush.bf16.msra.mxu0 0
        %4191 = vmatpush.bf16.msra.mxu0 0
        %4192 = vmatpush.bf16.msra.mxu0 %v4177
        %4193 = vmatmul.bf16.gmra.mxu0 %v4180
        %v4194 = vpop.f32.mrf.mxu0
        %v4195 = vadd.f32 0.0, %v4194
        %v4196 = vpop.f32.mrf.mxu0
        %v4197 = vadd.f32 0.0, %v4196
        %4198 = vmatmul.bf16.gmra.mxu0 %v4183
        %v4199 = vpop.f32.mrf.mxu0
        %v4200 = vadd.f32 0.0, %v4199
        %v4201 = vpop.f32.mrf.mxu0
        %v4202 = vadd.f32 0.0, %v4201
        %4203 = vdwg.mxu0
        %v4204 = vadd.f32 %v4129, %v4195
        %v4205 = vadd.f32 %v4130, %v4197
        %v4206 = vadd.f32 %v4131, %v4200
        %v4207 = vadd.f32 %v4132, %v4202
        %v4208 = vld [vmem:[%s4081] sm:$0xe]
        %v4209 = vld [vmem:[%s619] sm:$0xf]
        %v4210 = vld [vmem:[%s619 + $0x4] sm:$0xf]
        %v4212 = vunpack.c.l.b16 %v4208
        %v4213 = vpack.c.b16 %v4146, %v4212
        %v4214 = vrot.slane %v4213, 1
        %v4215 = vrot.slane %v4151, 1
        %v4216 = vsel %vm449, %v4214, %v4215
        %v4217 = vrot.slane %v4152, 1
        %v4218 = vsel %vm449, %v4215, %v4217
        %v4221 = vunpack.c.l.b16 %v4209
        %v4222 = vunpack.c.l.b16 %v4210
        %v4223 = vpack.c.b16 %v4222, %v4221
        %v4226 = vsel %vm387, %v4216, 0
        %v4229 = vsel %vm387, %v4218, 0
        %4231 = vmatpush.bf16.msra.mxu0 0
        %4232 = vmatpush.bf16.msra.mxu0 0
        %4233 = vmatpush.bf16.msra.mxu0 0
        %4234 = vmatpush.bf16.msra.mxu0 0
        %4235 = vmatpush.bf16.msra.mxu0 0
        %4236 = vmatpush.bf16.msra.mxu0 0
        %4237 = vmatpush.bf16.msra.mxu0 0
        %4238 = vmatpush.bf16.msra.mxu0 %v4223
        %4239 = vmatmul.bf16.gmra.mxu0 %v4226
        %v4240 = vpop.f32.mrf.mxu0
        %v4241 = vadd.f32 0.0, %v4240
        %v4242 = vpop.f32.mrf.mxu0
        %v4243 = vadd.f32 0.0, %v4242
        %4244 = vmatmul.bf16.gmra.mxu0 %v4229
        %v4245 = vpop.f32.mrf.mxu0
        %v4246 = vadd.f32 0.0, %v4245
        %v4247 = vpop.f32.mrf.mxu0
        %v4248 = vadd.f32 0.0, %v4247
        %4249 = vdwg.mxu0
        %v4250 = vadd.f32 %v4204, %v4241
        %v4251 = vadd.f32 %v4205, %v4243
        %v4252 = vadd.f32 %v4206, %v4246
        %v4253 = vadd.f32 %v4207, %v4248
        %s4254 = scalar_lea.vmem %s332, 140
        %v4255 = vld [vmem:[%s4254] sm:$0xf]
        %v4256 = vld [vmem:[%s4254 + $0x4] sm:$0xf]
        %v4257 = vld [vmem:[%s4254 + $0x8] sm:$0xf]
        %v4258 = vld [vmem:[%s4254 + $0xc] sm:$0xf]
        %v4259 = vld [vmem:[%s669] sm:$0xf]
        %v4260 = vld [vmem:[%s669 + $0x4] sm:$0xf]
        %v4265 = vunpack.c.l.b16 %v4255
        %v4266 = vunpack.c.l.b16 %v4256
        %v4267 = vunpack.c.l.b16 %v4257
        %v4268 = vunpack.c.l.b16 %v4258
        %v4269 = vpack.c.b16 %v4266, %v4265
        %v4270 = vpack.c.b16 %v4268, %v4267
        %v4273 = vunpack.c.l.b16 %v4259
        %v4274 = vunpack.c.l.b16 %v4260
        %v4275 = vpack.c.b16 %v4274, %v4273
        %v4278 = vsel %vm387, %v4269, 0
        %v4281 = vsel %vm387, %v4270, 0
        %4283 = vmatpush.bf16.msra.mxu0 0
        %4284 = vmatpush.bf16.msra.mxu0 0
        %4285 = vmatpush.bf16.msra.mxu0 0
        %4286 = vmatpush.bf16.msra.mxu0 0
        %4287 = vmatpush.bf16.msra.mxu0 0
        %4288 = vmatpush.bf16.msra.mxu0 0
        %4289 = vmatpush.bf16.msra.mxu0 0
        %4290 = vmatpush.bf16.msra.mxu0 %v4275
        %4291 = vmatmul.bf16.gmra.mxu0 %v4278
        %v4292 = vpop.f32.mrf.mxu0
        %v4293 = vadd.f32 0.0, %v4292
        %v4294 = vpop.f32.mrf.mxu0
        %v4295 = vadd.f32 0.0, %v4294
        %4296 = vmatmul.bf16.gmra.mxu0 %v4281
        %v4297 = vpop.f32.mrf.mxu0
        %v4298 = vadd.f32 0.0, %v4297
        %v4299 = vpop.f32.mrf.mxu0
        %v4300 = vadd.f32 0.0, %v4299
        %4301 = vdwg.mxu0
        %v4302 = vadd.f32 %v4250, %v4293
        %v4303 = vadd.f32 %v4251, %v4295
        %v4304 = vadd.f32 %v4252, %v4298
        %v4305 = vadd.f32 %v4253, %v4300
        %v4306 = vld [vmem:[%s4254] sm:$0xf]
        %v4307 = vld [vmem:[%s4254 + $0x4] sm:$0xf]
        %v4308 = vld [vmem:[%s4254 + $0x8] sm:$0xf]
        %v4309 = vld [vmem:[%s4254 + $0xc] sm:$0xf]
        %v4310 = vld [vmem:[%s4254 + $0x10] sm:$0x1]
        %v4311 = vld [vmem:[%s722] sm:$0xf]
        %v4312 = vld [vmem:[%s722 + $0x4] sm:$0xf]
        %v4318 = vunpack.c.l.b16 %v4306
        %v4319 = vunpack.c.l.b16 %v4307
        %v4320 = vunpack.c.l.b16 %v4308
        %v4321 = vunpack.c.l.b16 %v4309
        %v4322 = vunpack.c.l.b16 %v4310
        %v4323 = vpack.c.b16 %v4319, %v4318
        %v4324 = vpack.c.b16 %v4321, %v4320
        %v4325 = vpack.c.b16 %v4322, %v4322
        %v4327 = vshrl.u32 %v4323, 16
        %v4329 = vshll.u32 %v4323, 16
        %v4331 = vrot.slane %v4329, 1
        %v4332 = vor.u32 %v4327, %v4331
        %v4334 = vshll.u32 %v4324, 16
        %v4336 = vrot.slane %v4334, 1
        %v4337 = vsel %vm360, %v4332, %v4336
        %v4338 = vshrl.u32 %v4324, 16
        %v4340 = vor.u32 %v4338, %v4336
        %v4342 = vshll.u32 %v4325, 16
        %v4344 = vrot.slane %v4342, 1
        %v4345 = vsel %vm360, %v4340, %v4344
        %v4348 = vunpack.c.l.b16 %v4311
        %v4349 = vunpack.c.l.b16 %v4312
        %v4350 = vpack.c.b16 %v4349, %v4348
        %v4353 = vsel %vm387, %v4337, 0
        %v4356 = vsel %vm387, %v4345, 0
        %4358 = vmatpush.bf16.msra.mxu0 0
        %4359 = vmatpush.bf16.msra.mxu0 0
        %4360 = vmatpush.bf16.msra.mxu0 0
        %4361 = vmatpush.bf16.msra.mxu0 0
        %4362 = vmatpush.bf16.msra.mxu0 0
        %4363 = vmatpush.bf16.msra.mxu0 0
        %4364 = vmatpush.bf16.msra.mxu0 0
        %4365 = vmatpush.bf16.msra.mxu0 %v4350
        %4366 = vmatmul.bf16.gmra.mxu0 %v4353
        %v4367 = vpop.f32.mrf.mxu0
        %v4368 = vadd.f32 0.0, %v4367
        %v4369 = vpop.f32.mrf.mxu0
        %v4370 = vadd.f32 0.0, %v4369
        %4371 = vmatmul.bf16.gmra.mxu0 %v4356
        %v4372 = vpop.f32.mrf.mxu0
        %v4373 = vadd.f32 0.0, %v4372
        %v4374 = vpop.f32.mrf.mxu0
        %v4375 = vadd.f32 0.0, %v4374
        %4376 = vdwg.mxu0
        %v4377 = vadd.f32 %v4302, %v4368
        %v4378 = vadd.f32 %v4303, %v4370
        %v4379 = vadd.f32 %v4304, %v4373
        %v4380 = vadd.f32 %v4305, %v4375
        %v4381 = vld [vmem:[%s4254] sm:$0xe]
        %v4382 = vld [vmem:[%s794] sm:$0xf]
        %v4383 = vld [vmem:[%s794 + $0x4] sm:$0xf]
        %v4385 = vunpack.c.l.b16 %v4381
        %v4386 = vpack.c.b16 %v4319, %v4385
        %v4387 = vrot.slane %v4386, 1
        %v4388 = vrot.slane %v4324, 1
        %v4389 = vsel %vm449, %v4387, %v4388
        %v4390 = vrot.slane %v4325, 1
        %v4391 = vsel %vm449, %v4388, %v4390
        %v4394 = vunpack.c.l.b16 %v4382
        %v4395 = vunpack.c.l.b16 %v4383
        %v4396 = vpack.c.b16 %v4395, %v4394
        %v4399 = vsel %vm387, %v4389, 0
        %v4402 = vsel %vm387, %v4391, 0
        %4404 = vmatpush.bf16.msra.mxu0 0
        %4405 = vmatpush.bf16.msra.mxu0 0
        %4406 = vmatpush.bf16.msra.mxu0 0
        %4407 = vmatpush.bf16.msra.mxu0 0
        %4408 = vmatpush.bf16.msra.mxu0 0
        %4409 = vmatpush.bf16.msra.mxu0 0
        %4410 = vmatpush.bf16.msra.mxu0 0
        %4411 = vmatpush.bf16.msra.mxu0 %v4396
        %4412 = vmatmul.bf16.gmra.mxu0 %v4399
        %v4413 = vpop.f32.mrf.mxu0
        %v4414 = vadd.f32 0.0, %v4413
        %v4415 = vpop.f32.mrf.mxu0
        %v4416 = vadd.f32 0.0, %v4415
        %4417 = vmatmul.bf16.gmra.mxu0 %v4402
        %v4418 = vpop.f32.mrf.mxu0
        %v4419 = vadd.f32 0.0, %v4418
        %v4420 = vpop.f32.mrf.mxu0
        %v4421 = vadd.f32 0.0, %v4420
        %4422 = vdwg.mxu0
        %v4423 = vadd.f32 %v4377, %v4414
        %v4424 = vadd.f32 %v4378, %v4416
        %v4425 = vadd.f32 %v4379, %v4419
        %v4426 = vadd.f32 %v4380, %v4421
        %v4427 = vadd.f32 %v4423, %v841
        %v4428 = vadd.f32 %v4424, %v841
        %v4429 = vadd.f32 %v4425, %v841
        %v4430 = vadd.f32 %v4426, %v841
        %v4431 = vmax.f32 %v4427, 0.0
        %v4432 = vmax.f32 %v4428, 0.0
        %v4433 = vmax.f32 %v4429, 0.0
        %v4434 = vmax.f32 %v4430, 0.0
        %v4435 = vpack.c.bf16 %v4431, %v4431
        %v4436 = vpack.c.bf16 %v4432, %v4432
        %v4437 = vpack.c.bf16 %v4433, %v4433
        %v4438 = vpack.c.bf16 %v4434, %v4434
        %s4439 = scalar_lea.vmem %s300, 112 [#allocation2]
        %4440 = vst.msk [vmem:[%s4439] sm:$0xf] %vm855, %v4435
        %4441 = vst.msk [vmem:[%s4439 + $0x4] sm:$0xf] %vm855, %v4436
        %4442 = vst.msk [vmem:[%s4439 + $0x8] sm:$0xf] %vm855, %v4437
        %4443 = vst.msk [vmem:[%s4439 + $0xc] sm:$0xf] %vm855, %v4438
        %s4444 = sand.u32 %s167, 1
        %s4445 = scalar_lea.sflag [#allocation3], %s4444
        %s4446 = sand.u32 %s167, 1
        %s4447 = smul.addr %s4446, 128
        %s4448 = scalar_lea.vmem [#allocation2], %s4447
        // Predicated region
        $region41: #{tpu_custom_call.1} parent=39 // pred_check
          %p4449 = pneg %p177
        $region42: #{tpu_custom_call.1} parent=39 // pred_check_branch
          %4451 = sbr.rel (%p4449) target = $region44
        $region43: #{tpu_custom_call.1} parent=39 // pred_region
          %s4452 = smul.u32 8, %s24
          %4454 = vsyncadd %s4445, 0
          %s4455 = smul.addr %s4452, 4
          %s4456 = smul.addr %s23, 128
          %s4457 = sadd.s32 %s4455, %s4456
          %s4458 = smul.addr %s4457, 4
          %s4459 = scalar_lea.hbm %s5, %s4458
          %s4460 = sshll.u32 %s4448, 4
          %s4461 = int_to_ptr.vmem [resolvable:$true] %s4460
          %s4462 = sshll.u32 %s4459, 4
          %s4463 = int_to_ptr.hbm [resolvable:$true] %s4462
          %4468 = dma.vmem_to_hbm [thread:$0]  %s4461, 2048, %s4463, %s4445, 64, 64, 4
        $region44: #{tpu_custom_call.1} parent=39 // pred_fallthru
          _
      $region40: #{tpu_custom_call.1} parent=5 // pred_fallthru
        _
      %p4469 = scmp.le.s32.totalorder 2, %s14
      // Predicated region
      $region45: #{tpu_custom_call.1} parent=5 // pred_check
        %p4470 = pneg %p4469
      $region46: #{tpu_custom_call.1} parent=5 // pred_check_branch
        %4472 = sbr.rel (%p4470) target = $region48
      $region47: #{tpu_custom_call.1} parent=5 // pred_region
        %s4473 = ssub.s32 %s14, 2
        // Predicated region
        $region49: #{tpu_custom_call.1} parent=47 // pred_check
          %p4474 = pneg %p183
        $region50: #{tpu_custom_call.1} parent=47 // pred_check_branch
          %4476 = sbr.rel (%p4474) target = $region52
        $region51: #{tpu_custom_call.1} parent=47 // pred_region
          %s4477 = sand.u32 %s168, 1
          %s4478 = scalar_lea.sflag [#allocation3], %s4477
          %s4479 = sand.u32 %s168, 1
          %s4480 = smul.addr %s4479, 128
          %s4481 = scalar_lea.vmem [#allocation2], %s4480
          %4483 = dma.done %s4478, 2048
        $region52: #{tpu_custom_call.1} parent=47 // pred_fallthru
          _
      $region48: #{tpu_custom_call.1} parent=5 // pred_fallthru
        _
    $region6: #{tpu_custom_call.1} parent=1 // loop_footer
      %s18 = sadd.s32 1, %s14
    $region7: #{tpu_custom_call.1} parent=1 // loop_footer_branch
      %13 = sbr.rel target = $region3
    $region8: #{tpu_custom_call.1} parent=1 // loop_exit
      _
    %4484 = vsyncpa [#allocation3], 1
    %s4485 = scalar_lea.sflag [#allocation3], 1
    %4486 = vsyncpa %s4485, 1

</llo_original>
